<compile_context>
chip_gen: v6e
topology: v6e:2x2x1
jax: 0.10.0
libtpu: 0.0.40
codegen_flags: <defaults>
</compile_context>

<pallas_src>
import jax
import jax.numpy as jnp
import numpy as np
from jax.experimental import pallas as pl
from jax.experimental.pallas import tpu as pltpu

EPS = 1e-5
KH = KW = 3


def _tree_sum(xs):
    xs = list(xs)
    while len(xs) > 1:
        nxt = [xs[i] + xs[i + 1] for i in range(0, len(xs) - 1, 2)]
        if len(xs) % 2:
            nxt.append(xs[-1])
        xs = nxt
    return xs[0]


def _conv3x3_bias_relu(x_chans, w_ref, b_ref, cin, cout, oh, ow):
    """Valid 3x3 stride-1 conv + bias + ReLU as per-tap VPU scaled adds.

    x_chans: list of `cin` arrays, each (N, H, W) f32 (H, W on sublane/lane).
    w_ref:   SMEM ref, flat (cout*cin*KH*KW,) f32 in OIHW order.
    b_ref:   SMEM ref, (cout,) f32.
    Returns list of `cout` arrays, each (N, OH, OW) f32 (already ReLU'd).
    """
    # Hoist the lane-offset (j) slices: 3 lane-shifted views per input channel,
    # shared by every kernel row and every output channel.
    lane_views = [[xc[:, :, j:j + ow] for j in range(KW)] for xc in x_chans]

    outs = []
    for co in range(cout):
        partials = []  # one independent accumulation chain per input channel
        for ci in range(cin):
            part = None
            for i in range(KH):
                for j in range(KW):
                    w = w_ref[((co * cin + ci) * KH + i) * KW + j]
                    win = lane_views[ci][j][:, i:i + oh, :]  # sublane slice: cheap
                    term = win * w
                    part = term if part is None else part + term
            partials.append(part)
        acc = _tree_sum(partials) + b_ref[co]
        outs.append(jnp.maximum(acc, 0.0))
    return outs


def fused_kernel(x_ref, w1_ref, b1_ref, w2_ref, b2_ref, gamma_ref, beta_ref,
                 o_ref):
    n, cin, h, w = x_ref.shape
    cmid = b1_ref.shape[0]
    cout = b2_ref.shape[0]
    oh1, ow1 = h - KH + 1, w - KW + 1
    oh2, ow2 = oh1 - KH + 1, ow1 - KW + 1

    # Per-channel loads (leading-dim slices only; no lane/sublane relayout).
    x_chans = [x_ref[:, ci] for ci in range(cin)]

    # conv1 + ReLU, conv2 + ReLU (intermediates stay in vregs / VMEM)
    y1 = _conv3x3_bias_relu(x_chans, w1_ref, b1_ref, cin, cmid, oh1, ow1)
    y2 = _conv3x3_bias_relu(y1, w2_ref, b2_ref, cmid, cout, oh2, ow2)

    # BatchNorm2d (training mode): per-channel batch stats over N*OH*OW,
    # biased variance, eps inside rsqrt, then affine.  One-pass stats:
    # sum and sum-of-squares are independent reductions; var = E[x^2] - mean^2.
    inv_cnt = 1.0 / float(n * oh2 * ow2)
    for co in range(cout):
        yc = y2[co]                                    # (N, OH2, OW2)
        s = jnp.sum(yc)
        sq = jnp.sum(yc * yc)
        mean = s * inv_cnt
        var = sq * inv_cnt - mean * mean
        scale = gamma_ref[co] * jax.lax.rsqrt(var + EPS)
        shift = beta_ref[co] - mean * scale
        # Direct per-channel store into the 4D output: no stack/reshape epilogue.
        o_ref[:, co] = (yc * scale + shift).astype(o_ref.dtype)


def _full_vmem_spec(shape):
    ndim = len(shape)
    return pl.BlockSpec(shape, lambda: (0,) * ndim)


_SMEM_SPEC = pl.BlockSpec(memory_space=pltpu.MemorySpace.SMEM)


@jax.jit
def model_forward(x_nchw, w1_oihw, b1, w2_oihw, b2, gamma, beta):
    n, cin, h, w = x_nchw.shape
    cout = w2_oihw.shape[0]
    oh1, ow1 = h - KH + 1, w - KW + 1
    oh2, ow2 = oh1 - KH + 1, ow1 - KW + 1
    out_shape = (n, cout, oh2, ow2)

    # grid=() / full residency is the right call at this size (~10 KB total) --
    # the kernel is launch/latency bound, not VMEM or VPU bound.
    # TODO(synk): if reused at realistic image sizes, tile H in row bands
    # (4-row halo for the two stacked 3x3 convs) and on v7x split N across the
    # two TensorCores; that needs a cross-step BN-stat accumulation pass which
    # is not worth it at N=2 / 16x16.
    out = pl.pallas_call(
        fused_kernel,
        out_shape=jax.ShapeDtypeStruct(out_shape, jnp.float32),
        in_specs=[
            _full_vmem_spec(x_nchw.shape),   # activations (NCHW, no transpose)
            _SMEM_SPEC,                      # w1 (flat OIHW)
            _SMEM_SPEC,                      # b1
            _SMEM_SPEC,                      # w2 (flat OIHW)
            _SMEM_SPEC,                      # b2
            _SMEM_SPEC,                      # gamma
            _SMEM_SPEC,                      # beta
        ],
        out_specs=_full_vmem_spec(out_shape),
    )(x_nchw, w1_oihw.reshape(-1), b1, w2_oihw.reshape(-1), b2, gamma, beta)
    return out


def _reference(x, w1, b1, w2, b2, gamma, beta):
    dn = ("NCHW", "OIHW", "NCHW")
    y = jax.lax.conv_general_dilated(x, w1, (1, 1), "VALID",
                                     dimension_numbers=dn)
    y = jnp.maximum(y + b1.reshape(1, -1, 1, 1), 0.0)
    y = jax.lax.conv_general_dilated(y, w2, (1, 1), "VALID",
                                     dimension_numbers=dn)
    y = jnp.maximum(y + b2.reshape(1, -1, 1, 1), 0.0)
    mean = jnp.mean(y, axis=(0, 2, 3), keepdims=True)
    var = jnp.mean((y - mean) ** 2, axis=(0, 2, 3), keepdims=True)
    yhat = (y - mean) * jax.lax.rsqrt(var + EPS)
    return yhat * gamma.reshape(1, -1, 1, 1) + beta.reshape(1, -1, 1, 1)


if __name__ == "__main__":
    key = jax.random.PRNGKey(0)
    k_x, k_w1, k_b1, k_w2, k_b2 = jax.random.split(key, 5)

    # PyTorch NCHW input; spatial >= 5 so both valid 3x3 convs are defined.
    x = jax.random.normal(k_x, (2, 3, 16, 16), dtype=jnp.float32)

    # Shapes from nn.Conv2d(3,3,3) (OIHW) and BatchNorm2d(3) defaults.
    w1 = jax.random.normal(k_w1, (3, 3, 3, 3), dtype=jnp.float32) * 0.2
    b1 = jax.random.normal(k_b1, (3,), dtype=jnp.float32) * 0.1
    w2 = jax.random.normal(k_w2, (3, 3, 3, 3), dtype=jnp.float32) * 0.2
    b2 = jax.random.normal(k_b2, (3,), dtype=jnp.float32) * 0.1
    gamma = jnp.ones((3,), dtype=jnp.float32)    # BatchNorm2d default weight
    beta = jnp.zeros((3,), dtype=jnp.float32)    # BatchNorm2d default bias

    out = model_forward(x, w1, b1, w2, b2, gamma, beta)
    jax.block_until_ready(out)
    assert out.shape == (2, 3, 12, 12), out.shape

    ref = _reference(x, w1, b1, w2, b2, gamma, beta)
    np.testing.assert_allclose(np.asarray(out), np.asarray(ref),
                               rtol=2e-4, atol=2e-4)
    print("KERNEL_OK")
</pallas_src>

<mosaic_0001>
module attributes {stable_mosaic.version = 11 : i64} {
  func.func @fused_kernel(%arg0: memref<2x3x16x16xf32, #tpu.memory_space<vmem>>, %arg1: memref<81xf32, #tpu.memory_space<smem>>, %arg2: memref<3xf32, #tpu.memory_space<smem>>, %arg3: memref<81xf32, #tpu.memory_space<smem>>, %arg4: memref<3xf32, #tpu.memory_space<smem>>, %arg5: memref<3xf32, #tpu.memory_space<smem>>, %arg6: memref<3xf32, #tpu.memory_space<smem>>, %arg7: memref<2x3x12x12xf32, #tpu.memory_space<vmem>>) attributes {dimension_semantics = [], scalar_prefetch = 0 : i64, scratch_operands = 0 : i64, tpu.core_type = #tpu.core_type<tc>} {
    %c0 = arith.constant 0 : index
    %c0_0 = arith.constant 0 : index
    %c0_1 = arith.constant 0 : index
    %c0_2 = arith.constant 0 : index
    %0 = vector.load %arg0[%c0, %c0_0, %c0_1, %c0_2] : memref<2x3x16x16xf32, #tpu.memory_space<vmem>>, vector<2x1x16x16xf32>
    %1 = vector.shape_cast %0 : vector<2x1x16x16xf32> to vector<2x16x16xf32>
    %c0_3 = arith.constant 0 : index
    %c1 = arith.constant 1 : index
    %c0_4 = arith.constant 0 : index
    %c0_5 = arith.constant 0 : index
    %2 = vector.load %arg0[%c0_3, %c1, %c0_4, %c0_5] : memref<2x3x16x16xf32, #tpu.memory_space<vmem>>, vector<2x1x16x16xf32>
    %3 = vector.shape_cast %2 : vector<2x1x16x16xf32> to vector<2x16x16xf32>
    %c0_6 = arith.constant 0 : index
    %c2 = arith.constant 2 : index
    %c0_7 = arith.constant 0 : index
    %c0_8 = arith.constant 0 : index
    %4 = vector.load %arg0[%c0_6, %c2, %c0_7, %c0_8] : memref<2x3x16x16xf32, #tpu.memory_space<vmem>>, vector<2x1x16x16xf32>
    %5 = vector.shape_cast %4 : vector<2x1x16x16xf32> to vector<2x16x16xf32>
    %6 = vector.extract_strided_slice %1 {offsets = [0, 0, 0], sizes = [2, 16, 14], strides = [1, 1, 1]} : vector<2x16x16xf32> to vector<2x16x14xf32>
    %7 = vector.extract_strided_slice %1 {offsets = [0, 0, 1], sizes = [2, 16, 14], strides = [1, 1, 1]} : vector<2x16x16xf32> to vector<2x16x14xf32>
    %8 = vector.extract_strided_slice %1 {offsets = [0, 0, 2], sizes = [2, 16, 14], strides = [1, 1, 1]} : vector<2x16x16xf32> to vector<2x16x14xf32>
    %9 = vector.extract_strided_slice %3 {offsets = [0, 0, 0], sizes = [2, 16, 14], strides = [1, 1, 1]} : vector<2x16x16xf32> to vector<2x16x14xf32>
    %10 = vector.extract_strided_slice %3 {offsets = [0, 0, 1], sizes = [2, 16, 14], strides = [1, 1, 1]} : vector<2x16x16xf32> to vector<2x16x14xf32>
    %11 = vector.extract_strided_slice %3 {offsets = [0, 0, 2], sizes = [2, 16, 14], strides = [1, 1, 1]} : vector<2x16x16xf32> to vector<2x16x14xf32>
    %12 = vector.extract_strided_slice %5 {offsets = [0, 0, 0], sizes = [2, 16, 14], strides = [1, 1, 1]} : vector<2x16x16xf32> to vector<2x16x14xf32>
    %13 = vector.extract_strided_slice %5 {offsets = [0, 0, 1], sizes = [2, 16, 14], strides = [1, 1, 1]} : vector<2x16x16xf32> to vector<2x16x14xf32>
    %14 = vector.extract_strided_slice %5 {offsets = [0, 0, 2], sizes = [2, 16, 14], strides = [1, 1, 1]} : vector<2x16x16xf32> to vector<2x16x14xf32>
    %c0_9 = arith.constant 0 : index
    %15 = memref.load %arg1[%c0_9] : memref<81xf32, #tpu.memory_space<smem>>
    %16 = vector.extract_strided_slice %6 {offsets = [0, 0, 0], sizes = [2, 14, 14], strides = [1, 1, 1]} : vector<2x16x14xf32> to vector<2x14x14xf32>
    %17 = vector.broadcast %15 : f32 to vector<2x14x14xf32>
    %18 = arith.mulf %16, %17 : vector<2x14x14xf32>
    %c1_10 = arith.constant 1 : index
    %19 = memref.load %arg1[%c1_10] : memref<81xf32, #tpu.memory_space<smem>>
    %20 = vector.extract_strided_slice %7 {offsets = [0, 0, 0], sizes = [2, 14, 14], strides = [1, 1, 1]} : vector<2x16x14xf32> to vector<2x14x14xf32>
    %21 = vector.broadcast %19 : f32 to vector<2x14x14xf32>
    %22 = arith.mulf %20, %21 : vector<2x14x14xf32>
    %23 = arith.addf %18, %22 : vector<2x14x14xf32>
    %c2_11 = arith.constant 2 : index
    %24 = memref.load %arg1[%c2_11] : memref<81xf32, #tpu.memory_space<smem>>
    %25 = vector.extract_strided_slice %8 {offsets = [0, 0, 0], sizes = [2, 14, 14], strides = [1, 1, 1]} : vector<2x16x14xf32> to vector<2x14x14xf32>
    %26 = vector.broadcast %24 : f32 to vector<2x14x14xf32>
    %27 = arith.mulf %25, %26 : vector<2x14x14xf32>
    %28 = arith.addf %23, %27 : vector<2x14x14xf32>
    %c3 = arith.constant 3 : index
    %29 = memref.load %arg1[%c3] : memref<81xf32, #tpu.memory_space<smem>>
    %30 = vector.extract_strided_slice %6 {offsets = [0, 1, 0], sizes = [2, 14, 14], strides = [1, 1, 1]} : vector<2x16x14xf32> to vector<2x14x14xf32>
    %31 = vector.broadcast %29 : f32 to vector<2x14x14xf32>
    %32 = arith.mulf %30, %31 : vector<2x14x14xf32>
    %33 = arith.addf %28, %32 : vector<2x14x14xf32>
    %c4 = arith.constant 4 : index
    %34 = memref.load %arg1[%c4] : memref<81xf32, #tpu.memory_space<smem>>
    %35 = vector.extract_strided_slice %7 {offsets = [0, 1, 0], sizes = [2, 14, 14], strides = [1, 1, 1]} : vector<2x16x14xf32> to vector<2x14x14xf32>
    %36 = vector.broadcast %34 : f32 to vector<2x14x14xf32>
    %37 = arith.mulf %35, %36 : vector<2x14x14xf32>
    %38 = arith.addf %33, %37 : vector<2x14x14xf32>
    %c5 = arith.constant 5 : index
    %39 = memref.load %arg1[%c5] : memref<81xf32, #tpu.memory_space<smem>>
    %40 = vector.extract_strided_slice %8 {offsets = [0, 1, 0], sizes = [2, 14, 14], strides = [1, 1, 1]} : vector<2x16x14xf32> to vector<2x14x14xf32>
    %41 = vector.broadcast %39 : f32 to vector<2x14x14xf32>
    %42 = arith.mulf %40, %41 : vector<2x14x14xf32>
    %43 = arith.addf %38, %42 : vector<2x14x14xf32>
    %c6 = arith.constant 6 : index
    %44 = memref.load %arg1[%c6] : memref<81xf32, #tpu.memory_space<smem>>
    %45 = vector.extract_strided_slice %6 {offsets = [0, 2, 0], sizes = [2, 14, 14], strides = [1, 1, 1]} : vector<2x16x14xf32> to vector<2x14x14xf32>
    %46 = vector.broadcast %44 : f32 to vector<2x14x14xf32>
    %47 = arith.mulf %45, %46 : vector<2x14x14xf32>
    %48 = arith.addf %43, %47 : vector<2x14x14xf32>
    %c7 = arith.constant 7 : index
    %49 = memref.load %arg1[%c7] : memref<81xf32, #tpu.memory_space<smem>>
    %50 = vector.extract_strided_slice %7 {offsets = [0, 2, 0], sizes = [2, 14, 14], strides = [1, 1, 1]} : vector<2x16x14xf32> to vector<2x14x14xf32>
    %51 = vector.broadcast %49 : f32 to vector<2x14x14xf32>
    %52 = arith.mulf %50, %51 : vector<2x14x14xf32>
    %53 = arith.addf %48, %52 : vector<2x14x14xf32>
    %c8 = arith.constant 8 : index
    %54 = memref.load %arg1[%c8] : memref<81xf32, #tpu.memory_space<smem>>
    %55 = vector.extract_strided_slice %8 {offsets = [0, 2, 0], sizes = [2, 14, 14], strides = [1, 1, 1]} : vector<2x16x14xf32> to vector<2x14x14xf32>
    %56 = vector.broadcast %54 : f32 to vector<2x14x14xf32>
    %57 = arith.mulf %55, %56 : vector<2x14x14xf32>
    %58 = arith.addf %53, %57 : vector<2x14x14xf32>
    %c9 = arith.constant 9 : index
    %59 = memref.load %arg1[%c9] : memref<81xf32, #tpu.memory_space<smem>>
    %60 = vector.extract_strided_slice %9 {offsets = [0, 0, 0], sizes = [2, 14, 14], strides = [1, 1, 1]} : vector<2x16x14xf32> to vector<2x14x14xf32>
    %61 = vector.broadcast %59 : f32 to vector<2x14x14xf32>
    %62 = arith.mulf %60, %61 : vector<2x14x14xf32>
    %c10 = arith.constant 10 : index
    %63 = memref.load %arg1[%c10] : memref<81xf32, #tpu.memory_space<smem>>
    %64 = vector.extract_strided_slice %10 {offsets = [0, 0, 0], sizes = [2, 14, 14], strides = [1, 1, 1]} : vector<2x16x14xf32> to vector<2x14x14xf32>
    %65 = vector.broadcast %63 : f32 to vector<2x14x14xf32>
    %66 = arith.mulf %64, %65 : vector<2x14x14xf32>
    %67 = arith.addf %62, %66 : vector<2x14x14xf32>
    %c11 = arith.constant 11 : index
    %68 = memref.load %arg1[%c11] : memref<81xf32, #tpu.memory_space<smem>>
    %69 = vector.extract_strided_slice %11 {offsets = [0, 0, 0], sizes = [2, 14, 14], strides = [1, 1, 1]} : vector<2x16x14xf32> to vector<2x14x14xf32>
    %70 = vector.broadcast %68 : f32 to vector<2x14x14xf32>
    %71 = arith.mulf %69, %70 : vector<2x14x14xf32>
    %72 = arith.addf %67, %71 : vector<2x14x14xf32>
    %c12 = arith.constant 12 : index
    %73 = memref.load %arg1[%c12] : memref<81xf32, #tpu.memory_space<smem>>
    %74 = vector.extract_strided_slice %9 {offsets = [0, 1, 0], sizes = [2, 14, 14], strides = [1, 1, 1]} : vector<2x16x14xf32> to vector<2x14x14xf32>
    %75 = vector.broadcast %73 : f32 to vector<2x14x14xf32>
    %76 = arith.mulf %74, %75 : vector<2x14x14xf32>
    %77 = arith.addf %72, %76 : vector<2x14x14xf32>
    %c13 = arith.constant 13 : index
    %78 = memref.load %arg1[%c13] : memref<81xf32, #tpu.memory_space<smem>>
    %79 = vector.extract_strided_slice %10 {offsets = [0, 1, 0], sizes = [2, 14, 14], strides = [1, 1, 1]} : vector<2x16x14xf32> to vector<2x14x14xf32>
    %80 = vector.broadcast %78 : f32 to vector<2x14x14xf32>
    %81 = arith.mulf %79, %80 : vector<2x14x14xf32>
    %82 = arith.addf %77, %81 : vector<2x14x14xf32>
    %c14 = arith.constant 14 : index
    %83 = memref.load %arg1[%c14] : memref<81xf32, #tpu.memory_space<smem>>
    %84 = vector.extract_strided_slice %11 {offsets = [0, 1, 0], sizes = [2, 14, 14], strides = [1, 1, 1]} : vector<2x16x14xf32> to vector<2x14x14xf32>
    %85 = vector.broadcast %83 : f32 to vector<2x14x14xf32>
    %86 = arith.mulf %84, %85 : vector<2x14x14xf32>
    %87 = arith.addf %82, %86 : vector<2x14x14xf32>
    %c15 = arith.constant 15 : index
    %88 = memref.load %arg1[%c15] : memref<81xf32, #tpu.memory_space<smem>>
    %89 = vector.extract_strided_slice %9 {offsets = [0, 2, 0], sizes = [2, 14, 14], strides = [1, 1, 1]} : vector<2x16x14xf32> to vector<2x14x14xf32>
    %90 = vector.broadcast %88 : f32 to vector<2x14x14xf32>
    %91 = arith.mulf %89, %90 : vector<2x14x14xf32>
    %92 = arith.addf %87, %91 : vector<2x14x14xf32>
    %c16 = arith.constant 16 : index
    %93 = memref.load %arg1[%c16] : memref<81xf32, #tpu.memory_space<smem>>
    %94 = vector.extract_strided_slice %10 {offsets = [0, 2, 0], sizes = [2, 14, 14], strides = [1, 1, 1]} : vector<2x16x14xf32> to vector<2x14x14xf32>
    %95 = vector.broadcast %93 : f32 to vector<2x14x14xf32>
    %96 = arith.mulf %94, %95 : vector<2x14x14xf32>
    %97 = arith.addf %92, %96 : vector<2x14x14xf32>
    %c17 = arith.constant 17 : index
    %98 = memref.load %arg1[%c17] : memref<81xf32, #tpu.memory_space<smem>>
    %99 = vector.extract_strided_slice %11 {offsets = [0, 2, 0], sizes = [2, 14, 14], strides = [1, 1, 1]} : vector<2x16x14xf32> to vector<2x14x14xf32>
    %100 = vector.broadcast %98 : f32 to vector<2x14x14xf32>
    %101 = arith.mulf %99, %100 : vector<2x14x14xf32>
    %102 = arith.addf %97, %101 : vector<2x14x14xf32>
    %c18 = arith.constant 18 : index
    %103 = memref.load %arg1[%c18] : memref<81xf32, #tpu.memory_space<smem>>
    %104 = vector.extract_strided_slice %12 {offsets = [0, 0, 0], sizes = [2, 14, 14], strides = [1, 1, 1]} : vector<2x16x14xf32> to vector<2x14x14xf32>
    %105 = vector.broadcast %103 : f32 to vector<2x14x14xf32>
    %106 = arith.mulf %104, %105 : vector<2x14x14xf32>
    %c19 = arith.constant 19 : index
    %107 = memref.load %arg1[%c19] : memref<81xf32, #tpu.memory_space<smem>>
    %108 = vector.extract_strided_slice %13 {offsets = [0, 0, 0], sizes = [2, 14, 14], strides = [1, 1, 1]} : vector<2x16x14xf32> to vector<2x14x14xf32>
    %109 = vector.broadcast %107 : f32 to vector<2x14x14xf32>
    %110 = arith.mulf %108, %109 : vector<2x14x14xf32>
    %111 = arith.addf %106, %110 : vector<2x14x14xf32>
    %c20 = arith.constant 20 : index
    %112 = memref.load %arg1[%c20] : memref<81xf32, #tpu.memory_space<smem>>
    %113 = vector.extract_strided_slice %14 {offsets = [0, 0, 0], sizes = [2, 14, 14], strides = [1, 1, 1]} : vector<2x16x14xf32> to vector<2x14x14xf32>
    %114 = vector.broadcast %112 : f32 to vector<2x14x14xf32>
    %115 = arith.mulf %113, %114 : vector<2x14x14xf32>
    %116 = arith.addf %111, %115 : vector<2x14x14xf32>
    %c21 = arith.constant 21 : index
    %117 = memref.load %arg1[%c21] : memref<81xf32, #tpu.memory_space<smem>>
    %118 = vector.extract_strided_slice %12 {offsets = [0, 1, 0], sizes = [2, 14, 14], strides = [1, 1, 1]} : vector<2x16x14xf32> to vector<2x14x14xf32>
    %119 = vector.broadcast %117 : f32 to vector<2x14x14xf32>
    %120 = arith.mulf %118, %119 : vector<2x14x14xf32>
    %121 = arith.addf %116, %120 : vector<2x14x14xf32>
    %c22 = arith.constant 22 : index
    %122 = memref.load %arg1[%c22] : memref<81xf32, #tpu.memory_space<smem>>
    %123 = vector.extract_strided_slice %13 {offsets = [0, 1, 0], sizes = [2, 14, 14], strides = [1, 1, 1]} : vector<2x16x14xf32> to vector<2x14x14xf32>
    %124 = vector.broadcast %122 : f32 to vector<2x14x14xf32>
    %125 = arith.mulf %123, %124 : vector<2x14x14xf32>
    %126 = arith.addf %121, %125 : vector<2x14x14xf32>
    %c23 = arith.constant 23 : index
    %127 = memref.load %arg1[%c23] : memref<81xf32, #tpu.memory_space<smem>>
    %128 = vector.extract_strided_slice %14 {offsets = [0, 1, 0], sizes = [2, 14, 14], strides = [1, 1, 1]} : vector<2x16x14xf32> to vector<2x14x14xf32>
    %129 = vector.broadcast %127 : f32 to vector<2x14x14xf32>
    %130 = arith.mulf %128, %129 : vector<2x14x14xf32>
    %131 = arith.addf %126, %130 : vector<2x14x14xf32>
    %c24 = arith.constant 24 : index
    %132 = memref.load %arg1[%c24] : memref<81xf32, #tpu.memory_space<smem>>
    %133 = vector.extract_strided_slice %12 {offsets = [0, 2, 0], sizes = [2, 14, 14], strides = [1, 1, 1]} : vector<2x16x14xf32> to vector<2x14x14xf32>
    %134 = vector.broadcast %132 : f32 to vector<2x14x14xf32>
    %135 = arith.mulf %133, %134 : vector<2x14x14xf32>
    %136 = arith.addf %131, %135 : vector<2x14x14xf32>
    %c25 = arith.constant 25 : index
    %137 = memref.load %arg1[%c25] : memref<81xf32, #tpu.memory_space<smem>>
    %138 = vector.extract_strided_slice %13 {offsets = [0, 2, 0], sizes = [2, 14, 14], strides = [1, 1, 1]} : vector<2x16x14xf32> to vector<2x14x14xf32>
    %139 = vector.broadcast %137 : f32 to vector<2x14x14xf32>
    %140 = arith.mulf %138, %139 : vector<2x14x14xf32>
    %141 = arith.addf %136, %140 : vector<2x14x14xf32>
    %c26 = arith.constant 26 : index
    %142 = memref.load %arg1[%c26] : memref<81xf32, #tpu.memory_space<smem>>
    %143 = vector.extract_strided_slice %14 {offsets = [0, 2, 0], sizes = [2, 14, 14], strides = [1, 1, 1]} : vector<2x16x14xf32> to vector<2x14x14xf32>
    %144 = vector.broadcast %142 : f32 to vector<2x14x14xf32>
    %145 = arith.mulf %143, %144 : vector<2x14x14xf32>
    %146 = arith.addf %141, %145 : vector<2x14x14xf32>
    %147 = arith.addf %58, %102 : vector<2x14x14xf32>
    %148 = arith.addf %147, %146 : vector<2x14x14xf32>
    %c0_12 = arith.constant 0 : index
    %149 = memref.load %arg2[%c0_12] : memref<3xf32, #tpu.memory_space<smem>>
    %150 = vector.broadcast %149 : f32 to vector<2x14x14xf32>
    %151 = arith.addf %148, %150 : vector<2x14x14xf32>
    %cst = arith.constant 0.000000e+00 : f32
    %152 = vector.broadcast %cst : f32 to vector<2x14x14xf32>
    %153 = arith.maximumf %151, %152 : vector<2x14x14xf32>
    %c27 = arith.constant 27 : index
    %154 = memref.load %arg1[%c27] : memref<81xf32, #tpu.memory_space<smem>>
    %155 = vector.extract_strided_slice %6 {offsets = [0, 0, 0], sizes = [2, 14, 14], strides = [1, 1, 1]} : vector<2x16x14xf32> to vector<2x14x14xf32>
    %156 = vector.broadcast %154 : f32 to vector<2x14x14xf32>
    %157 = arith.mulf %155, %156 : vector<2x14x14xf32>
    %c28 = arith.constant 28 : index
    %158 = memref.load %arg1[%c28] : memref<81xf32, #tpu.memory_space<smem>>
    %159 = vector.extract_strided_slice %7 {offsets = [0, 0, 0], sizes = [2, 14, 14], strides = [1, 1, 1]} : vector<2x16x14xf32> to vector<2x14x14xf32>
    %160 = vector.broadcast %158 : f32 to vector<2x14x14xf32>
    %161 = arith.mulf %159, %160 : vector<2x14x14xf32>
    %162 = arith.addf %157, %161 : vector<2x14x14xf32>
    %c29 = arith.constant 29 : index
    %163 = memref.load %arg1[%c29] : memref<81xf32, #tpu.memory_space<smem>>
    %164 = vector.extract_strided_slice %8 {offsets = [0, 0, 0], sizes = [2, 14, 14], strides = [1, 1, 1]} : vector<2x16x14xf32> to vector<2x14x14xf32>
    %165 = vector.broadcast %163 : f32 to vector<2x14x14xf32>
    %166 = arith.mulf %164, %165 : vector<2x14x14xf32>
    %167 = arith.addf %162, %166 : vector<2x14x14xf32>
    %c30 = arith.constant 30 : index
    %168 = memref.load %arg1[%c30] : memref<81xf32, #tpu.memory_space<smem>>
    %169 = vector.extract_strided_slice %6 {offsets = [0, 1, 0], sizes = [2, 14, 14], strides = [1, 1, 1]} : vector<2x16x14xf32> to vector<2x14x14xf32>
    %170 = vector.broadcast %168 : f32 to vector<2x14x14xf32>
    %171 = arith.mulf %169, %170 : vector<2x14x14xf32>
    %172 = arith.addf %167, %171 : vector<2x14x14xf32>
    %c31 = arith.constant 31 : index
    %173 = memref.load %arg1[%c31] : memref<81xf32, #tpu.memory_space<smem>>
    %174 = vector.extract_strided_slice %7 {offsets = [0, 1, 0], sizes = [2, 14, 14], strides = [1, 1, 1]} : vector<2x16x14xf32> to vector<2x14x14xf32>
    %175 = vector.broadcast %173 : f32 to vector<2x14x14xf32>
    %176 = arith.mulf %174, %175 : vector<2x14x14xf32>
    %177 = arith.addf %172, %176 : vector<2x14x14xf32>
    %c32 = arith.constant 32 : index
    %178 = memref.load %arg1[%c32] : memref<81xf32, #tpu.memory_space<smem>>
    %179 = vector.extract_strided_slice %8 {offsets = [0, 1, 0], sizes = [2, 14, 14], strides = [1, 1, 1]} : vector<2x16x14xf32> to vector<2x14x14xf32>
    %180 = vector.broadcast %178 : f32 to vector<2x14x14xf32>
    %181 = arith.mulf %179, %180 : vector<2x14x14xf32>
    %182 = arith.addf %177, %181 : vector<2x14x14xf32>
    %c33 = arith.constant 33 : index
    %183 = memref.load %arg1[%c33] : memref<81xf32, #tpu.memory_space<smem>>
    %184 = vector.extract_strided_slice %6 {offsets = [0, 2, 0], sizes = [2, 14, 14], strides = [1, 1, 1]} : vector<2x16x14xf32> to vector<2x14x14xf32>
    %185 = vector.broadcast %183 : f32 to vector<2x14x14xf32>
    %186 = arith.mulf %184, %185 : vector<2x14x14xf32>
    %187 = arith.addf %182, %186 : vector<2x14x14xf32>
    %c34 = arith.constant 34 : index
    %188 = memref.load %arg1[%c34] : memref<81xf32, #tpu.memory_space<smem>>
    %189 = vector.extract_strided_slice %7 {offsets = [0, 2, 0], sizes = [2, 14, 14], strides = [1, 1, 1]} : vector<2x16x14xf32> to vector<2x14x14xf32>
    %190 = vector.broadcast %188 : f32 to vector<2x14x14xf32>
    %191 = arith.mulf %189, %190 : vector<2x14x14xf32>
    %192 = arith.addf %187, %191 : vector<2x14x14xf32>
    %c35 = arith.constant 35 : index
    %193 = memref.load %arg1[%c35] : memref<81xf32, #tpu.memory_space<smem>>
    %194 = vector.extract_strided_slice %8 {offsets = [0, 2, 0], sizes = [2, 14, 14], strides = [1, 1, 1]} : vector<2x16x14xf32> to vector<2x14x14xf32>
    %195 = vector.broadcast %193 : f32 to vector<2x14x14xf32>
    %196 = arith.mulf %194, %195 : vector<2x14x14xf32>
    %197 = arith.addf %192, %196 : vector<2x14x14xf32>
    %c36 = arith.constant 36 : index
    %198 = memref.load %arg1[%c36] : memref<81xf32, #tpu.memory_space<smem>>
    %199 = vector.extract_strided_slice %9 {offsets = [0, 0, 0], sizes = [2, 14, 14], strides = [1, 1, 1]} : vector<2x16x14xf32> to vector<2x14x14xf32>
    %200 = vector.broadcast %198 : f32 to vector<2x14x14xf32>
    %201 = arith.mulf %199, %200 : vector<2x14x14xf32>
    %c37 = arith.constant 37 : index
    %202 = memref.load %arg1[%c37] : memref<81xf32, #tpu.memory_space<smem>>
    %203 = vector.extract_strided_slice %10 {offsets = [0, 0, 0], sizes = [2, 14, 14], strides = [1, 1, 1]} : vector<2x16x14xf32> to vector<2x14x14xf32>
    %204 = vector.broadcast %202 : f32 to vector<2x14x14xf32>
    %205 = arith.mulf %203, %204 : vector<2x14x14xf32>
    %206 = arith.addf %201, %205 : vector<2x14x14xf32>
    %c38 = arith.constant 38 : index
    %207 = memref.load %arg1[%c38] : memref<81xf32, #tpu.memory_space<smem>>
    %208 = vector.extract_strided_slice %11 {offsets = [0, 0, 0], sizes = [2, 14, 14], strides = [1, 1, 1]} : vector<2x16x14xf32> to vector<2x14x14xf32>
    %209 = vector.broadcast %207 : f32 to vector<2x14x14xf32>
    %210 = arith.mulf %208, %209 : vector<2x14x14xf32>
    %211 = arith.addf %206, %210 : vector<2x14x14xf32>
    %c39 = arith.constant 39 : index
    %212 = memref.load %arg1[%c39] : memref<81xf32, #tpu.memory_space<smem>>
    %213 = vector.extract_strided_slice %9 {offsets = [0, 1, 0], sizes = [2, 14, 14], strides = [1, 1, 1]} : vector<2x16x14xf32> to vector<2x14x14xf32>
    %214 = vector.broadcast %212 : f32 to vector<2x14x14xf32>
    %215 = arith.mulf %213, %214 : vector<2x14x14xf32>
    %216 = arith.addf %211, %215 : vector<2x14x14xf32>
    %c40 = arith.constant 40 : index
    %217 = memref.load %arg1[%c40] : memref<81xf32, #tpu.memory_space<smem>>
    %218 = vector.extract_strided_slice %10 {offsets = [0, 1, 0], sizes = [2, 14, 14], strides = [1, 1, 1]} : vector<2x16x14xf32> to vector<2x14x14xf32>
    %219 = vector.broadcast %217 : f32 to vector<2x14x14xf32>
    %220 = arith.mulf %218, %219 : vector<2x14x14xf32>
    %221 = arith.addf %216, %220 : vector<2x14x14xf32>
    %c41 = arith.constant 41 : index
    %222 = memref.load %arg1[%c41] : memref<81xf32, #tpu.memory_space<smem>>
    %223 = vector.extract_strided_slice %11 {offsets = [0, 1, 0], sizes = [2, 14, 14], strides = [1, 1, 1]} : vector<2x16x14xf32> to vector<2x14x14xf32>
    %224 = vector.broadcast %222 : f32 to vector<2x14x14xf32>
    %225 = arith.mulf %223, %224 : vector<2x14x14xf32>
    %226 = arith.addf %221, %225 : vector<2x14x14xf32>
    %c42 = arith.constant 42 : index
    %227 = memref.load %arg1[%c42] : memref<81xf32, #tpu.memory_space<smem>>
    %228 = vector.extract_strided_slice %9 {offsets = [0, 2, 0], sizes = [2, 14, 14], strides = [1, 1, 1]} : vector<2x16x14xf32> to vector<2x14x14xf32>
    %229 = vector.broadcast %227 : f32 to vector<2x14x14xf32>
    %230 = arith.mulf %228, %229 : vector<2x14x14xf32>
    %231 = arith.addf %226, %230 : vector<2x14x14xf32>
    %c43 = arith.constant 43 : index
    %232 = memref.load %arg1[%c43] : memref<81xf32, #tpu.memory_space<smem>>
    %233 = vector.extract_strided_slice %10 {offsets = [0, 2, 0], sizes = [2, 14, 14], strides = [1, 1, 1]} : vector<2x16x14xf32> to vector<2x14x14xf32>
    %234 = vector.broadcast %232 : f32 to vector<2x14x14xf32>
    %235 = arith.mulf %233, %234 : vector<2x14x14xf32>
    %236 = arith.addf %231, %235 : vector<2x14x14xf32>
    %c44 = arith.constant 44 : index
    %237 = memref.load %arg1[%c44] : memref<81xf32, #tpu.memory_space<smem>>
    %238 = vector.extract_strided_slice %11 {offsets = [0, 2, 0], sizes = [2, 14, 14], strides = [1, 1, 1]} : vector<2x16x14xf32> to vector<2x14x14xf32>
    %239 = vector.broadcast %237 : f32 to vector<2x14x14xf32>
    %240 = arith.mulf %238, %239 : vector<2x14x14xf32>
    %241 = arith.addf %236, %240 : vector<2x14x14xf32>
    %c45 = arith.constant 45 : index
    %242 = memref.load %arg1[%c45] : memref<81xf32, #tpu.memory_space<smem>>
    %243 = vector.extract_strided_slice %12 {offsets = [0, 0, 0], sizes = [2, 14, 14], strides = [1, 1, 1]} : vector<2x16x14xf32> to vector<2x14x14xf32>
    %244 = vector.broadcast %242 : f32 to vector<2x14x14xf32>
    %245 = arith.mulf %243, %244 : vector<2x14x14xf32>
    %c46 = arith.constant 46 : index
    %246 = memref.load %arg1[%c46] : memref<81xf32, #tpu.memory_space<smem>>
    %247 = vector.extract_strided_slice %13 {offsets = [0, 0, 0], sizes = [2, 14, 14], strides = [1, 1, 1]} : vector<2x16x14xf32> to vector<2x14x14xf32>
    %248 = vector.broadcast %246 : f32 to vector<2x14x14xf32>
    %249 = arith.mulf %247, %248 : vector<2x14x14xf32>
    %250 = arith.addf %245, %249 : vector<2x14x14xf32>
    %c47 = arith.constant 47 : index
    %251 = memref.load %arg1[%c47] : memref<81xf32, #tpu.memory_space<smem>>
    %252 = vector.extract_strided_slice %14 {offsets = [0, 0, 0], sizes = [2, 14, 14], strides = [1, 1, 1]} : vector<2x16x14xf32> to vector<2x14x14xf32>
    %253 = vector.broadcast %251 : f32 to vector<2x14x14xf32>
    %254 = arith.mulf %252, %253 : vector<2x14x14xf32>
    %255 = arith.addf %250, %254 : vector<2x14x14xf32>
    %c48 = arith.constant 48 : index
    %256 = memref.load %arg1[%c48] : memref<81xf32, #tpu.memory_space<smem>>
    %257 = vector.extract_strided_slice %12 {offsets = [0, 1, 0], sizes = [2, 14, 14], strides = [1, 1, 1]} : vector<2x16x14xf32> to vector<2x14x14xf32>
    %258 = vector.broadcast %256 : f32 to vector<2x14x14xf32>
    %259 = arith.mulf %257, %258 : vector<2x14x14xf32>
    %260 = arith.addf %255, %259 : vector<2x14x14xf32>
    %c49 = arith.constant 49 : index
    %261 = memref.load %arg1[%c49] : memref<81xf32, #tpu.memory_space<smem>>
    %262 = vector.extract_strided_slice %13 {offsets = [0, 1, 0], sizes = [2, 14, 14], strides = [1, 1, 1]} : vector<2x16x14xf32> to vector<2x14x14xf32>
    %263 = vector.broadcast %261 : f32 to vector<2x14x14xf32>
    %264 = arith.mulf %262, %263 : vector<2x14x14xf32>
    %265 = arith.addf %260, %264 : vector<2x14x14xf32>
    %c50 = arith.constant 50 : index
    %266 = memref.load %arg1[%c50] : memref<81xf32, #tpu.memory_space<smem>>
    %267 = vector.extract_strided_slice %14 {offsets = [0, 1, 0], sizes = [2, 14, 14], strides = [1, 1, 1]} : vector<2x16x14xf32> to vector<2x14x14xf32>
    %268 = vector.broadcast %266 : f32 to vector<2x14x14xf32>
    %269 = arith.mulf %267, %268 : vector<2x14x14xf32>
    %270 = arith.addf %265, %269 : vector<2x14x14xf32>
    %c51 = arith.constant 51 : index
    %271 = memref.load %arg1[%c51] : memref<81xf32, #tpu.memory_space<smem>>
    %272 = vector.extract_strided_slice %12 {offsets = [0, 2, 0], sizes = [2, 14, 14], strides = [1, 1, 1]} : vector<2x16x14xf32> to vector<2x14x14xf32>
    %273 = vector.broadcast %271 : f32 to vector<2x14x14xf32>
    %274 = arith.mulf %272, %273 : vector<2x14x14xf32>
    %275 = arith.addf %270, %274 : vector<2x14x14xf32>
    %c52 = arith.constant 52 : index
    %276 = memref.load %arg1[%c52] : memref<81xf32, #tpu.memory_space<smem>>
    %277 = vector.extract_strided_slice %13 {offsets = [0, 2, 0], sizes = [2, 14, 14], strides = [1, 1, 1]} : vector<2x16x14xf32> to vector<2x14x14xf32>
    %278 = vector.broadcast %276 : f32 to vector<2x14x14xf32>
    %279 = arith.mulf %277, %278 : vector<2x14x14xf32>
    %280 = arith.addf %275, %279 : vector<2x14x14xf32>
    %c53 = arith.constant 53 : index
    %281 = memref.load %arg1[%c53] : memref<81xf32, #tpu.memory_space<smem>>
    %282 = vector.extract_strided_slice %14 {offsets = [0, 2, 0], sizes = [2, 14, 14], strides = [1, 1, 1]} : vector<2x16x14xf32> to vector<2x14x14xf32>
    %283 = vector.broadcast %281 : f32 to vector<2x14x14xf32>
    %284 = arith.mulf %282, %283 : vector<2x14x14xf32>
    %285 = arith.addf %280, %284 : vector<2x14x14xf32>
    %286 = arith.addf %197, %241 : vector<2x14x14xf32>
    %287 = arith.addf %286, %285 : vector<2x14x14xf32>
    %c1_13 = arith.constant 1 : index
    %288 = memref.load %arg2[%c1_13] : memref<3xf32, #tpu.memory_space<smem>>
    %289 = vector.broadcast %288 : f32 to vector<2x14x14xf32>
    %290 = arith.addf %287, %289 : vector<2x14x14xf32>
    %cst_14 = arith.constant 0.000000e+00 : f32
    %291 = vector.broadcast %cst_14 : f32 to vector<2x14x14xf32>
    %292 = arith.maximumf %290, %291 : vector<2x14x14xf32>
    %c54 = arith.constant 54 : index
    %293 = memref.load %arg1[%c54] : memref<81xf32, #tpu.memory_space<smem>>
    %294 = vector.extract_strided_slice %6 {offsets = [0, 0, 0], sizes = [2, 14, 14], strides = [1, 1, 1]} : vector<2x16x14xf32> to vector<2x14x14xf32>
    %295 = vector.broadcast %293 : f32 to vector<2x14x14xf32>
    %296 = arith.mulf %294, %295 : vector<2x14x14xf32>
    %c55 = arith.constant 55 : index
    %297 = memref.load %arg1[%c55] : memref<81xf32, #tpu.memory_space<smem>>
    %298 = vector.extract_strided_slice %7 {offsets = [0, 0, 0], sizes = [2, 14, 14], strides = [1, 1, 1]} : vector<2x16x14xf32> to vector<2x14x14xf32>
    %299 = vector.broadcast %297 : f32 to vector<2x14x14xf32>
    %300 = arith.mulf %298, %299 : vector<2x14x14xf32>
    %301 = arith.addf %296, %300 : vector<2x14x14xf32>
    %c56 = arith.constant 56 : index
    %302 = memref.load %arg1[%c56] : memref<81xf32, #tpu.memory_space<smem>>
    %303 = vector.extract_strided_slice %8 {offsets = [0, 0, 0], sizes = [2, 14, 14], strides = [1, 1, 1]} : vector<2x16x14xf32> to vector<2x14x14xf32>
    %304 = vector.broadcast %302 : f32 to vector<2x14x14xf32>
    %305 = arith.mulf %303, %304 : vector<2x14x14xf32>
    %306 = arith.addf %301, %305 : vector<2x14x14xf32>
    %c57 = arith.constant 57 : index
    %307 = memref.load %arg1[%c57] : memref<81xf32, #tpu.memory_space<smem>>
    %308 = vector.extract_strided_slice %6 {offsets = [0, 1, 0], sizes = [2, 14, 14], strides = [1, 1, 1]} : vector<2x16x14xf32> to vector<2x14x14xf32>
    %309 = vector.broadcast %307 : f32 to vector<2x14x14xf32>
    %310 = arith.mulf %308, %309 : vector<2x14x14xf32>
    %311 = arith.addf %306, %310 : vector<2x14x14xf32>
    %c58 = arith.constant 58 : index
    %312 = memref.load %arg1[%c58] : memref<81xf32, #tpu.memory_space<smem>>
    %313 = vector.extract_strided_slice %7 {offsets = [0, 1, 0], sizes = [2, 14, 14], strides = [1, 1, 1]} : vector<2x16x14xf32> to vector<2x14x14xf32>
    %314 = vector.broadcast %312 : f32 to vector<2x14x14xf32>
    %315 = arith.mulf %313, %314 : vector<2x14x14xf32>
    %316 = arith.addf %311, %315 : vector<2x14x14xf32>
    %c59 = arith.constant 59 : index
    %317 = memref.load %arg1[%c59] : memref<81xf32, #tpu.memory_space<smem>>
    %318 = vector.extract_strided_slice %8 {offsets = [0, 1, 0], sizes = [2, 14, 14], strides = [1, 1, 1]} : vector<2x16x14xf32> to vector<2x14x14xf32>
    %319 = vector.broadcast %317 : f32 to vector<2x14x14xf32>
    %320 = arith.mulf %318, %319 : vector<2x14x14xf32>
    %321 = arith.addf %316, %320 : vector<2x14x14xf32>
    %c60 = arith.constant 60 : index
    %322 = memref.load %arg1[%c60] : memref<81xf32, #tpu.memory_space<smem>>
    %323 = vector.extract_strided_slice %6 {offsets = [0, 2, 0], sizes = [2, 14, 14], strides = [1, 1, 1]} : vector<2x16x14xf32> to vector<2x14x14xf32>
    %324 = vector.broadcast %322 : f32 to vector<2x14x14xf32>
    %325 = arith.mulf %323, %324 : vector<2x14x14xf32>
    %326 = arith.addf %321, %325 : vector<2x14x14xf32>
    %c61 = arith.constant 61 : index
    %327 = memref.load %arg1[%c61] : memref<81xf32, #tpu.memory_space<smem>>
    %328 = vector.extract_strided_slice %7 {offsets = [0, 2, 0], sizes = [2, 14, 14], strides = [1, 1, 1]} : vector<2x16x14xf32> to vector<2x14x14xf32>
    %329 = vector.broadcast %327 : f32 to vector<2x14x14xf32>
    %330 = arith.mulf %328, %329 : vector<2x14x14xf32>
    %331 = arith.addf %326, %330 : vector<2x14x14xf32>
    %c62 = arith.constant 62 : index
    %332 = memref.load %arg1[%c62] : memref<81xf32, #tpu.memory_space<smem>>
    %333 = vector.extract_strided_slice %8 {offsets = [0, 2, 0], sizes = [2, 14, 14], strides = [1, 1, 1]} : vector<2x16x14xf32> to vector<2x14x14xf32>
    %334 = vector.broadcast %332 : f32 to vector<2x14x14xf32>
    %335 = arith.mulf %333, %334 : vector<2x14x14xf32>
    %336 = arith.addf %331, %335 : vector<2x14x14xf32>
    %c63 = arith.constant 63 : index
    %337 = memref.load %arg1[%c63] : memref<81xf32, #tpu.memory_space<smem>>
    %338 = vector.extract_strided_slice %9 {offsets = [0, 0, 0], sizes = [2, 14, 14], strides = [1, 1, 1]} : vector<2x16x14xf32> to vector<2x14x14xf32>
    %339 = vector.broadcast %337 : f32 to vector<2x14x14xf32>
    %340 = arith.mulf %338, %339 : vector<2x14x14xf32>
    %c64 = arith.constant 64 : index
    %341 = memref.load %arg1[%c64] : memref<81xf32, #tpu.memory_space<smem>>
    %342 = vector.extract_strided_slice %10 {offsets = [0, 0, 0], sizes = [2, 14, 14], strides = [1, 1, 1]} : vector<2x16x14xf32> to vector<2x14x14xf32>
    %343 = vector.broadcast %341 : f32 to vector<2x14x14xf32>
    %344 = arith.mulf %342, %343 : vector<2x14x14xf32>
    %345 = arith.addf %340, %344 : vector<2x14x14xf32>
    %c65 = arith.constant 65 : index
    %346 = memref.load %arg1[%c65] : memref<81xf32, #tpu.memory_space<smem>>
    %347 = vector.extract_strided_slice %11 {offsets = [0, 0, 0], sizes = [2, 14, 14], strides = [1, 1, 1]} : vector<2x16x14xf32> to vector<2x14x14xf32>
    %348 = vector.broadcast %346 : f32 to vector<2x14x14xf32>
    %349 = arith.mulf %347, %348 : vector<2x14x14xf32>
    %350 = arith.addf %345, %349 : vector<2x14x14xf32>
    %c66 = arith.constant 66 : index
    %351 = memref.load %arg1[%c66] : memref<81xf32, #tpu.memory_space<smem>>
    %352 = vector.extract_strided_slice %9 {offsets = [0, 1, 0], sizes = [2, 14, 14], strides = [1, 1, 1]} : vector<2x16x14xf32> to vector<2x14x14xf32>
    %353 = vector.broadcast %351 : f32 to vector<2x14x14xf32>
    %354 = arith.mulf %352, %353 : vector<2x14x14xf32>
    %355 = arith.addf %350, %354 : vector<2x14x14xf32>
    %c67 = arith.constant 67 : index
    %356 = memref.load %arg1[%c67] : memref<81xf32, #tpu.memory_space<smem>>
    %357 = vector.extract_strided_slice %10 {offsets = [0, 1, 0], sizes = [2, 14, 14], strides = [1, 1, 1]} : vector<2x16x14xf32> to vector<2x14x14xf32>
    %358 = vector.broadcast %356 : f32 to vector<2x14x14xf32>
    %359 = arith.mulf %357, %358 : vector<2x14x14xf32>
    %360 = arith.addf %355, %359 : vector<2x14x14xf32>
    %c68 = arith.constant 68 : index
    %361 = memref.load %arg1[%c68] : memref<81xf32, #tpu.memory_space<smem>>
    %362 = vector.extract_strided_slice %11 {offsets = [0, 1, 0], sizes = [2, 14, 14], strides = [1, 1, 1]} : vector<2x16x14xf32> to vector<2x14x14xf32>
    %363 = vector.broadcast %361 : f32 to vector<2x14x14xf32>
    %364 = arith.mulf %362, %363 : vector<2x14x14xf32>
    %365 = arith.addf %360, %364 : vector<2x14x14xf32>
    %c69 = arith.constant 69 : index
    %366 = memref.load %arg1[%c69] : memref<81xf32, #tpu.memory_space<smem>>
    %367 = vector.extract_strided_slice %9 {offsets = [0, 2, 0], sizes = [2, 14, 14], strides = [1, 1, 1]} : vector<2x16x14xf32> to vector<2x14x14xf32>
    %368 = vector.broadcast %366 : f32 to vector<2x14x14xf32>
    %369 = arith.mulf %367, %368 : vector<2x14x14xf32>
    %370 = arith.addf %365, %369 : vector<2x14x14xf32>
    %c70 = arith.constant 70 : index
    %371 = memref.load %arg1[%c70] : memref<81xf32, #tpu.memory_space<smem>>
    %372 = vector.extract_strided_slice %10 {offsets = [0, 2, 0], sizes = [2, 14, 14], strides = [1, 1, 1]} : vector<2x16x14xf32> to vector<2x14x14xf32>
    %373 = vector.broadcast %371 : f32 to vector<2x14x14xf32>
    %374 = arith.mulf %372, %373 : vector<2x14x14xf32>
    %375 = arith.addf %370, %374 : vector<2x14x14xf32>
    %c71 = arith.constant 71 : index
    %376 = memref.load %arg1[%c71] : memref<81xf32, #tpu.memory_space<smem>>
    %377 = vector.extract_strided_slice %11 {offsets = [0, 2, 0], sizes = [2, 14, 14], strides = [1, 1, 1]} : vector<2x16x14xf32> to vector<2x14x14xf32>
    %378 = vector.broadcast %376 : f32 to vector<2x14x14xf32>
    %379 = arith.mulf %377, %378 : vector<2x14x14xf32>
    %380 = arith.addf %375, %379 : vector<2x14x14xf32>
    %c72 = arith.constant 72 : index
    %381 = memref.load %arg1[%c72] : memref<81xf32, #tpu.memory_space<smem>>
    %382 = vector.extract_strided_slice %12 {offsets = [0, 0, 0], sizes = [2, 14, 14], strides = [1, 1, 1]} : vector<2x16x14xf32> to vector<2x14x14xf32>
    %383 = vector.broadcast %381 : f32 to vector<2x14x14xf32>
    %384 = arith.mulf %382, %383 : vector<2x14x14xf32>
    %c73 = arith.constant 73 : index
    %385 = memref.load %arg1[%c73] : memref<81xf32, #tpu.memory_space<smem>>
    %386 = vector.extract_strided_slice %13 {offsets = [0, 0, 0], sizes = [2, 14, 14], strides = [1, 1, 1]} : vector<2x16x14xf32> to vector<2x14x14xf32>
    %387 = vector.broadcast %385 : f32 to vector<2x14x14xf32>
    %388 = arith.mulf %386, %387 : vector<2x14x14xf32>
    %389 = arith.addf %384, %388 : vector<2x14x14xf32>
    %c74 = arith.constant 74 : index
    %390 = memref.load %arg1[%c74] : memref<81xf32, #tpu.memory_space<smem>>
    %391 = vector.extract_strided_slice %14 {offsets = [0, 0, 0], sizes = [2, 14, 14], strides = [1, 1, 1]} : vector<2x16x14xf32> to vector<2x14x14xf32>
    %392 = vector.broadcast %390 : f32 to vector<2x14x14xf32>
    %393 = arith.mulf %391, %392 : vector<2x14x14xf32>
    %394 = arith.addf %389, %393 : vector<2x14x14xf32>
    %c75 = arith.constant 75 : index
    %395 = memref.load %arg1[%c75] : memref<81xf32, #tpu.memory_space<smem>>
    %396 = vector.extract_strided_slice %12 {offsets = [0, 1, 0], sizes = [2, 14, 14], strides = [1, 1, 1]} : vector<2x16x14xf32> to vector<2x14x14xf32>
    %397 = vector.broadcast %395 : f32 to vector<2x14x14xf32>
    %398 = arith.mulf %396, %397 : vector<2x14x14xf32>
    %399 = arith.addf %394, %398 : vector<2x14x14xf32>
    %c76 = arith.constant 76 : index
    %400 = memref.load %arg1[%c76] : memref<81xf32, #tpu.memory_space<smem>>
    %401 = vector.extract_strided_slice %13 {offsets = [0, 1, 0], sizes = [2, 14, 14], strides = [1, 1, 1]} : vector<2x16x14xf32> to vector<2x14x14xf32>
    %402 = vector.broadcast %400 : f32 to vector<2x14x14xf32>
    %403 = arith.mulf %401, %402 : vector<2x14x14xf32>
    %404 = arith.addf %399, %403 : vector<2x14x14xf32>
    %c77 = arith.constant 77 : index
    %405 = memref.load %arg1[%c77] : memref<81xf32, #tpu.memory_space<smem>>
    %406 = vector.extract_strided_slice %14 {offsets = [0, 1, 0], sizes = [2, 14, 14], strides = [1, 1, 1]} : vector<2x16x14xf32> to vector<2x14x14xf32>
    %407 = vector.broadcast %405 : f32 to vector<2x14x14xf32>
    %408 = arith.mulf %406, %407 : vector<2x14x14xf32>
    %409 = arith.addf %404, %408 : vector<2x14x14xf32>
    %c78 = arith.constant 78 : index
    %410 = memref.load %arg1[%c78] : memref<81xf32, #tpu.memory_space<smem>>
    %411 = vector.extract_strided_slice %12 {offsets = [0, 2, 0], sizes = [2, 14, 14], strides = [1, 1, 1]} : vector<2x16x14xf32> to vector<2x14x14xf32>
    %412 = vector.broadcast %410 : f32 to vector<2x14x14xf32>
    %413 = arith.mulf %411, %412 : vector<2x14x14xf32>
    %414 = arith.addf %409, %413 : vector<2x14x14xf32>
    %c79 = arith.constant 79 : index
    %415 = memref.load %arg1[%c79] : memref<81xf32, #tpu.memory_space<smem>>
    %416 = vector.extract_strided_slice %13 {offsets = [0, 2, 0], sizes = [2, 14, 14], strides = [1, 1, 1]} : vector<2x16x14xf32> to vector<2x14x14xf32>
    %417 = vector.broadcast %415 : f32 to vector<2x14x14xf32>
    %418 = arith.mulf %416, %417 : vector<2x14x14xf32>
    %419 = arith.addf %414, %418 : vector<2x14x14xf32>
    %c80 = arith.constant 80 : index
    %420 = memref.load %arg1[%c80] : memref<81xf32, #tpu.memory_space<smem>>
    %421 = vector.extract_strided_slice %14 {offsets = [0, 2, 0], sizes = [2, 14, 14], strides = [1, 1, 1]} : vector<2x16x14xf32> to vector<2x14x14xf32>
    %422 = vector.broadcast %420 : f32 to vector<2x14x14xf32>
    %423 = arith.mulf %421, %422 : vector<2x14x14xf32>
    %424 = arith.addf %419, %423 : vector<2x14x14xf32>
    %425 = arith.addf %336, %380 : vector<2x14x14xf32>
    %426 = arith.addf %425, %424 : vector<2x14x14xf32>
    %c2_15 = arith.constant 2 : index
    %427 = memref.load %arg2[%c2_15] : memref<3xf32, #tpu.memory_space<smem>>
    %428 = vector.broadcast %427 : f32 to vector<2x14x14xf32>
    %429 = arith.addf %426, %428 : vector<2x14x14xf32>
    %cst_16 = arith.constant 0.000000e+00 : f32
    %430 = vector.broadcast %cst_16 : f32 to vector<2x14x14xf32>
    %431 = arith.maximumf %429, %430 : vector<2x14x14xf32>
    %432 = vector.extract_strided_slice %153 {offsets = [0, 0, 0], sizes = [2, 14, 12], strides = [1, 1, 1]} : vector<2x14x14xf32> to vector<2x14x12xf32>
    %433 = vector.extract_strided_slice %153 {offsets = [0, 0, 1], sizes = [2, 14, 12], strides = [1, 1, 1]} : vector<2x14x14xf32> to vector<2x14x12xf32>
    %434 = vector.extract_strided_slice %153 {offsets = [0, 0, 2], sizes = [2, 14, 12], strides = [1, 1, 1]} : vector<2x14x14xf32> to vector<2x14x12xf32>
    %435 = vector.extract_strided_slice %292 {offsets = [0, 0, 0], sizes = [2, 14, 12], strides = [1, 1, 1]} : vector<2x14x14xf32> to vector<2x14x12xf32>
    %436 = vector.extract_strided_slice %292 {offsets = [0, 0, 1], sizes = [2, 14, 12], strides = [1, 1, 1]} : vector<2x14x14xf32> to vector<2x14x12xf32>
    %437 = vector.extract_strided_slice %292 {offsets = [0, 0, 2], sizes = [2, 14, 12], strides = [1, 1, 1]} : vector<2x14x14xf32> to vector<2x14x12xf32>
    %438 = vector.extract_strided_slice %431 {offsets = [0, 0, 0], sizes = [2, 14, 12], strides = [1, 1, 1]} : vector<2x14x14xf32> to vector<2x14x12xf32>
    %439 = vector.extract_strided_slice %431 {offsets = [0, 0, 1], sizes = [2, 14, 12], strides = [1, 1, 1]} : vector<2x14x14xf32> to vector<2x14x12xf32>
    %440 = vector.extract_strided_slice %431 {offsets = [0, 0, 2], sizes = [2, 14, 12], strides = [1, 1, 1]} : vector<2x14x14xf32> to vector<2x14x12xf32>
    %c0_17 = arith.constant 0 : index
    %441 = memref.load %arg3[%c0_17] : memref<81xf32, #tpu.memory_space<smem>>
    %442 = vector.extract_strided_slice %432 {offsets = [0, 0, 0], sizes = [2, 12, 12], strides = [1, 1, 1]} : vector<2x14x12xf32> to vector<2x12x12xf32>
    %443 = vector.broadcast %441 : f32 to vector<2x12x12xf32>
    %444 = arith.mulf %442, %443 : vector<2x12x12xf32>
    %c1_18 = arith.constant 1 : index
    %445 = memref.load %arg3[%c1_18] : memref<81xf32, #tpu.memory_space<smem>>
    %446 = vector.extract_strided_slice %433 {offsets = [0, 0, 0], sizes = [2, 12, 12], strides = [1, 1, 1]} : vector<2x14x12xf32> to vector<2x12x12xf32>
    %447 = vector.broadcast %445 : f32 to vector<2x12x12xf32>
    %448 = arith.mulf %446, %447 : vector<2x12x12xf32>
    %449 = arith.addf %444, %448 : vector<2x12x12xf32>
    %c2_19 = arith.constant 2 : index
    %450 = memref.load %arg3[%c2_19] : memref<81xf32, #tpu.memory_space<smem>>
    %451 = vector.extract_strided_slice %434 {offsets = [0, 0, 0], sizes = [2, 12, 12], strides = [1, 1, 1]} : vector<2x14x12xf32> to vector<2x12x12xf32>
    %452 = vector.broadcast %450 : f32 to vector<2x12x12xf32>
    %453 = arith.mulf %451, %452 : vector<2x12x12xf32>
    %454 = arith.addf %449, %453 : vector<2x12x12xf32>
    %c3_20 = arith.constant 3 : index
    %455 = memref.load %arg3[%c3_20] : memref<81xf32, #tpu.memory_space<smem>>
    %456 = vector.extract_strided_slice %432 {offsets = [0, 1, 0], sizes = [2, 12, 12], strides = [1, 1, 1]} : vector<2x14x12xf32> to vector<2x12x12xf32>
    %457 = vector.broadcast %455 : f32 to vector<2x12x12xf32>
    %458 = arith.mulf %456, %457 : vector<2x12x12xf32>
    %459 = arith.addf %454, %458 : vector<2x12x12xf32>
    %c4_21 = arith.constant 4 : index
    %460 = memref.load %arg3[%c4_21] : memref<81xf32, #tpu.memory_space<smem>>
    %461 = vector.extract_strided_slice %433 {offsets = [0, 1, 0], sizes = [2, 12, 12], strides = [1, 1, 1]} : vector<2x14x12xf32> to vector<2x12x12xf32>
    %462 = vector.broadcast %460 : f32 to vector<2x12x12xf32>
    %463 = arith.mulf %461, %462 : vector<2x12x12xf32>
    %464 = arith.addf %459, %463 : vector<2x12x12xf32>
    %c5_22 = arith.constant 5 : index
    %465 = memref.load %arg3[%c5_22] : memref<81xf32, #tpu.memory_space<smem>>
    %466 = vector.extract_strided_slice %434 {offsets = [0, 1, 0], sizes = [2, 12, 12], strides = [1, 1, 1]} : vector<2x14x12xf32> to vector<2x12x12xf32>
    %467 = vector.broadcast %465 : f32 to vector<2x12x12xf32>
    %468 = arith.mulf %466, %467 : vector<2x12x12xf32>
    %469 = arith.addf %464, %468 : vector<2x12x12xf32>
    %c6_23 = arith.constant 6 : index
    %470 = memref.load %arg3[%c6_23] : memref<81xf32, #tpu.memory_space<smem>>
    %471 = vector.extract_strided_slice %432 {offsets = [0, 2, 0], sizes = [2, 12, 12], strides = [1, 1, 1]} : vector<2x14x12xf32> to vector<2x12x12xf32>
    %472 = vector.broadcast %470 : f32 to vector<2x12x12xf32>
    %473 = arith.mulf %471, %472 : vector<2x12x12xf32>
    %474 = arith.addf %469, %473 : vector<2x12x12xf32>
    %c7_24 = arith.constant 7 : index
    %475 = memref.load %arg3[%c7_24] : memref<81xf32, #tpu.memory_space<smem>>
    %476 = vector.extract_strided_slice %433 {offsets = [0, 2, 0], sizes = [2, 12, 12], strides = [1, 1, 1]} : vector<2x14x12xf32> to vector<2x12x12xf32>
    %477 = vector.broadcast %475 : f32 to vector<2x12x12xf32>
    %478 = arith.mulf %476, %477 : vector<2x12x12xf32>
    %479 = arith.addf %474, %478 : vector<2x12x12xf32>
    %c8_25 = arith.constant 8 : index
    %480 = memref.load %arg3[%c8_25] : memref<81xf32, #tpu.memory_space<smem>>
    %481 = vector.extract_strided_slice %434 {offsets = [0, 2, 0], sizes = [2, 12, 12], strides = [1, 1, 1]} : vector<2x14x12xf32> to vector<2x12x12xf32>
    %482 = vector.broadcast %480 : f32 to vector<2x12x12xf32>
    %483 = arith.mulf %481, %482 : vector<2x12x12xf32>
    %484 = arith.addf %479, %483 : vector<2x12x12xf32>
    %c9_26 = arith.constant 9 : index
    %485 = memref.load %arg3[%c9_26] : memref<81xf32, #tpu.memory_space<smem>>
    %486 = vector.extract_strided_slice %435 {offsets = [0, 0, 0], sizes = [2, 12, 12], strides = [1, 1, 1]} : vector<2x14x12xf32> to vector<2x12x12xf32>
    %487 = vector.broadcast %485 : f32 to vector<2x12x12xf32>
    %488 = arith.mulf %486, %487 : vector<2x12x12xf32>
    %c10_27 = arith.constant 10 : index
    %489 = memref.load %arg3[%c10_27] : memref<81xf32, #tpu.memory_space<smem>>
    %490 = vector.extract_strided_slice %436 {offsets = [0, 0, 0], sizes = [2, 12, 12], strides = [1, 1, 1]} : vector<2x14x12xf32> to vector<2x12x12xf32>
    %491 = vector.broadcast %489 : f32 to vector<2x12x12xf32>
    %492 = arith.mulf %490, %491 : vector<2x12x12xf32>
    %493 = arith.addf %488, %492 : vector<2x12x12xf32>
    %c11_28 = arith.constant 11 : index
    %494 = memref.load %arg3[%c11_28] : memref<81xf32, #tpu.memory_space<smem>>
    %495 = vector.extract_strided_slice %437 {offsets = [0, 0, 0], sizes = [2, 12, 12], strides = [1, 1, 1]} : vector<2x14x12xf32> to vector<2x12x12xf32>
    %496 = vector.broadcast %494 : f32 to vector<2x12x12xf32>
    %497 = arith.mulf %495, %496 : vector<2x12x12xf32>
    %498 = arith.addf %493, %497 : vector<2x12x12xf32>
    %c12_29 = arith.constant 12 : index
    %499 = memref.load %arg3[%c12_29] : memref<81xf32, #tpu.memory_space<smem>>
    %500 = vector.extract_strided_slice %435 {offsets = [0, 1, 0], sizes = [2, 12, 12], strides = [1, 1, 1]} : vector<2x14x12xf32> to vector<2x12x12xf32>
    %501 = vector.broadcast %499 : f32 to vector<2x12x12xf32>
    %502 = arith.mulf %500, %501 : vector<2x12x12xf32>
    %503 = arith.addf %498, %502 : vector<2x12x12xf32>
    %c13_30 = arith.constant 13 : index
    %504 = memref.load %arg3[%c13_30] : memref<81xf32, #tpu.memory_space<smem>>
    %505 = vector.extract_strided_slice %436 {offsets = [0, 1, 0], sizes = [2, 12, 12], strides = [1, 1, 1]} : vector<2x14x12xf32> to vector<2x12x12xf32>
    %506 = vector.broadcast %504 : f32 to vector<2x12x12xf32>
    %507 = arith.mulf %505, %506 : vector<2x12x12xf32>
    %508 = arith.addf %503, %507 : vector<2x12x12xf32>
    %c14_31 = arith.constant 14 : index
    %509 = memref.load %arg3[%c14_31] : memref<81xf32, #tpu.memory_space<smem>>
    %510 = vector.extract_strided_slice %437 {offsets = [0, 1, 0], sizes = [2, 12, 12], strides = [1, 1, 1]} : vector<2x14x12xf32> to vector<2x12x12xf32>
    %511 = vector.broadcast %509 : f32 to vector<2x12x12xf32>
    %512 = arith.mulf %510, %511 : vector<2x12x12xf32>
    %513 = arith.addf %508, %512 : vector<2x12x12xf32>
    %c15_32 = arith.constant 15 : index
    %514 = memref.load %arg3[%c15_32] : memref<81xf32, #tpu.memory_space<smem>>
    %515 = vector.extract_strided_slice %435 {offsets = [0, 2, 0], sizes = [2, 12, 12], strides = [1, 1, 1]} : vector<2x14x12xf32> to vector<2x12x12xf32>
    %516 = vector.broadcast %514 : f32 to vector<2x12x12xf32>
    %517 = arith.mulf %515, %516 : vector<2x12x12xf32>
    %518 = arith.addf %513, %517 : vector<2x12x12xf32>
    %c16_33 = arith.constant 16 : index
    %519 = memref.load %arg3[%c16_33] : memref<81xf32, #tpu.memory_space<smem>>
    %520 = vector.extract_strided_slice %436 {offsets = [0, 2, 0], sizes = [2, 12, 12], strides = [1, 1, 1]} : vector<2x14x12xf32> to vector<2x12x12xf32>
    %521 = vector.broadcast %519 : f32 to vector<2x12x12xf32>
    %522 = arith.mulf %520, %521 : vector<2x12x12xf32>
    %523 = arith.addf %518, %522 : vector<2x12x12xf32>
    %c17_34 = arith.constant 17 : index
    %524 = memref.load %arg3[%c17_34] : memref<81xf32, #tpu.memory_space<smem>>
    %525 = vector.extract_strided_slice %437 {offsets = [0, 2, 0], sizes = [2, 12, 12], strides = [1, 1, 1]} : vector<2x14x12xf32> to vector<2x12x12xf32>
    %526 = vector.broadcast %524 : f32 to vector<2x12x12xf32>
    %527 = arith.mulf %525, %526 : vector<2x12x12xf32>
    %528 = arith.addf %523, %527 : vector<2x12x12xf32>
    %c18_35 = arith.constant 18 : index
    %529 = memref.load %arg3[%c18_35] : memref<81xf32, #tpu.memory_space<smem>>
    %530 = vector.extract_strided_slice %438 {offsets = [0, 0, 0], sizes = [2, 12, 12], strides = [1, 1, 1]} : vector<2x14x12xf32> to vector<2x12x12xf32>
    %531 = vector.broadcast %529 : f32 to vector<2x12x12xf32>
    %532 = arith.mulf %530, %531 : vector<2x12x12xf32>
    %c19_36 = arith.constant 19 : index
    %533 = memref.load %arg3[%c19_36] : memref<81xf32, #tpu.memory_space<smem>>
    %534 = vector.extract_strided_slice %439 {offsets = [0, 0, 0], sizes = [2, 12, 12], strides = [1, 1, 1]} : vector<2x14x12xf32> to vector<2x12x12xf32>
    %535 = vector.broadcast %533 : f32 to vector<2x12x12xf32>
    %536 = arith.mulf %534, %535 : vector<2x12x12xf32>
    %537 = arith.addf %532, %536 : vector<2x12x12xf32>
    %c20_37 = arith.constant 20 : index
    %538 = memref.load %arg3[%c20_37] : memref<81xf32, #tpu.memory_space<smem>>
    %539 = vector.extract_strided_slice %440 {offsets = [0, 0, 0], sizes = [2, 12, 12], strides = [1, 1, 1]} : vector<2x14x12xf32> to vector<2x12x12xf32>
    %540 = vector.broadcast %538 : f32 to vector<2x12x12xf32>
    %541 = arith.mulf %539, %540 : vector<2x12x12xf32>
    %542 = arith.addf %537, %541 : vector<2x12x12xf32>
    %c21_38 = arith.constant 21 : index
    %543 = memref.load %arg3[%c21_38] : memref<81xf32, #tpu.memory_space<smem>>
    %544 = vector.extract_strided_slice %438 {offsets = [0, 1, 0], sizes = [2, 12, 12], strides = [1, 1, 1]} : vector<2x14x12xf32> to vector<2x12x12xf32>
    %545 = vector.broadcast %543 : f32 to vector<2x12x12xf32>
    %546 = arith.mulf %544, %545 : vector<2x12x12xf32>
    %547 = arith.addf %542, %546 : vector<2x12x12xf32>
    %c22_39 = arith.constant 22 : index
    %548 = memref.load %arg3[%c22_39] : memref<81xf32, #tpu.memory_space<smem>>
    %549 = vector.extract_strided_slice %439 {offsets = [0, 1, 0], sizes = [2, 12, 12], strides = [1, 1, 1]} : vector<2x14x12xf32> to vector<2x12x12xf32>
    %550 = vector.broadcast %548 : f32 to vector<2x12x12xf32>
    %551 = arith.mulf %549, %550 : vector<2x12x12xf32>
    %552 = arith.addf %547, %551 : vector<2x12x12xf32>
    %c23_40 = arith.constant 23 : index
    %553 = memref.load %arg3[%c23_40] : memref<81xf32, #tpu.memory_space<smem>>
    %554 = vector.extract_strided_slice %440 {offsets = [0, 1, 0], sizes = [2, 12, 12], strides = [1, 1, 1]} : vector<2x14x12xf32> to vector<2x12x12xf32>
    %555 = vector.broadcast %553 : f32 to vector<2x12x12xf32>
    %556 = arith.mulf %554, %555 : vector<2x12x12xf32>
    %557 = arith.addf %552, %556 : vector<2x12x12xf32>
    %c24_41 = arith.constant 24 : index
    %558 = memref.load %arg3[%c24_41] : memref<81xf32, #tpu.memory_space<smem>>
    %559 = vector.extract_strided_slice %438 {offsets = [0, 2, 0], sizes = [2, 12, 12], strides = [1, 1, 1]} : vector<2x14x12xf32> to vector<2x12x12xf32>
    %560 = vector.broadcast %558 : f32 to vector<2x12x12xf32>
    %561 = arith.mulf %559, %560 : vector<2x12x12xf32>
    %562 = arith.addf %557, %561 : vector<2x12x12xf32>
    %c25_42 = arith.constant 25 : index
    %563 = memref.load %arg3[%c25_42] : memref<81xf32, #tpu.memory_space<smem>>
    %564 = vector.extract_strided_slice %439 {offsets = [0, 2, 0], sizes = [2, 12, 12], strides = [1, 1, 1]} : vector<2x14x12xf32> to vector<2x12x12xf32>
    %565 = vector.broadcast %563 : f32 to vector<2x12x12xf32>
    %566 = arith.mulf %564, %565 : vector<2x12x12xf32>
    %567 = arith.addf %562, %566 : vector<2x12x12xf32>
    %c26_43 = arith.constant 26 : index
    %568 = memref.load %arg3[%c26_43] : memref<81xf32, #tpu.memory_space<smem>>
    %569 = vector.extract_strided_slice %440 {offsets = [0, 2, 0], sizes = [2, 12, 12], strides = [1, 1, 1]} : vector<2x14x12xf32> to vector<2x12x12xf32>
    %570 = vector.broadcast %568 : f32 to vector<2x12x12xf32>
    %571 = arith.mulf %569, %570 : vector<2x12x12xf32>
    %572 = arith.addf %567, %571 : vector<2x12x12xf32>
    %573 = arith.addf %484, %528 : vector<2x12x12xf32>
    %574 = arith.addf %573, %572 : vector<2x12x12xf32>
    %c0_44 = arith.constant 0 : index
    %575 = memref.load %arg4[%c0_44] : memref<3xf32, #tpu.memory_space<smem>>
    %576 = vector.broadcast %575 : f32 to vector<2x12x12xf32>
    %577 = arith.addf %574, %576 : vector<2x12x12xf32>
    %cst_45 = arith.constant 0.000000e+00 : f32
    %578 = vector.broadcast %cst_45 : f32 to vector<2x12x12xf32>
    %579 = arith.maximumf %577, %578 : vector<2x12x12xf32>
    %c27_46 = arith.constant 27 : index
    %580 = memref.load %arg3[%c27_46] : memref<81xf32, #tpu.memory_space<smem>>
    %581 = vector.extract_strided_slice %432 {offsets = [0, 0, 0], sizes = [2, 12, 12], strides = [1, 1, 1]} : vector<2x14x12xf32> to vector<2x12x12xf32>
    %582 = vector.broadcast %580 : f32 to vector<2x12x12xf32>
    %583 = arith.mulf %581, %582 : vector<2x12x12xf32>
    %c28_47 = arith.constant 28 : index
    %584 = memref.load %arg3[%c28_47] : memref<81xf32, #tpu.memory_space<smem>>
    %585 = vector.extract_strided_slice %433 {offsets = [0, 0, 0], sizes = [2, 12, 12], strides = [1, 1, 1]} : vector<2x14x12xf32> to vector<2x12x12xf32>
    %586 = vector.broadcast %584 : f32 to vector<2x12x12xf32>
    %587 = arith.mulf %585, %586 : vector<2x12x12xf32>
    %588 = arith.addf %583, %587 : vector<2x12x12xf32>
    %c29_48 = arith.constant 29 : index
    %589 = memref.load %arg3[%c29_48] : memref<81xf32, #tpu.memory_space<smem>>
    %590 = vector.extract_strided_slice %434 {offsets = [0, 0, 0], sizes = [2, 12, 12], strides = [1, 1, 1]} : vector<2x14x12xf32> to vector<2x12x12xf32>
    %591 = vector.broadcast %589 : f32 to vector<2x12x12xf32>
    %592 = arith.mulf %590, %591 : vector<2x12x12xf32>
    %593 = arith.addf %588, %592 : vector<2x12x12xf32>
    %c30_49 = arith.constant 30 : index
    %594 = memref.load %arg3[%c30_49] : memref<81xf32, #tpu.memory_space<smem>>
    %595 = vector.extract_strided_slice %432 {offsets = [0, 1, 0], sizes = [2, 12, 12], strides = [1, 1, 1]} : vector<2x14x12xf32> to vector<2x12x12xf32>
    %596 = vector.broadcast %594 : f32 to vector<2x12x12xf32>
    %597 = arith.mulf %595, %596 : vector<2x12x12xf32>
    %598 = arith.addf %593, %597 : vector<2x12x12xf32>
    %c31_50 = arith.constant 31 : index
    %599 = memref.load %arg3[%c31_50] : memref<81xf32, #tpu.memory_space<smem>>
    %600 = vector.extract_strided_slice %433 {offsets = [0, 1, 0], sizes = [2, 12, 12], strides = [1, 1, 1]} : vector<2x14x12xf32> to vector<2x12x12xf32>
    %601 = vector.broadcast %599 : f32 to vector<2x12x12xf32>
    %602 = arith.mulf %600, %601 : vector<2x12x12xf32>
    %603 = arith.addf %598, %602 : vector<2x12x12xf32>
    %c32_51 = arith.constant 32 : index
    %604 = memref.load %arg3[%c32_51] : memref<81xf32, #tpu.memory_space<smem>>
    %605 = vector.extract_strided_slice %434 {offsets = [0, 1, 0], sizes = [2, 12, 12], strides = [1, 1, 1]} : vector<2x14x12xf32> to vector<2x12x12xf32>
    %606 = vector.broadcast %604 : f32 to vector<2x12x12xf32>
    %607 = arith.mulf %605, %606 : vector<2x12x12xf32>
    %608 = arith.addf %603, %607 : vector<2x12x12xf32>
    %c33_52 = arith.constant 33 : index
    %609 = memref.load %arg3[%c33_52] : memref<81xf32, #tpu.memory_space<smem>>
    %610 = vector.extract_strided_slice %432 {offsets = [0, 2, 0], sizes = [2, 12, 12], strides = [1, 1, 1]} : vector<2x14x12xf32> to vector<2x12x12xf32>
    %611 = vector.broadcast %609 : f32 to vector<2x12x12xf32>
    %612 = arith.mulf %610, %611 : vector<2x12x12xf32>
    %613 = arith.addf %608, %612 : vector<2x12x12xf32>
    %c34_53 = arith.constant 34 : index
    %614 = memref.load %arg3[%c34_53] : memref<81xf32, #tpu.memory_space<smem>>
    %615 = vector.extract_strided_slice %433 {offsets = [0, 2, 0], sizes = [2, 12, 12], strides = [1, 1, 1]} : vector<2x14x12xf32> to vector<2x12x12xf32>
    %616 = vector.broadcast %614 : f32 to vector<2x12x12xf32>
    %617 = arith.mulf %615, %616 : vector<2x12x12xf32>
    %618 = arith.addf %613, %617 : vector<2x12x12xf32>
    %c35_54 = arith.constant 35 : index
    %619 = memref.load %arg3[%c35_54] : memref<81xf32, #tpu.memory_space<smem>>
    %620 = vector.extract_strided_slice %434 {offsets = [0, 2, 0], sizes = [2, 12, 12], strides = [1, 1, 1]} : vector<2x14x12xf32> to vector<2x12x12xf32>
    %621 = vector.broadcast %619 : f32 to vector<2x12x12xf32>
    %622 = arith.mulf %620, %621 : vector<2x12x12xf32>
    %623 = arith.addf %618, %622 : vector<2x12x12xf32>
    %c36_55 = arith.constant 36 : index
    %624 = memref.load %arg3[%c36_55] : memref<81xf32, #tpu.memory_space<smem>>
    %625 = vector.extract_strided_slice %435 {offsets = [0, 0, 0], sizes = [2, 12, 12], strides = [1, 1, 1]} : vector<2x14x12xf32> to vector<2x12x12xf32>
    %626 = vector.broadcast %624 : f32 to vector<2x12x12xf32>
    %627 = arith.mulf %625, %626 : vector<2x12x12xf32>
    %c37_56 = arith.constant 37 : index
    %628 = memref.load %arg3[%c37_56] : memref<81xf32, #tpu.memory_space<smem>>
    %629 = vector.extract_strided_slice %436 {offsets = [0, 0, 0], sizes = [2, 12, 12], strides = [1, 1, 1]} : vector<2x14x12xf32> to vector<2x12x12xf32>
    %630 = vector.broadcast %628 : f32 to vector<2x12x12xf32>
    %631 = arith.mulf %629, %630 : vector<2x12x12xf32>
    %632 = arith.addf %627, %631 : vector<2x12x12xf32>
    %c38_57 = arith.constant 38 : index
    %633 = memref.load %arg3[%c38_57] : memref<81xf32, #tpu.memory_space<smem>>
    %634 = vector.extract_strided_slice %437 {offsets = [0, 0, 0], sizes = [2, 12, 12], strides = [1, 1, 1]} : vector<2x14x12xf32> to vector<2x12x12xf32>
    %635 = vector.broadcast %633 : f32 to vector<2x12x12xf32>
    %636 = arith.mulf %634, %635 : vector<2x12x12xf32>
    %637 = arith.addf %632, %636 : vector<2x12x12xf32>
    %c39_58 = arith.constant 39 : index
    %638 = memref.load %arg3[%c39_58] : memref<81xf32, #tpu.memory_space<smem>>
    %639 = vector.extract_strided_slice %435 {offsets = [0, 1, 0], sizes = [2, 12, 12], strides = [1, 1, 1]} : vector<2x14x12xf32> to vector<2x12x12xf32>
    %640 = vector.broadcast %638 : f32 to vector<2x12x12xf32>
    %641 = arith.mulf %639, %640 : vector<2x12x12xf32>
    %642 = arith.addf %637, %641 : vector<2x12x12xf32>
    %c40_59 = arith.constant 40 : index
    %643 = memref.load %arg3[%c40_59] : memref<81xf32, #tpu.memory_space<smem>>
    %644 = vector.extract_strided_slice %436 {offsets = [0, 1, 0], sizes = [2, 12, 12], strides = [1, 1, 1]} : vector<2x14x12xf32> to vector<2x12x12xf32>
    %645 = vector.broadcast %643 : f32 to vector<2x12x12xf32>
    %646 = arith.mulf %644, %645 : vector<2x12x12xf32>
    %647 = arith.addf %642, %646 : vector<2x12x12xf32>
    %c41_60 = arith.constant 41 : index
    %648 = memref.load %arg3[%c41_60] : memref<81xf32, #tpu.memory_space<smem>>
    %649 = vector.extract_strided_slice %437 {offsets = [0, 1, 0], sizes = [2, 12, 12], strides = [1, 1, 1]} : vector<2x14x12xf32> to vector<2x12x12xf32>
    %650 = vector.broadcast %648 : f32 to vector<2x12x12xf32>
    %651 = arith.mulf %649, %650 : vector<2x12x12xf32>
    %652 = arith.addf %647, %651 : vector<2x12x12xf32>
    %c42_61 = arith.constant 42 : index
    %653 = memref.load %arg3[%c42_61] : memref<81xf32, #tpu.memory_space<smem>>
    %654 = vector.extract_strided_slice %435 {offsets = [0, 2, 0], sizes = [2, 12, 12], strides = [1, 1, 1]} : vector<2x14x12xf32> to vector<2x12x12xf32>
    %655 = vector.broadcast %653 : f32 to vector<2x12x12xf32>
    %656 = arith.mulf %654, %655 : vector<2x12x12xf32>
    %657 = arith.addf %652, %656 : vector<2x12x12xf32>
    %c43_62 = arith.constant 43 : index
    %658 = memref.load %arg3[%c43_62] : memref<81xf32, #tpu.memory_space<smem>>
    %659 = vector.extract_strided_slice %436 {offsets = [0, 2, 0], sizes = [2, 12, 12], strides = [1, 1, 1]} : vector<2x14x12xf32> to vector<2x12x12xf32>
    %660 = vector.broadcast %658 : f32 to vector<2x12x12xf32>
    %661 = arith.mulf %659, %660 : vector<2x12x12xf32>
    %662 = arith.addf %657, %661 : vector<2x12x12xf32>
    %c44_63 = arith.constant 44 : index
    %663 = memref.load %arg3[%c44_63] : memref<81xf32, #tpu.memory_space<smem>>
    %664 = vector.extract_strided_slice %437 {offsets = [0, 2, 0], sizes = [2, 12, 12], strides = [1, 1, 1]} : vector<2x14x12xf32> to vector<2x12x12xf32>
    %665 = vector.broadcast %663 : f32 to vector<2x12x12xf32>
    %666 = arith.mulf %664, %665 : vector<2x12x12xf32>
    %667 = arith.addf %662, %666 : vector<2x12x12xf32>
    %c45_64 = arith.constant 45 : index
    %668 = memref.load %arg3[%c45_64] : memref<81xf32, #tpu.memory_space<smem>>
    %669 = vector.extract_strided_slice %438 {offsets = [0, 0, 0], sizes = [2, 12, 12], strides = [1, 1, 1]} : vector<2x14x12xf32> to vector<2x12x12xf32>
    %670 = vector.broadcast %668 : f32 to vector<2x12x12xf32>
    %671 = arith.mulf %669, %670 : vector<2x12x12xf32>
    %c46_65 = arith.constant 46 : index
    %672 = memref.load %arg3[%c46_65] : memref<81xf32, #tpu.memory_space<smem>>
    %673 = vector.extract_strided_slice %439 {offsets = [0, 0, 0], sizes = [2, 12, 12], strides = [1, 1, 1]} : vector<2x14x12xf32> to vector<2x12x12xf32>
    %674 = vector.broadcast %672 : f32 to vector<2x12x12xf32>
    %675 = arith.mulf %673, %674 : vector<2x12x12xf32>
    %676 = arith.addf %671, %675 : vector<2x12x12xf32>
    %c47_66 = arith.constant 47 : index
    %677 = memref.load %arg3[%c47_66] : memref<81xf32, #tpu.memory_space<smem>>
    %678 = vector.extract_strided_slice %440 {offsets = [0, 0, 0], sizes = [2, 12, 12], strides = [1, 1, 1]} : vector<2x14x12xf32> to vector<2x12x12xf32>
    %679 = vector.broadcast %677 : f32 to vector<2x12x12xf32>
    %680 = arith.mulf %678, %679 : vector<2x12x12xf32>
    %681 = arith.addf %676, %680 : vector<2x12x12xf32>
    %c48_67 = arith.constant 48 : index
    %682 = memref.load %arg3[%c48_67] : memref<81xf32, #tpu.memory_space<smem>>
    %683 = vector.extract_strided_slice %438 {offsets = [0, 1, 0], sizes = [2, 12, 12], strides = [1, 1, 1]} : vector<2x14x12xf32> to vector<2x12x12xf32>
    %684 = vector.broadcast %682 : f32 to vector<2x12x12xf32>
    %685 = arith.mulf %683, %684 : vector<2x12x12xf32>
    %686 = arith.addf %681, %685 : vector<2x12x12xf32>
    %c49_68 = arith.constant 49 : index
    %687 = memref.load %arg3[%c49_68] : memref<81xf32, #tpu.memory_space<smem>>
    %688 = vector.extract_strided_slice %439 {offsets = [0, 1, 0], sizes = [2, 12, 12], strides = [1, 1, 1]} : vector<2x14x12xf32> to vector<2x12x12xf32>
    %689 = vector.broadcast %687 : f32 to vector<2x12x12xf32>
    %690 = arith.mulf %688, %689 : vector<2x12x12xf32>
    %691 = arith.addf %686, %690 : vector<2x12x12xf32>
    %c50_69 = arith.constant 50 : index
    %692 = memref.load %arg3[%c50_69] : memref<81xf32, #tpu.memory_space<smem>>
    %693 = vector.extract_strided_slice %440 {offsets = [0, 1, 0], sizes = [2, 12, 12], strides = [1, 1, 1]} : vector<2x14x12xf32> to vector<2x12x12xf32>
    %694 = vector.broadcast %692 : f32 to vector<2x12x12xf32>
    %695 = arith.mulf %693, %694 : vector<2x12x12xf32>
    %696 = arith.addf %691, %695 : vector<2x12x12xf32>
    %c51_70 = arith.constant 51 : index
    %697 = memref.load %arg3[%c51_70] : memref<81xf32, #tpu.memory_space<smem>>
    %698 = vector.extract_strided_slice %438 {offsets = [0, 2, 0], sizes = [2, 12, 12], strides = [1, 1, 1]} : vector<2x14x12xf32> to vector<2x12x12xf32>
    %699 = vector.broadcast %697 : f32 to vector<2x12x12xf32>
    %700 = arith.mulf %698, %699 : vector<2x12x12xf32>
    %701 = arith.addf %696, %700 : vector<2x12x12xf32>
    %c52_71 = arith.constant 52 : index
    %702 = memref.load %arg3[%c52_71] : memref<81xf32, #tpu.memory_space<smem>>
    %703 = vector.extract_strided_slice %439 {offsets = [0, 2, 0], sizes = [2, 12, 12], strides = [1, 1, 1]} : vector<2x14x12xf32> to vector<2x12x12xf32>
    %704 = vector.broadcast %702 : f32 to vector<2x12x12xf32>
    %705 = arith.mulf %703, %704 : vector<2x12x12xf32>
    %706 = arith.addf %701, %705 : vector<2x12x12xf32>
    %c53_72 = arith.constant 53 : index
    %707 = memref.load %arg3[%c53_72] : memref<81xf32, #tpu.memory_space<smem>>
    %708 = vector.extract_strided_slice %440 {offsets = [0, 2, 0], sizes = [2, 12, 12], strides = [1, 1, 1]} : vector<2x14x12xf32> to vector<2x12x12xf32>
    %709 = vector.broadcast %707 : f32 to vector<2x12x12xf32>
    %710 = arith.mulf %708, %709 : vector<2x12x12xf32>
    %711 = arith.addf %706, %710 : vector<2x12x12xf32>
    %712 = arith.addf %623, %667 : vector<2x12x12xf32>
    %713 = arith.addf %712, %711 : vector<2x12x12xf32>
    %c1_73 = arith.constant 1 : index
    %714 = memref.load %arg4[%c1_73] : memref<3xf32, #tpu.memory_space<smem>>
    %715 = vector.broadcast %714 : f32 to vector<2x12x12xf32>
    %716 = arith.addf %713, %715 : vector<2x12x12xf32>
    %cst_74 = arith.constant 0.000000e+00 : f32
    %717 = vector.broadcast %cst_74 : f32 to vector<2x12x12xf32>
    %718 = arith.maximumf %716, %717 : vector<2x12x12xf32>
    %c54_75 = arith.constant 54 : index
    %719 = memref.load %arg3[%c54_75] : memref<81xf32, #tpu.memory_space<smem>>
    %720 = vector.extract_strided_slice %432 {offsets = [0, 0, 0], sizes = [2, 12, 12], strides = [1, 1, 1]} : vector<2x14x12xf32> to vector<2x12x12xf32>
    %721 = vector.broadcast %719 : f32 to vector<2x12x12xf32>
    %722 = arith.mulf %720, %721 : vector<2x12x12xf32>
    %c55_76 = arith.constant 55 : index
    %723 = memref.load %arg3[%c55_76] : memref<81xf32, #tpu.memory_space<smem>>
    %724 = vector.extract_strided_slice %433 {offsets = [0, 0, 0], sizes = [2, 12, 12], strides = [1, 1, 1]} : vector<2x14x12xf32> to vector<2x12x12xf32>
    %725 = vector.broadcast %723 : f32 to vector<2x12x12xf32>
    %726 = arith.mulf %724, %725 : vector<2x12x12xf32>
    %727 = arith.addf %722, %726 : vector<2x12x12xf32>
    %c56_77 = arith.constant 56 : index
    %728 = memref.load %arg3[%c56_77] : memref<81xf32, #tpu.memory_space<smem>>
    %729 = vector.extract_strided_slice %434 {offsets = [0, 0, 0], sizes = [2, 12, 12], strides = [1, 1, 1]} : vector<2x14x12xf32> to vector<2x12x12xf32>
    %730 = vector.broadcast %728 : f32 to vector<2x12x12xf32>
    %731 = arith.mulf %729, %730 : vector<2x12x12xf32>
    %732 = arith.addf %727, %731 : vector<2x12x12xf32>
    %c57_78 = arith.constant 57 : index
    %733 = memref.load %arg3[%c57_78] : memref<81xf32, #tpu.memory_space<smem>>
    %734 = vector.extract_strided_slice %432 {offsets = [0, 1, 0], sizes = [2, 12, 12], strides = [1, 1, 1]} : vector<2x14x12xf32> to vector<2x12x12xf32>
    %735 = vector.broadcast %733 : f32 to vector<2x12x12xf32>
    %736 = arith.mulf %734, %735 : vector<2x12x12xf32>
    %737 = arith.addf %732, %736 : vector<2x12x12xf32>
    %c58_79 = arith.constant 58 : index
    %738 = memref.load %arg3[%c58_79] : memref<81xf32, #tpu.memory_space<smem>>
    %739 = vector.extract_strided_slice %433 {offsets = [0, 1, 0], sizes = [2, 12, 12], strides = [1, 1, 1]} : vector<2x14x12xf32> to vector<2x12x12xf32>
    %740 = vector.broadcast %738 : f32 to vector<2x12x12xf32>
    %741 = arith.mulf %739, %740 : vector<2x12x12xf32>
    %742 = arith.addf %737, %741 : vector<2x12x12xf32>
    %c59_80 = arith.constant 59 : index
    %743 = memref.load %arg3[%c59_80] : memref<81xf32, #tpu.memory_space<smem>>
    %744 = vector.extract_strided_slice %434 {offsets = [0, 1, 0], sizes = [2, 12, 12], strides = [1, 1, 1]} : vector<2x14x12xf32> to vector<2x12x12xf32>
    %745 = vector.broadcast %743 : f32 to vector<2x12x12xf32>
    %746 = arith.mulf %744, %745 : vector<2x12x12xf32>
    %747 = arith.addf %742, %746 : vector<2x12x12xf32>
    %c60_81 = arith.constant 60 : index
    %748 = memref.load %arg3[%c60_81] : memref<81xf32, #tpu.memory_space<smem>>
    %749 = vector.extract_strided_slice %432 {offsets = [0, 2, 0], sizes = [2, 12, 12], strides = [1, 1, 1]} : vector<2x14x12xf32> to vector<2x12x12xf32>
    %750 = vector.broadcast %748 : f32 to vector<2x12x12xf32>
    %751 = arith.mulf %749, %750 : vector<2x12x12xf32>
    %752 = arith.addf %747, %751 : vector<2x12x12xf32>
    %c61_82 = arith.constant 61 : index
    %753 = memref.load %arg3[%c61_82] : memref<81xf32, #tpu.memory_space<smem>>
    %754 = vector.extract_strided_slice %433 {offsets = [0, 2, 0], sizes = [2, 12, 12], strides = [1, 1, 1]} : vector<2x14x12xf32> to vector<2x12x12xf32>
    %755 = vector.broadcast %753 : f32 to vector<2x12x12xf32>
    %756 = arith.mulf %754, %755 : vector<2x12x12xf32>
    %757 = arith.addf %752, %756 : vector<2x12x12xf32>
    %c62_83 = arith.constant 62 : index
    %758 = memref.load %arg3[%c62_83] : memref<81xf32, #tpu.memory_space<smem>>
    %759 = vector.extract_strided_slice %434 {offsets = [0, 2, 0], sizes = [2, 12, 12], strides = [1, 1, 1]} : vector<2x14x12xf32> to vector<2x12x12xf32>
    %760 = vector.broadcast %758 : f32 to vector<2x12x12xf32>
    %761 = arith.mulf %759, %760 : vector<2x12x12xf32>
    %762 = arith.addf %757, %761 : vector<2x12x12xf32>
    %c63_84 = arith.constant 63 : index
    %763 = memref.load %arg3[%c63_84] : memref<81xf32, #tpu.memory_space<smem>>
    %764 = vector.extract_strided_slice %435 {offsets = [0, 0, 0], sizes = [2, 12, 12], strides = [1, 1, 1]} : vector<2x14x12xf32> to vector<2x12x12xf32>
    %765 = vector.broadcast %763 : f32 to vector<2x12x12xf32>
    %766 = arith.mulf %764, %765 : vector<2x12x12xf32>
    %c64_85 = arith.constant 64 : index
    %767 = memref.load %arg3[%c64_85] : memref<81xf32, #tpu.memory_space<smem>>
    %768 = vector.extract_strided_slice %436 {offsets = [0, 0, 0], sizes = [2, 12, 12], strides = [1, 1, 1]} : vector<2x14x12xf32> to vector<2x12x12xf32>
    %769 = vector.broadcast %767 : f32 to vector<2x12x12xf32>
    %770 = arith.mulf %768, %769 : vector<2x12x12xf32>
    %771 = arith.addf %766, %770 : vector<2x12x12xf32>
    %c65_86 = arith.constant 65 : index
    %772 = memref.load %arg3[%c65_86] : memref<81xf32, #tpu.memory_space<smem>>
    %773 = vector.extract_strided_slice %437 {offsets = [0, 0, 0], sizes = [2, 12, 12], strides = [1, 1, 1]} : vector<2x14x12xf32> to vector<2x12x12xf32>
    %774 = vector.broadcast %772 : f32 to vector<2x12x12xf32>
    %775 = arith.mulf %773, %774 : vector<2x12x12xf32>
    %776 = arith.addf %771, %775 : vector<2x12x12xf32>
    %c66_87 = arith.constant 66 : index
    %777 = memref.load %arg3[%c66_87] : memref<81xf32, #tpu.memory_space<smem>>
    %778 = vector.extract_strided_slice %435 {offsets = [0, 1, 0], sizes = [2, 12, 12], strides = [1, 1, 1]} : vector<2x14x12xf32> to vector<2x12x12xf32>
    %779 = vector.broadcast %777 : f32 to vector<2x12x12xf32>
    %780 = arith.mulf %778, %779 : vector<2x12x12xf32>
    %781 = arith.addf %776, %780 : vector<2x12x12xf32>
    %c67_88 = arith.constant 67 : index
    %782 = memref.load %arg3[%c67_88] : memref<81xf32, #tpu.memory_space<smem>>
    %783 = vector.extract_strided_slice %436 {offsets = [0, 1, 0], sizes = [2, 12, 12], strides = [1, 1, 1]} : vector<2x14x12xf32> to vector<2x12x12xf32>
    %784 = vector.broadcast %782 : f32 to vector<2x12x12xf32>
    %785 = arith.mulf %783, %784 : vector<2x12x12xf32>
    %786 = arith.addf %781, %785 : vector<2x12x12xf32>
    %c68_89 = arith.constant 68 : index
    %787 = memref.load %arg3[%c68_89] : memref<81xf32, #tpu.memory_space<smem>>
    %788 = vector.extract_strided_slice %437 {offsets = [0, 1, 0], sizes = [2, 12, 12], strides = [1, 1, 1]} : vector<2x14x12xf32> to vector<2x12x12xf32>
    %789 = vector.broadcast %787 : f32 to vector<2x12x12xf32>
    %790 = arith.mulf %788, %789 : vector<2x12x12xf32>
    %791 = arith.addf %786, %790 : vector<2x12x12xf32>
    %c69_90 = arith.constant 69 : index
    %792 = memref.load %arg3[%c69_90] : memref<81xf32, #tpu.memory_space<smem>>
    %793 = vector.extract_strided_slice %435 {offsets = [0, 2, 0], sizes = [2, 12, 12], strides = [1, 1, 1]} : vector<2x14x12xf32> to vector<2x12x12xf32>
    %794 = vector.broadcast %792 : f32 to vector<2x12x12xf32>
    %795 = arith.mulf %793, %794 : vector<2x12x12xf32>
    %796 = arith.addf %791, %795 : vector<2x12x12xf32>
    %c70_91 = arith.constant 70 : index
    %797 = memref.load %arg3[%c70_91] : memref<81xf32, #tpu.memory_space<smem>>
    %798 = vector.extract_strided_slice %436 {offsets = [0, 2, 0], sizes = [2, 12, 12], strides = [1, 1, 1]} : vector<2x14x12xf32> to vector<2x12x12xf32>
    %799 = vector.broadcast %797 : f32 to vector<2x12x12xf32>
    %800 = arith.mulf %798, %799 : vector<2x12x12xf32>
    %801 = arith.addf %796, %800 : vector<2x12x12xf32>
    %c71_92 = arith.constant 71 : index
    %802 = memref.load %arg3[%c71_92] : memref<81xf32, #tpu.memory_space<smem>>
    %803 = vector.extract_strided_slice %437 {offsets = [0, 2, 0], sizes = [2, 12, 12], strides = [1, 1, 1]} : vector<2x14x12xf32> to vector<2x12x12xf32>
    %804 = vector.broadcast %802 : f32 to vector<2x12x12xf32>
    %805 = arith.mulf %803, %804 : vector<2x12x12xf32>
    %806 = arith.addf %801, %805 : vector<2x12x12xf32>
    %c72_93 = arith.constant 72 : index
    %807 = memref.load %arg3[%c72_93] : memref<81xf32, #tpu.memory_space<smem>>
    %808 = vector.extract_strided_slice %438 {offsets = [0, 0, 0], sizes = [2, 12, 12], strides = [1, 1, 1]} : vector<2x14x12xf32> to vector<2x12x12xf32>
    %809 = vector.broadcast %807 : f32 to vector<2x12x12xf32>
    %810 = arith.mulf %808, %809 : vector<2x12x12xf32>
    %c73_94 = arith.constant 73 : index
    %811 = memref.load %arg3[%c73_94] : memref<81xf32, #tpu.memory_space<smem>>
    %812 = vector.extract_strided_slice %439 {offsets = [0, 0, 0], sizes = [2, 12, 12], strides = [1, 1, 1]} : vector<2x14x12xf32> to vector<2x12x12xf32>
    %813 = vector.broadcast %811 : f32 to vector<2x12x12xf32>
    %814 = arith.mulf %812, %813 : vector<2x12x12xf32>
    %815 = arith.addf %810, %814 : vector<2x12x12xf32>
    %c74_95 = arith.constant 74 : index
    %816 = memref.load %arg3[%c74_95] : memref<81xf32, #tpu.memory_space<smem>>
    %817 = vector.extract_strided_slice %440 {offsets = [0, 0, 0], sizes = [2, 12, 12], strides = [1, 1, 1]} : vector<2x14x12xf32> to vector<2x12x12xf32>
    %818 = vector.broadcast %816 : f32 to vector<2x12x12xf32>
    %819 = arith.mulf %817, %818 : vector<2x12x12xf32>
    %820 = arith.addf %815, %819 : vector<2x12x12xf32>
    %c75_96 = arith.constant 75 : index
    %821 = memref.load %arg3[%c75_96] : memref<81xf32, #tpu.memory_space<smem>>
    %822 = vector.extract_strided_slice %438 {offsets = [0, 1, 0], sizes = [2, 12, 12], strides = [1, 1, 1]} : vector<2x14x12xf32> to vector<2x12x12xf32>
    %823 = vector.broadcast %821 : f32 to vector<2x12x12xf32>
    %824 = arith.mulf %822, %823 : vector<2x12x12xf32>
    %825 = arith.addf %820, %824 : vector<2x12x12xf32>
    %c76_97 = arith.constant 76 : index
    %826 = memref.load %arg3[%c76_97] : memref<81xf32, #tpu.memory_space<smem>>
    %827 = vector.extract_strided_slice %439 {offsets = [0, 1, 0], sizes = [2, 12, 12], strides = [1, 1, 1]} : vector<2x14x12xf32> to vector<2x12x12xf32>
    %828 = vector.broadcast %826 : f32 to vector<2x12x12xf32>
    %829 = arith.mulf %827, %828 : vector<2x12x12xf32>
    %830 = arith.addf %825, %829 : vector<2x12x12xf32>
    %c77_98 = arith.constant 77 : index
    %831 = memref.load %arg3[%c77_98] : memref<81xf32, #tpu.memory_space<smem>>
    %832 = vector.extract_strided_slice %440 {offsets = [0, 1, 0], sizes = [2, 12, 12], strides = [1, 1, 1]} : vector<2x14x12xf32> to vector<2x12x12xf32>
    %833 = vector.broadcast %831 : f32 to vector<2x12x12xf32>
    %834 = arith.mulf %832, %833 : vector<2x12x12xf32>
    %835 = arith.addf %830, %834 : vector<2x12x12xf32>
    %c78_99 = arith.constant 78 : index
    %836 = memref.load %arg3[%c78_99] : memref<81xf32, #tpu.memory_space<smem>>
    %837 = vector.extract_strided_slice %438 {offsets = [0, 2, 0], sizes = [2, 12, 12], strides = [1, 1, 1]} : vector<2x14x12xf32> to vector<2x12x12xf32>
    %838 = vector.broadcast %836 : f32 to vector<2x12x12xf32>
    %839 = arith.mulf %837, %838 : vector<2x12x12xf32>
    %840 = arith.addf %835, %839 : vector<2x12x12xf32>
    %c79_100 = arith.constant 79 : index
    %841 = memref.load %arg3[%c79_100] : memref<81xf32, #tpu.memory_space<smem>>
    %842 = vector.extract_strided_slice %439 {offsets = [0, 2, 0], sizes = [2, 12, 12], strides = [1, 1, 1]} : vector<2x14x12xf32> to vector<2x12x12xf32>
    %843 = vector.broadcast %841 : f32 to vector<2x12x12xf32>
    %844 = arith.mulf %842, %843 : vector<2x12x12xf32>
    %845 = arith.addf %840, %844 : vector<2x12x12xf32>
    %c80_101 = arith.constant 80 : index
    %846 = memref.load %arg3[%c80_101] : memref<81xf32, #tpu.memory_space<smem>>
    %847 = vector.extract_strided_slice %440 {offsets = [0, 2, 0], sizes = [2, 12, 12], strides = [1, 1, 1]} : vector<2x14x12xf32> to vector<2x12x12xf32>
    %848 = vector.broadcast %846 : f32 to vector<2x12x12xf32>
    %849 = arith.mulf %847, %848 : vector<2x12x12xf32>
    %850 = arith.addf %845, %849 : vector<2x12x12xf32>
    %851 = arith.addf %762, %806 : vector<2x12x12xf32>
    %852 = arith.addf %851, %850 : vector<2x12x12xf32>
    %c2_102 = arith.constant 2 : index
    %853 = memref.load %arg4[%c2_102] : memref<3xf32, #tpu.memory_space<smem>>
    %854 = vector.broadcast %853 : f32 to vector<2x12x12xf32>
    %855 = arith.addf %852, %854 : vector<2x12x12xf32>
    %cst_103 = arith.constant 0.000000e+00 : f32
    %856 = vector.broadcast %cst_103 : f32 to vector<2x12x12xf32>
    %857 = arith.maximumf %855, %856 : vector<2x12x12xf32>
    %858 = vector.shape_cast %579 : vector<2x12x12xf32> to vector<1x2x12x12xf32>
    %cst_104 = arith.constant dense<0.000000e+00> : vector<1xf32>
    %859 = vector.multi_reduction <add>, %858, %cst_104 [1, 2, 3] : vector<1x2x12x12xf32> to vector<1xf32>
    %860 = vector.shape_cast %859 : vector<1xf32> to vector<1x1x1x1xf32>
    %861 = vector.extract %860[0, 0, 0, 0] : f32 from vector<1x1x1x1xf32>
    %862 = arith.mulf %579, %579 : vector<2x12x12xf32>
    %863 = vector.shape_cast %862 : vector<2x12x12xf32> to vector<1x2x12x12xf32>
    %cst_105 = arith.constant dense<0.000000e+00> : vector<1xf32>
    %864 = vector.multi_reduction <add>, %863, %cst_105 [1, 2, 3] : vector<1x2x12x12xf32> to vector<1xf32>
    %865 = vector.shape_cast %864 : vector<1xf32> to vector<1x1x1x1xf32>
    %866 = vector.extract %865[0, 0, 0, 0] : f32 from vector<1x1x1x1xf32>
    %cst_106 = arith.constant 0.00347222225 : f32
    %867 = arith.mulf %861, %cst_106 : f32
    %cst_107 = arith.constant 0.00347222225 : f32
    %868 = arith.mulf %866, %cst_107 : f32
    %869 = arith.mulf %867, %867 : f32
    %870 = arith.subf %868, %869 : f32
    %c0_108 = arith.constant 0 : index
    %871 = memref.load %arg5[%c0_108] : memref<3xf32, #tpu.memory_space<smem>>
    %cst_109 = arith.constant 9.99999974E-6 : f32
    %872 = arith.addf %870, %cst_109 : f32
    %873 = math.rsqrt %872 : f32
    %874 = arith.mulf %871, %873 : f32
    %c0_110 = arith.constant 0 : index
    %875 = memref.load %arg6[%c0_110] : memref<3xf32, #tpu.memory_space<smem>>
    %876 = arith.mulf %867, %874 : f32
    %877 = arith.subf %875, %876 : f32
    %878 = vector.broadcast %874 : f32 to vector<2x12x12xf32>
    %879 = arith.mulf %579, %878 : vector<2x12x12xf32>
    %880 = vector.broadcast %877 : f32 to vector<2x12x12xf32>
    %881 = arith.addf %879, %880 : vector<2x12x12xf32>
    %c0_111 = arith.constant 0 : index
    %c0_112 = arith.constant 0 : index
    %c0_113 = arith.constant 0 : index
    %c0_114 = arith.constant 0 : index
    %882 = vector.load %arg7[%c0_111, %c0_112, %c0_113, %c0_114] : memref<2x3x12x12xf32, #tpu.memory_space<vmem>>, vector<2x1x12x12xf32>
    %883 = vector.shape_cast %882 : vector<2x1x12x12xf32> to vector<2x12x12xf32>
    %884 = vector.shape_cast %881 : vector<2x12x12xf32> to vector<2x1x12x12xf32>
    tpu.vector_store %arg7[%c0_111, %c0_112, %c0_113, %c0_114], %884 {strides = array<i32>} : memref<2x3x12x12xf32, #tpu.memory_space<vmem>>, vector<2x1x12x12xf32>,
    %885 = vector.shape_cast %718 : vector<2x12x12xf32> to vector<1x2x12x12xf32>
    %cst_115 = arith.constant dense<0.000000e+00> : vector<1xf32>
    %886 = vector.multi_reduction <add>, %885, %cst_115 [1, 2, 3] : vector<1x2x12x12xf32> to vector<1xf32>
    %887 = vector.shape_cast %886 : vector<1xf32> to vector<1x1x1x1xf32>
    %888 = vector.extract %887[0, 0, 0, 0] : f32 from vector<1x1x1x1xf32>
    %889 = arith.mulf %718, %718 : vector<2x12x12xf32>
    %890 = vector.shape_cast %889 : vector<2x12x12xf32> to vector<1x2x12x12xf32>
    %cst_116 = arith.constant dense<0.000000e+00> : vector<1xf32>
    %891 = vector.multi_reduction <add>, %890, %cst_116 [1, 2, 3] : vector<1x2x12x12xf32> to vector<1xf32>
    %892 = vector.shape_cast %891 : vector<1xf32> to vector<1x1x1x1xf32>
    %893 = vector.extract %892[0, 0, 0, 0] : f32 from vector<1x1x1x1xf32>
    %cst_117 = arith.constant 0.00347222225 : f32
    %894 = arith.mulf %888, %cst_117 : f32
    %cst_118 = arith.constant 0.00347222225 : f32
    %895 = arith.mulf %893, %cst_118 : f32
    %896 = arith.mulf %894, %894 : f32
    %897 = arith.subf %895, %896 : f32
    %c1_119 = arith.constant 1 : index
    %898 = memref.load %arg5[%c1_119] : memref<3xf32, #tpu.memory_space<smem>>
    %cst_120 = arith.constant 9.99999974E-6 : f32
    %899 = arith.addf %897, %cst_120 : f32
    %900 = math.rsqrt %899 : f32
    %901 = arith.mulf %898, %900 : f32
    %c1_121 = arith.constant 1 : index
    %902 = memref.load %arg6[%c1_121] : memref<3xf32, #tpu.memory_space<smem>>
    %903 = arith.mulf %894, %901 : f32
    %904 = arith.subf %902, %903 : f32
    %905 = vector.broadcast %901 : f32 to vector<2x12x12xf32>
    %906 = arith.mulf %718, %905 : vector<2x12x12xf32>
    %907 = vector.broadcast %904 : f32 to vector<2x12x12xf32>
    %908 = arith.addf %906, %907 : vector<2x12x12xf32>
    %c0_122 = arith.constant 0 : index
    %c1_123 = arith.constant 1 : index
    %c0_124 = arith.constant 0 : index
    %c0_125 = arith.constant 0 : index
    %909 = vector.load %arg7[%c0_122, %c1_123, %c0_124, %c0_125] : memref<2x3x12x12xf32, #tpu.memory_space<vmem>>, vector<2x1x12x12xf32>
    %910 = vector.shape_cast %909 : vector<2x1x12x12xf32> to vector<2x12x12xf32>
    %911 = vector.shape_cast %908 : vector<2x12x12xf32> to vector<2x1x12x12xf32>
    tpu.vector_store %arg7[%c0_122, %c1_123, %c0_124, %c0_125], %911 {strides = array<i32>} : memref<2x3x12x12xf32, #tpu.memory_space<vmem>>, vector<2x1x12x12xf32>,
    %912 = vector.shape_cast %857 : vector<2x12x12xf32> to vector<1x2x12x12xf32>
    %cst_126 = arith.constant dense<0.000000e+00> : vector<1xf32>
    %913 = vector.multi_reduction <add>, %912, %cst_126 [1, 2, 3] : vector<1x2x12x12xf32> to vector<1xf32>
    %914 = vector.shape_cast %913 : vector<1xf32> to vector<1x1x1x1xf32>
    %915 = vector.extract %914[0, 0, 0, 0] : f32 from vector<1x1x1x1xf32>
    %916 = arith.mulf %857, %857 : vector<2x12x12xf32>
    %917 = vector.shape_cast %916 : vector<2x12x12xf32> to vector<1x2x12x12xf32>
    %cst_127 = arith.constant dense<0.000000e+00> : vector<1xf32>
    %918 = vector.multi_reduction <add>, %917, %cst_127 [1, 2, 3] : vector<1x2x12x12xf32> to vector<1xf32>
    %919 = vector.shape_cast %918 : vector<1xf32> to vector<1x1x1x1xf32>
    %920 = vector.extract %919[0, 0, 0, 0] : f32 from vector<1x1x1x1xf32>
    %cst_128 = arith.constant 0.00347222225 : f32
    %921 = arith.mulf %915, %cst_128 : f32
    %cst_129 = arith.constant 0.00347222225 : f32
    %922 = arith.mulf %920, %cst_129 : f32
    %923 = arith.mulf %921, %921 : f32
    %924 = arith.subf %922, %923 : f32
    %c2_130 = arith.constant 2 : index
    %925 = memref.load %arg5[%c2_130] : memref<3xf32, #tpu.memory_space<smem>>
    %cst_131 = arith.constant 9.99999974E-6 : f32
    %926 = arith.addf %924, %cst_131 : f32
    %927 = math.rsqrt %926 : f32
    %928 = arith.mulf %925, %927 : f32
    %c2_132 = arith.constant 2 : index
    %929 = memref.load %arg6[%c2_132] : memref<3xf32, #tpu.memory_space<smem>>
    %930 = arith.mulf %921, %928 : f32
    %931 = arith.subf %929, %930 : f32
    %932 = vector.broadcast %928 : f32 to vector<2x12x12xf32>
    %933 = arith.mulf %857, %932 : vector<2x12x12xf32>
    %934 = vector.broadcast %931 : f32 to vector<2x12x12xf32>
    %935 = arith.addf %933, %934 : vector<2x12x12xf32>
    %c0_133 = arith.constant 0 : index
    %c2_134 = arith.constant 2 : index
    %c0_135 = arith.constant 0 : index
    %c0_136 = arith.constant 0 : index
    %936 = vector.load %arg7[%c0_133, %c2_134, %c0_135, %c0_136] : memref<2x3x12x12xf32, #tpu.memory_space<vmem>>, vector<2x1x12x12xf32>
    %937 = vector.shape_cast %936 : vector<2x1x12x12xf32> to vector<2x12x12xf32>
    %938 = vector.shape_cast %935 : vector<2x12x12xf32> to vector<2x1x12x12xf32>
    tpu.vector_store %arg7[%c0_133, %c2_134, %c0_135, %c0_136], %938 {strides = array<i32>} : memref<2x3x12x12xf32, #tpu.memory_space<vmem>>, vector<2x1x12x12xf32>,
    return
  }
}

</mosaic_0001>

<llo_original>
// kernel: model_forward.1
$region0: #{model_forward.1}
  #allocation0 [shape = 'u32[]', space=smem, size = 0x4, offset = 0x4, fixed_abs, tag = 'smem constant byte address 0x4 - core index']
  #allocation1 [shape = 'u32[144,128]{1,0:T(1,128)}', space=vmem, size = 0x12000, scoped, tag = 'internal scratch']
  %s0 = inlined_call_operand.hbm [shape: f32[2,3,16,16], index: 0, kind: input, shape index: {}]
  %s1 = inlined_call_operand.vmem [shape: f32[81], index: 1, kind: input, shape index: {}]
  %s2 = inlined_call_operand.vmem [shape: f32[3], index: 2, kind: input, shape index: {}]
  %s3 = inlined_call_operand.vmem [shape: f32[81], index: 3, kind: input, shape index: {}]
  %s4 = inlined_call_operand.vmem [shape: f32[3], index: 4, kind: input, shape index: {}]
  %s5 = inlined_call_operand.vmem [shape: f32[3], index: 5, kind: input, shape index: {}]
  %s6 = inlined_call_operand.vmem [shape: f32[3], index: 6, kind: input, shape index: {}]
  %s7 = inlined_call_operand.vmem [shape: f32[2,3,12,12], index: 7, kind: output, shape index: {}]
  %s8 = sld [smem:[#allocation0]]
  $region66: #{model_forward.1} parent=0
    _
  %s10 = ssub.s32 1, %s8
  %s11 = scalar_select 0, %s10, %s8
  $region1: #{model_forward.1} parent=0
    #allocation2 [shape = 'u8[49152]{0}', space=vmem, size = 0xc000, scoped, tag = 'input window, operand 0, single buffered']
    #allocation3 [shape = 's32[1]{0}', space=sflag, size = 0x4, scoped, tag = 'scoped memory for model_forward.1']
    #allocation4 [shape = 's32[1]{0}', space=sflag, size = 0x4, scoped, tag = 'scoped memory for model_forward.1']
    #allocation5 [shape = 'u8[512]{0}', space=smem, size = 0x200, scoped, tag = 'input window, operand 1, single buffered']
    #allocation6 [shape = 'u8[512]{0}', space=smem, size = 0x200, scoped, tag = 'input window, operand 2, single buffered']
    #allocation7 [shape = 's32[1]{0}', space=sflag, size = 0x4, scoped, tag = 'scoped memory for model_forward.1']
    #allocation8 [shape = 'u8[512]{0}', space=smem, size = 0x200, scoped, tag = 'input window, operand 3, single buffered']
    #allocation9 [shape = 'u8[512]{0}', space=smem, size = 0x200, scoped, tag = 'input window, operand 4, single buffered']
    #allocation10 [shape = 's32[1]{0}', space=sflag, size = 0x4, scoped, tag = 'scoped memory for model_forward.1']
    #allocation11 [shape = 'u8[512]{0}', space=smem, size = 0x200, scoped, tag = 'input window, operand 5, single buffered']
    #allocation12 [shape = 'u8[512]{0}', space=smem, size = 0x200, scoped, tag = 'input window, operand 6, single buffered']
    #allocation13 [shape = 's32[1]{0}', space=sflag, size = 0x4, scoped, tag = 'scoped memory for model_forward.1']
    %12 = vsyncpa [#allocation3], 0
    %13 = vsyncpa [#allocation4], 0
    %14 = vsyncpa [#allocation7], 0
    %15 = vsyncpa [#allocation10], 0
    %16 = vsyncpa [#allocation13], 0
    // Predicated region
    $region2: #{model_forward.1} parent=1 // pred_check
      _
    $region3: #{model_forward.1} parent=1 // pred_check_branch
      %18 = sbr.rel (0) target = $region5
    $region4: #{model_forward.1} parent=1 // pred_region
      %s20 = ssub.s32 1536, 1536
      %21 = vsyncadd [#allocation3], %s20
      %s22 = sshll.u32 [#allocation2], 4
      %s23 = int_to_ptr.vmem [resolvable:$true] %s22
      %28 = dma.hbm_to_vmem [thread:$0]  %s0, 1536, %s23, [#allocation3], 128, 128, 8
    $region5: #{model_forward.1} parent=1 // pred_fallthru
      _
    // Predicated region
    $region6: #{model_forward.1} parent=1 // pred_check
      _
    $region7: #{model_forward.1} parent=1 // pred_check_branch
      %30 = sbr.rel (0) target = $region9
    $region8: #{model_forward.1} parent=1 // pred_region
      %s32 = ssub.s32 16, 16
      %33 = vsyncadd [#allocation4], %s32
      %s35 = sshll.u32 %s1, 4
      %s36 = int_to_ptr.vmem [resolvable:$true] %s35
      %38 = dma.vmem_to_smem %s36, 16, [#allocation5], [#allocation4]
    $region9: #{model_forward.1} parent=1 // pred_fallthru
      _
    // Predicated region
    $region10: #{model_forward.1} parent=1 // pred_check
      _
    $region11: #{model_forward.1} parent=1 // pred_check_branch
      %40 = sbr.rel (0) target = $region13
    $region12: #{model_forward.1} parent=1 // pred_region
      %s42 = ssub.s32 16, 16
      %43 = vsyncadd [#allocation7], %s42
      %s45 = sshll.u32 %s2, 4
      %s46 = int_to_ptr.vmem [resolvable:$true] %s45
      %48 = dma.vmem_to_smem %s46, 16, [#allocation6], [#allocation7]
    $region13: #{model_forward.1} parent=1 // pred_fallthru
      _
    // Predicated region
    $region14: #{model_forward.1} parent=1 // pred_check
      _
    $region15: #{model_forward.1} parent=1 // pred_check_branch
      %50 = sbr.rel (0) target = $region17
    $region16: #{model_forward.1} parent=1 // pred_region
      %s52 = ssub.s32 16, 16
      %53 = vsyncadd [#allocation7], %s52
      %s55 = sshll.u32 %s3, 4
      %s56 = int_to_ptr.vmem [resolvable:$true] %s55
      %58 = dma.vmem_to_smem %s56, 16, [#allocation8], [#allocation7]
    $region17: #{model_forward.1} parent=1 // pred_fallthru
      _
    // Predicated region
    $region18: #{model_forward.1} parent=1 // pred_check
      _
    $region19: #{model_forward.1} parent=1 // pred_check_branch
      %60 = sbr.rel (0) target = $region21
    $region20: #{model_forward.1} parent=1 // pred_region
      %s62 = ssub.s32 16, 16
      %63 = vsyncadd [#allocation10], %s62
      %s65 = sshll.u32 %s4, 4
      %s66 = int_to_ptr.vmem [resolvable:$true] %s65
      %68 = dma.vmem_to_smem %s66, 16, [#allocation9], [#allocation10]
    $region21: #{model_forward.1} parent=1 // pred_fallthru
      _
    // Predicated region
    $region22: #{model_forward.1} parent=1 // pred_check
      _
    $region23: #{model_forward.1} parent=1 // pred_check_branch
      %70 = sbr.rel (0) target = $region25
    $region24: #{model_forward.1} parent=1 // pred_region
      %s72 = ssub.s32 16, 16
      %73 = vsyncadd [#allocation10], %s72
      %s75 = sshll.u32 %s5, 4
      %s76 = int_to_ptr.vmem [resolvable:$true] %s75
      %78 = dma.vmem_to_smem %s76, 16, [#allocation11], [#allocation10]
    $region25: #{model_forward.1} parent=1 // pred_fallthru
      _
    // Predicated region
    $region26: #{model_forward.1} parent=1 // pred_check
      _
    $region27: #{model_forward.1} parent=1 // pred_check_branch
      %80 = sbr.rel (0) target = $region29
    $region28: #{model_forward.1} parent=1 // pred_region
      %s82 = ssub.s32 16, 16
      %83 = vsyncadd [#allocation13], %s82
      %s85 = sshll.u32 %s6, 4
      %s86 = int_to_ptr.vmem [resolvable:$true] %s85
      %88 = dma.vmem_to_smem %s86, 16, [#allocation12], [#allocation13]
    $region29: #{model_forward.1} parent=1 // pred_fallthru
      _
    // Predicated region
    $region30: #{model_forward.1} parent=1 // pred_check
      _
    $region31: #{model_forward.1} parent=1 // pred_check_branch
      %90 = sbr.rel (0) target = $region33
    $region32: #{model_forward.1} parent=1 // pred_region
      %91 = dma.done [#allocation3], 1536
    $region33: #{model_forward.1} parent=1 // pred_fallthru
      _
    // Predicated region
    $region34: #{model_forward.1} parent=1 // pred_check
      _
    $region35: #{model_forward.1} parent=1 // pred_check_branch
      %93 = sbr.rel (0) target = $region37
    $region36: #{model_forward.1} parent=1 // pred_region
      %94 = dma.done [#allocation4], 16
    $region37: #{model_forward.1} parent=1 // pred_fallthru
      _
    // Predicated region
    $region38: #{model_forward.1} parent=1 // pred_check
      _
    $region39: #{model_forward.1} parent=1 // pred_check_branch
      %96 = sbr.rel (0) target = $region41
    $region40: #{model_forward.1} parent=1 // pred_region
      %97 = dma.done [#allocation7], 16
    $region41: #{model_forward.1} parent=1 // pred_fallthru
      _
    // Predicated region
    $region42: #{model_forward.1} parent=1 // pred_check
      _
    $region43: #{model_forward.1} parent=1 // pred_check_branch
      %99 = sbr.rel (0) target = $region45
    $region44: #{model_forward.1} parent=1 // pred_region
      %100 = dma.done [#allocation7], 16
    $region45: #{model_forward.1} parent=1 // pred_fallthru
      _
    // Predicated region
    $region46: #{model_forward.1} parent=1 // pred_check
      _
    $region47: #{model_forward.1} parent=1 // pred_check_branch
      %102 = sbr.rel (0) target = $region49
    $region48: #{model_forward.1} parent=1 // pred_region
      %103 = dma.done [#allocation10], 16
    $region49: #{model_forward.1} parent=1 // pred_fallthru
      _
    // Predicated region
    $region50: #{model_forward.1} parent=1 // pred_check
      _
    $region51: #{model_forward.1} parent=1 // pred_check_branch
      %105 = sbr.rel (0) target = $region53
    $region52: #{model_forward.1} parent=1 // pred_region
      %106 = dma.done [#allocation10], 16
    $region53: #{model_forward.1} parent=1 // pred_fallthru
      _
    // Predicated region
    $region54: #{model_forward.1} parent=1 // pred_check
      _
    $region55: #{model_forward.1} parent=1 // pred_check_branch
      %108 = sbr.rel (0) target = $region57
    $region56: #{model_forward.1} parent=1 // pred_region
      %109 = dma.done [#allocation13], 16
    $region57: #{model_forward.1} parent=1 // pred_fallthru
      _
    %110 = sfence
    %v111 = vld [vmem:[#allocation2] sm:$0xff]
    %v112 = vld [vmem:[#allocation2 + $0x8] sm:$0xff]
    %v113 = vld [vmem:[#allocation2 + $0x30] sm:$0xff]
    %v114 = vld [vmem:[#allocation2 + $0x38] sm:$0xff]
    %s115 = scalar_lea.vmem [#allocation2], 16
    %v116 = vld [vmem:[%s115] sm:$0xff]
    %v117 = vld [vmem:[%s115 + $0x8] sm:$0xff]
    %v118 = vld [vmem:[%s115 + $0x30] sm:$0xff]
    %v119 = vld [vmem:[%s115 + $0x38] sm:$0xff]
    %s120 = scalar_lea.vmem [#allocation2], 32
    %v121 = vld [vmem:[%s120] sm:$0xff]
    %v122 = vld [vmem:[%s120 + $0x8] sm:$0xff]
    %v123 = vld [vmem:[%s120 + $0x30] sm:$0xff]
    %v124 = vld [vmem:[%s120 + $0x38] sm:$0xff]
    %s125 = sld [smem:[#allocation5]]
    %v126 = vstv %s125
    %v127 = vmul.f32 %v111, %v126
    %v128 = vmul.f32 %v112, %v126
    %v129 = vmul.f32 %v113, %v126
    %v130 = vmul.f32 %v114, %v126
    %s131 = sld [smem:[#allocation5 + $0x1]]
    %v132 = vstv %s131
    %v133 = vmul.f32 %v111, %v132
    %v134 = vmul.f32 %v112, %v132
    %v135 = vmul.f32 %v113, %v132
    %v136 = vmul.f32 %v114, %v132
    %141 = vrot.lane.b32.xlu0 %v133, 127
    %v142 = vpop.permute.xlu0 %141
    %143 = vrot.lane.b32.xlu0 %v134, 127
    %v144 = vpop.permute.xlu0 %143
    %145 = vrot.lane.b32.xlu0 %v135, 127
    %v146 = vpop.permute.xlu0 %145
    %147 = vrot.lane.b32.xlu0 %v136, 127
    %v148 = vpop.permute.xlu0 %147
    %v153 = vadd.f32 %v127, %v142
    %v154 = vadd.f32 %v128, %v144
    %v155 = vadd.f32 %v129, %v146
    %v156 = vadd.f32 %v130, %v148
    %s157 = sld [smem:[#allocation5 + $0x2]]
    %v158 = vstv %s157
    %v159 = vmul.f32 %v111, %v158
    %v160 = vmul.f32 %v112, %v158
    %v161 = vmul.f32 %v113, %v158
    %v162 = vmul.f32 %v114, %v158
    %167 = vrot.lane.b32.xlu0 %v159, 126
    %v168 = vpop.permute.xlu0 %167
    %169 = vrot.lane.b32.xlu0 %v160, 126
    %v170 = vpop.permute.xlu0 %169
    %171 = vrot.lane.b32.xlu0 %v161, 126
    %v172 = vpop.permute.xlu0 %171
    %173 = vrot.lane.b32.xlu0 %v162, 126
    %v174 = vpop.permute.xlu0 %173
    %v179 = vadd.f32 %v153, %v168
    %v180 = vadd.f32 %v154, %v170
    %v181 = vadd.f32 %v155, %v172
    %v182 = vadd.f32 %v156, %v174
    %s183 = sld [smem:[#allocation5 + $0x3]]
    %v184 = vstv %s183
    %v185 = vmul.f32 %v111, %v184
    %v186 = vmul.f32 %v112, %v184
    %v187 = vmul.f32 %v113, %v184
    %v188 = vmul.f32 %v114, %v184
    %vm193 = vcmask 1046528
    %v194 = vrot.slane %v185, 1
    %v195 = vrot.slane %v186, 1
    %v196 = vsel %vm193, %v194, %v195
    %v197 = vrot.slane %v187, 1
    %v198 = vrot.slane %v188, 1
    %v199 = vsel %vm193, %v197, %v198
    %v204 = vadd.f32 %v179, %v196
    %v205 = vadd.f32 %v180, %v195
    %v206 = vadd.f32 %v181, %v199
    %v207 = vadd.f32 %v182, %v198
    %s208 = sld [smem:[#allocation5 + $0x4]]
    %v209 = vstv %s208
    %v210 = vmul.f32 %v111, %v209
    %v211 = vmul.f32 %v112, %v209
    %v212 = vmul.f32 %v113, %v209
    %v213 = vmul.f32 %v114, %v209
    %v218 = vrot.slane %v210, 1
    %v219 = vrot.slane %v211, 1
    %v220 = vsel %vm193, %v218, %v219
    %v221 = vrot.slane %v212, 1
    %v222 = vrot.slane %v213, 1
    %v223 = vsel %vm193, %v221, %v222
    %224 = vrot.lane.b32.xlu0 %v220, 127
    %v225 = vpop.permute.xlu0 %224
    %226 = vrot.lane.b32.xlu0 %v219, 127
    %v227 = vpop.permute.xlu0 %226
    %228 = vrot.lane.b32.xlu0 %v223, 127
    %v229 = vpop.permute.xlu0 %228
    %230 = vrot.lane.b32.xlu0 %v222, 127
    %v231 = vpop.permute.xlu0 %230
    %v236 = vadd.f32 %v204, %v225
    %v237 = vadd.f32 %v205, %v227
    %v238 = vadd.f32 %v206, %v229
    %v239 = vadd.f32 %v207, %v231
    %s240 = sld [smem:[#allocation5 + $0x5]]
    %v241 = vstv %s240
    %v242 = vmul.f32 %v111, %v241
    %v243 = vmul.f32 %v112, %v241
    %v244 = vmul.f32 %v113, %v241
    %v245 = vmul.f32 %v114, %v241
    %v250 = vrot.slane %v242, 1
    %v251 = vrot.slane %v243, 1
    %v252 = vsel %vm193, %v250, %v251
    %v253 = vrot.slane %v244, 1
    %v254 = vrot.slane %v245, 1
    %v255 = vsel %vm193, %v253, %v254
    %256 = vrot.lane.b32.xlu0 %v252, 126
    %v257 = vpop.permute.xlu0 %256
    %258 = vrot.lane.b32.xlu0 %v251, 126
    %v259 = vpop.permute.xlu0 %258
    %260 = vrot.lane.b32.xlu0 %v255, 126
    %v261 = vpop.permute.xlu0 %260
    %262 = vrot.lane.b32.xlu0 %v254, 126
    %v263 = vpop.permute.xlu0 %262
    %v268 = vadd.f32 %v236, %v257
    %v269 = vadd.f32 %v237, %v259
    %v270 = vadd.f32 %v238, %v261
    %v271 = vadd.f32 %v239, %v263
    %s272 = sld [smem:[#allocation5 + $0x6]]
    %v273 = vstv %s272
    %v274 = vmul.f32 %v111, %v273
    %v275 = vmul.f32 %v112, %v273
    %v276 = vmul.f32 %v113, %v273
    %v277 = vmul.f32 %v114, %v273
    %vm282 = vcmask 1045504
    %v283 = vrot.slane %v274, 2
    %v284 = vrot.slane %v275, 2
    %v285 = vsel %vm282, %v283, %v284
    %v286 = vrot.slane %v276, 2
    %v287 = vrot.slane %v277, 2
    %v288 = vsel %vm282, %v286, %v287
    %v293 = vadd.f32 %v268, %v285
    %v294 = vadd.f32 %v269, %v284
    %v295 = vadd.f32 %v270, %v288
    %v296 = vadd.f32 %v271, %v287
    %s297 = sld [smem:[#allocation5 + $0x7]]
    %v298 = vstv %s297
    %v299 = vmul.f32 %v111, %v298
    %v300 = vmul.f32 %v112, %v298
    %v301 = vmul.f32 %v113, %v298
    %v302 = vmul.f32 %v114, %v298
    %v307 = vrot.slane %v299, 2
    %v308 = vrot.slane %v300, 2
    %v309 = vsel %vm282, %v307, %v308
    %v310 = vrot.slane %v301, 2
    %v311 = vrot.slane %v302, 2
    %v312 = vsel %vm282, %v310, %v311
    %313 = vrot.lane.b32.xlu0 %v309, 127
    %v314 = vpop.permute.xlu0 %313
    %315 = vrot.lane.b32.xlu0 %v308, 127
    %v316 = vpop.permute.xlu0 %315
    %317 = vrot.lane.b32.xlu0 %v312, 127
    %v318 = vpop.permute.xlu0 %317
    %319 = vrot.lane.b32.xlu0 %v311, 127
    %v320 = vpop.permute.xlu0 %319
    %v325 = vadd.f32 %v293, %v314
    %v326 = vadd.f32 %v294, %v316
    %v327 = vadd.f32 %v295, %v318
    %v328 = vadd.f32 %v296, %v320
    %s329 = sld [smem:[#allocation5 + $0x8]]
    %v330 = vstv %s329
    %v331 = vmul.f32 %v111, %v330
    %v332 = vmul.f32 %v112, %v330
    %v333 = vmul.f32 %v113, %v330
    %v334 = vmul.f32 %v114, %v330
    %v339 = vrot.slane %v331, 2
    %v340 = vrot.slane %v332, 2
    %v341 = vsel %vm282, %v339, %v340
    %v342 = vrot.slane %v333, 2
    %v343 = vrot.slane %v334, 2
    %v344 = vsel %vm282, %v342, %v343
    %345 = vrot.lane.b32.xlu0 %v341, 126
    %v346 = vpop.permute.xlu0 %345
    %347 = vrot.lane.b32.xlu0 %v340, 126
    %v348 = vpop.permute.xlu0 %347
    %349 = vrot.lane.b32.xlu0 %v344, 126
    %v350 = vpop.permute.xlu0 %349
    %351 = vrot.lane.b32.xlu0 %v343, 126
    %v352 = vpop.permute.xlu0 %351
    %v357 = vadd.f32 %v325, %v346
    %v358 = vadd.f32 %v326, %v348
    %v359 = vadd.f32 %v327, %v350
    %v360 = vadd.f32 %v328, %v352
    %s361 = sld [smem:[#allocation5 + $0x9]]
    %v362 = vstv %s361
    %v363 = vmul.f32 %v116, %v362
    %v364 = vmul.f32 %v117, %v362
    %v365 = vmul.f32 %v118, %v362
    %v366 = vmul.f32 %v119, %v362
    %s367 = sld [smem:[#allocation5 + $0xa]]
    %v368 = vstv %s367
    %v369 = vmul.f32 %v116, %v368
    %v370 = vmul.f32 %v117, %v368
    %v371 = vmul.f32 %v118, %v368
    %v372 = vmul.f32 %v119, %v368
    %377 = vrot.lane.b32.xlu0 %v369, 127
    %v378 = vpop.permute.xlu0 %377
    %379 = vrot.lane.b32.xlu0 %v370, 127
    %v380 = vpop.permute.xlu0 %379
    %381 = vrot.lane.b32.xlu0 %v371, 127
    %v382 = vpop.permute.xlu0 %381
    %383 = vrot.lane.b32.xlu0 %v372, 127
    %v384 = vpop.permute.xlu0 %383
    %v389 = vadd.f32 %v363, %v378
    %v390 = vadd.f32 %v364, %v380
    %v391 = vadd.f32 %v365, %v382
    %v392 = vadd.f32 %v366, %v384
    %s393 = sld [smem:[#allocation5 + $0xb]]
    %v394 = vstv %s393
    %v395 = vmul.f32 %v116, %v394
    %v396 = vmul.f32 %v117, %v394
    %v397 = vmul.f32 %v118, %v394
    %v398 = vmul.f32 %v119, %v394
    %403 = vrot.lane.b32.xlu0 %v395, 126
    %v404 = vpop.permute.xlu0 %403
    %405 = vrot.lane.b32.xlu0 %v396, 126
    %v406 = vpop.permute.xlu0 %405
    %407 = vrot.lane.b32.xlu0 %v397, 126
    %v408 = vpop.permute.xlu0 %407
    %409 = vrot.lane.b32.xlu0 %v398, 126
    %v410 = vpop.permute.xlu0 %409
    %v415 = vadd.f32 %v389, %v404
    %v416 = vadd.f32 %v390, %v406
    %v417 = vadd.f32 %v391, %v408
    %v418 = vadd.f32 %v392, %v410
    %s419 = sld [smem:[#allocation5 + $0xc]]
    %v420 = vstv %s419
    %v421 = vmul.f32 %v116, %v420
    %v422 = vmul.f32 %v117, %v420
    %v423 = vmul.f32 %v118, %v420
    %v424 = vmul.f32 %v119, %v420
    %v429 = vrot.slane %v421, 1
    %v430 = vrot.slane %v422, 1
    %v431 = vsel %vm193, %v429, %v430
    %v432 = vrot.slane %v423, 1
    %v433 = vrot.slane %v424, 1
    %v434 = vsel %vm193, %v432, %v433
    %v439 = vadd.f32 %v415, %v431
    %v440 = vadd.f32 %v416, %v430
    %v441 = vadd.f32 %v417, %v434
    %v442 = vadd.f32 %v418, %v433
    %s443 = sld [smem:[#allocation5 + $0xd]]
    %v444 = vstv %s443
    %v445 = vmul.f32 %v116, %v444
    %v446 = vmul.f32 %v117, %v444
    %v447 = vmul.f32 %v118, %v444
    %v448 = vmul.f32 %v119, %v444
    %v453 = vrot.slane %v445, 1
    %v454 = vrot.slane %v446, 1
    %v455 = vsel %vm193, %v453, %v454
    %v456 = vrot.slane %v447, 1
    %v457 = vrot.slane %v448, 1
    %v458 = vsel %vm193, %v456, %v457
    %459 = vrot.lane.b32.xlu0 %v455, 127
    %v460 = vpop.permute.xlu0 %459
    %461 = vrot.lane.b32.xlu0 %v454, 127
    %v462 = vpop.permute.xlu0 %461
    %463 = vrot.lane.b32.xlu0 %v458, 127
    %v464 = vpop.permute.xlu0 %463
    %465 = vrot.lane.b32.xlu0 %v457, 127
    %v466 = vpop.permute.xlu0 %465
    %v471 = vadd.f32 %v439, %v460
    %v472 = vadd.f32 %v440, %v462
    %v473 = vadd.f32 %v441, %v464
    %v474 = vadd.f32 %v442, %v466
    %s475 = sld [smem:[#allocation5 + $0xe]]
    %v476 = vstv %s475
    %v477 = vmul.f32 %v116, %v476
    %v478 = vmul.f32 %v117, %v476
    %v479 = vmul.f32 %v118, %v476
    %v480 = vmul.f32 %v119, %v476
    %v485 = vrot.slane %v477, 1
    %v486 = vrot.slane %v478, 1
    %v487 = vsel %vm193, %v485, %v486
    %v488 = vrot.slane %v479, 1
    %v489 = vrot.slane %v480, 1
    %v490 = vsel %vm193, %v488, %v489
    %491 = vrot.lane.b32.xlu0 %v487, 126
    %v492 = vpop.permute.xlu0 %491
    %493 = vrot.lane.b32.xlu0 %v486, 126
    %v494 = vpop.permute.xlu0 %493
    %495 = vrot.lane.b32.xlu0 %v490, 126
    %v496 = vpop.permute.xlu0 %495
    %497 = vrot.lane.b32.xlu0 %v489, 126
    %v498 = vpop.permute.xlu0 %497
    %v503 = vadd.f32 %v471, %v492
    %v504 = vadd.f32 %v472, %v494
    %v505 = vadd.f32 %v473, %v496
    %v506 = vadd.f32 %v474, %v498
    %s507 = sld [smem:[#allocation5 + $0xf]]
    %v508 = vstv %s507
    %v509 = vmul.f32 %v116, %v508
    %v510 = vmul.f32 %v117, %v508
    %v511 = vmul.f32 %v118, %v508
    %v512 = vmul.f32 %v119, %v508
    %v517 = vrot.slane %v509, 2
    %v518 = vrot.slane %v510, 2
    %v519 = vsel %vm282, %v517, %v518
    %v520 = vrot.slane %v511, 2
    %v521 = vrot.slane %v512, 2
    %v522 = vsel %vm282, %v520, %v521
    %v527 = vadd.f32 %v503, %v519
    %v528 = vadd.f32 %v504, %v518
    %v529 = vadd.f32 %v505, %v522
    %v530 = vadd.f32 %v506, %v521
    %s531 = sld [smem:[#allocation5 + $0x10]]
    %v532 = vstv %s531
    %v533 = vmul.f32 %v116, %v532
    %v534 = vmul.f32 %v117, %v532
    %v535 = vmul.f32 %v118, %v532
    %v536 = vmul.f32 %v119, %v532
    %v541 = vrot.slane %v533, 2
    %v542 = vrot.slane %v534, 2
    %v543 = vsel %vm282, %v541, %v542
    %v544 = vrot.slane %v535, 2
    %v545 = vrot.slane %v536, 2
    %v546 = vsel %vm282, %v544, %v545
    %547 = vrot.lane.b32.xlu0 %v543, 127
    %v548 = vpop.permute.xlu0 %547
    %549 = vrot.lane.b32.xlu0 %v542, 127
    %v550 = vpop.permute.xlu0 %549
    %551 = vrot.lane.b32.xlu0 %v546, 127
    %v552 = vpop.permute.xlu0 %551
    %553 = vrot.lane.b32.xlu0 %v545, 127
    %v554 = vpop.permute.xlu0 %553
    %v559 = vadd.f32 %v527, %v548
    %v560 = vadd.f32 %v528, %v550
    %v561 = vadd.f32 %v529, %v552
    %v562 = vadd.f32 %v530, %v554
    %s563 = sld [smem:[#allocation5 + $0x11]]
    %v564 = vstv %s563
    %v565 = vmul.f32 %v116, %v564
    %v566 = vmul.f32 %v117, %v564
    %v567 = vmul.f32 %v118, %v564
    %v568 = vmul.f32 %v119, %v564
    %v573 = vrot.slane %v565, 2
    %v574 = vrot.slane %v566, 2
    %v575 = vsel %vm282, %v573, %v574
    %v576 = vrot.slane %v567, 2
    %v577 = vrot.slane %v568, 2
    %v578 = vsel %vm282, %v576, %v577
    %579 = vrot.lane.b32.xlu0 %v575, 126
    %v580 = vpop.permute.xlu0 %579
    %581 = vrot.lane.b32.xlu0 %v574, 126
    %v582 = vpop.permute.xlu0 %581
    %583 = vrot.lane.b32.xlu0 %v578, 126
    %v584 = vpop.permute.xlu0 %583
    %585 = vrot.lane.b32.xlu0 %v577, 126
    %v586 = vpop.permute.xlu0 %585
    %v591 = vadd.f32 %v559, %v580
    %v592 = vadd.f32 %v560, %v582
    %v593 = vadd.f32 %v561, %v584
    %v594 = vadd.f32 %v562, %v586
    %s595 = sld [smem:[#allocation5 + $0x12]]
    %v596 = vstv %s595
    %v597 = vmul.f32 %v121, %v596
    %v598 = vmul.f32 %v122, %v596
    %v599 = vmul.f32 %v123, %v596
    %v600 = vmul.f32 %v124, %v596
    %s601 = sld [smem:[#allocation5 + $0x13]]
    %v602 = vstv %s601
    %v603 = vmul.f32 %v121, %v602
    %v604 = vmul.f32 %v122, %v602
    %v605 = vmul.f32 %v123, %v602
    %v606 = vmul.f32 %v124, %v602
    %611 = vrot.lane.b32.xlu0 %v603, 127
    %v612 = vpop.permute.xlu0 %611
    %613 = vrot.lane.b32.xlu0 %v604, 127
    %v614 = vpop.permute.xlu0 %613
    %615 = vrot.lane.b32.xlu0 %v605, 127
    %v616 = vpop.permute.xlu0 %615
    %617 = vrot.lane.b32.xlu0 %v606, 127
    %v618 = vpop.permute.xlu0 %617
    %v623 = vadd.f32 %v597, %v612
    %v624 = vadd.f32 %v598, %v614
    %v625 = vadd.f32 %v599, %v616
    %v626 = vadd.f32 %v600, %v618
    %s627 = sld [smem:[#allocation5 + $0x14]]
    %v628 = vstv %s627
    %v629 = vmul.f32 %v121, %v628
    %v630 = vmul.f32 %v122, %v628
    %v631 = vmul.f32 %v123, %v628
    %v632 = vmul.f32 %v124, %v628
    %637 = vrot.lane.b32.xlu0 %v629, 126
    %v638 = vpop.permute.xlu0 %637
    %639 = vrot.lane.b32.xlu0 %v630, 126
    %v640 = vpop.permute.xlu0 %639
    %641 = vrot.lane.b32.xlu0 %v631, 126
    %v642 = vpop.permute.xlu0 %641
    %643 = vrot.lane.b32.xlu0 %v632, 126
    %v644 = vpop.permute.xlu0 %643
    %v649 = vadd.f32 %v623, %v638
    %v650 = vadd.f32 %v624, %v640
    %v651 = vadd.f32 %v625, %v642
    %v652 = vadd.f32 %v626, %v644
    %s653 = sld [smem:[#allocation5 + $0x15]]
    %v654 = vstv %s653
    %v655 = vmul.f32 %v121, %v654
    %v656 = vmul.f32 %v122, %v654
    %v657 = vmul.f32 %v123, %v654
    %v658 = vmul.f32 %v124, %v654
    %v663 = vrot.slane %v655, 1
    %v664 = vrot.slane %v656, 1
    %v665 = vsel %vm193, %v663, %v664
    %v666 = vrot.slane %v657, 1
    %v667 = vrot.slane %v658, 1
    %v668 = vsel %vm193, %v666, %v667
    %v673 = vadd.f32 %v649, %v665
    %v674 = vadd.f32 %v650, %v664
    %v675 = vadd.f32 %v651, %v668
    %v676 = vadd.f32 %v652, %v667
    %s677 = sld [smem:[#allocation5 + $0x16]]
    %v678 = vstv %s677
    %v679 = vmul.f32 %v121, %v678
    %v680 = vmul.f32 %v122, %v678
    %v681 = vmul.f32 %v123, %v678
    %v682 = vmul.f32 %v124, %v678
    %v687 = vrot.slane %v679, 1
    %v688 = vrot.slane %v680, 1
    %v689 = vsel %vm193, %v687, %v688
    %v690 = vrot.slane %v681, 1
    %v691 = vrot.slane %v682, 1
    %v692 = vsel %vm193, %v690, %v691
    %693 = vrot.lane.b32.xlu0 %v689, 127
    %v694 = vpop.permute.xlu0 %693
    %695 = vrot.lane.b32.xlu0 %v688, 127
    %v696 = vpop.permute.xlu0 %695
    %697 = vrot.lane.b32.xlu0 %v692, 127
    %v698 = vpop.permute.xlu0 %697
    %699 = vrot.lane.b32.xlu0 %v691, 127
    %v700 = vpop.permute.xlu0 %699
    %v705 = vadd.f32 %v673, %v694
    %v706 = vadd.f32 %v674, %v696
    %v707 = vadd.f32 %v675, %v698
    %v708 = vadd.f32 %v676, %v700
    %s709 = sld [smem:[#allocation5 + $0x17]]
    %v710 = vstv %s709
    %v711 = vmul.f32 %v121, %v710
    %v712 = vmul.f32 %v122, %v710
    %v713 = vmul.f32 %v123, %v710
    %v714 = vmul.f32 %v124, %v710
    %v719 = vrot.slane %v711, 1
    %v720 = vrot.slane %v712, 1
    %v721 = vsel %vm193, %v719, %v720
    %v722 = vrot.slane %v713, 1
    %v723 = vrot.slane %v714, 1
    %v724 = vsel %vm193, %v722, %v723
    %725 = vrot.lane.b32.xlu0 %v721, 126
    %v726 = vpop.permute.xlu0 %725
    %727 = vrot.lane.b32.xlu0 %v720, 126
    %v728 = vpop.permute.xlu0 %727
    %729 = vrot.lane.b32.xlu0 %v724, 126
    %v730 = vpop.permute.xlu0 %729
    %731 = vrot.lane.b32.xlu0 %v723, 126
    %v732 = vpop.permute.xlu0 %731
    %v737 = vadd.f32 %v705, %v726
    %v738 = vadd.f32 %v706, %v728
    %v739 = vadd.f32 %v707, %v730
    %v740 = vadd.f32 %v708, %v732
    %s741 = sld [smem:[#allocation5 + $0x18]]
    %v742 = vstv %s741
    %v743 = vmul.f32 %v121, %v742
    %v744 = vmul.f32 %v122, %v742
    %v745 = vmul.f32 %v123, %v742
    %v746 = vmul.f32 %v124, %v742
    %v751 = vrot.slane %v743, 2
    %v752 = vrot.slane %v744, 2
    %v753 = vsel %vm282, %v751, %v752
    %v754 = vrot.slane %v745, 2
    %v755 = vrot.slane %v746, 2
    %v756 = vsel %vm282, %v754, %v755
    %v761 = vadd.f32 %v737, %v753
    %v762 = vadd.f32 %v738, %v752
    %v763 = vadd.f32 %v739, %v756
    %v764 = vadd.f32 %v740, %v755
    %s765 = sld [smem:[#allocation5 + $0x19]]
    %v766 = vstv %s765
    %v767 = vmul.f32 %v121, %v766
    %v768 = vmul.f32 %v122, %v766
    %v769 = vmul.f32 %v123, %v766
    %v770 = vmul.f32 %v124, %v766
    %v775 = vrot.slane %v767, 2
    %v776 = vrot.slane %v768, 2
    %v777 = vsel %vm282, %v775, %v776
    %v778 = vrot.slane %v769, 2
    %v779 = vrot.slane %v770, 2
    %v780 = vsel %vm282, %v778, %v779
    %781 = vrot.lane.b32.xlu0 %v777, 127
    %v782 = vpop.permute.xlu0 %781
    %783 = vrot.lane.b32.xlu0 %v776, 127
    %v784 = vpop.permute.xlu0 %783
    %785 = vrot.lane.b32.xlu0 %v780, 127
    %v786 = vpop.permute.xlu0 %785
    %787 = vrot.lane.b32.xlu0 %v779, 127
    %v788 = vpop.permute.xlu0 %787
    %v793 = vadd.f32 %v761, %v782
    %v794 = vadd.f32 %v762, %v784
    %v795 = vadd.f32 %v763, %v786
    %v796 = vadd.f32 %v764, %v788
    %s797 = sld [smem:[#allocation5 + $0x1a]]
    %v798 = vstv %s797
    %v799 = vmul.f32 %v121, %v798
    %v800 = vmul.f32 %v122, %v798
    %v801 = vmul.f32 %v123, %v798
    %v802 = vmul.f32 %v124, %v798
    %v807 = vrot.slane %v799, 2
    %v808 = vrot.slane %v800, 2
    %v809 = vsel %vm282, %v807, %v808
    %v810 = vrot.slane %v801, 2
    %v811 = vrot.slane %v802, 2
    %v812 = vsel %vm282, %v810, %v811
    %813 = vrot.lane.b32.xlu0 %v809, 126
    %v814 = vpop.permute.xlu0 %813
    %815 = vrot.lane.b32.xlu0 %v808, 126
    %v816 = vpop.permute.xlu0 %815
    %817 = vrot.lane.b32.xlu0 %v812, 126
    %v818 = vpop.permute.xlu0 %817
    %819 = vrot.lane.b32.xlu0 %v811, 126
    %v820 = vpop.permute.xlu0 %819
    %v825 = vadd.f32 %v793, %v814
    %v826 = vadd.f32 %v794, %v816
    %v827 = vadd.f32 %v795, %v818
    %v828 = vadd.f32 %v796, %v820
    %v829 = vadd.f32 %v357, %v591
    %v830 = vadd.f32 %v358, %v592
    %v831 = vadd.f32 %v359, %v593
    %v832 = vadd.f32 %v360, %v594
    %v833 = vadd.f32 %v829, %v825
    %v834 = vadd.f32 %v830, %v826
    %v835 = vadd.f32 %v831, %v827
    %v836 = vadd.f32 %v832, %v828
    %s837 = sld [smem:[#allocation6]]
    %v838 = vstv %s837
    %v839 = vadd.f32 %v833, %v838
    %v840 = vadd.f32 %v834, %v838
    %v841 = vadd.f32 %v835, %v838
    %v842 = vadd.f32 %v836, %v838
    %v843 = vmax.f32 %v839, 0.0
    %v844 = vmax.f32 %v840, 0.0
    %v845 = vmax.f32 %v841, 0.0
    %v846 = vmax.f32 %v842, 0.0
    %s847 = sld [smem:[#allocation5 + $0x1b]]
    %v848 = vstv %s847
    %v849 = vmul.f32 %v111, %v848
    %v850 = vmul.f32 %v112, %v848
    %v851 = vmul.f32 %v113, %v848
    %v852 = vmul.f32 %v114, %v848
    %s853 = sld [smem:[#allocation5 + $0x1c]]
    %v854 = vstv %s853
    %v855 = vmul.f32 %v111, %v854
    %v856 = vmul.f32 %v112, %v854
    %v857 = vmul.f32 %v113, %v854
    %v858 = vmul.f32 %v114, %v854
    %863 = vrot.lane.b32.xlu0 %v855, 127
    %v864 = vpop.permute.xlu0 %863
    %865 = vrot.lane.b32.xlu0 %v856, 127
    %v866 = vpop.permute.xlu0 %865
    %867 = vrot.lane.b32.xlu0 %v857, 127
    %v868 = vpop.permute.xlu0 %867
    %869 = vrot.lane.b32.xlu0 %v858, 127
    %v870 = vpop.permute.xlu0 %869
    %v875 = vadd.f32 %v849, %v864
    %v876 = vadd.f32 %v850, %v866
    %v877 = vadd.f32 %v851, %v868
    %v878 = vadd.f32 %v852, %v870
    %s879 = sld [smem:[#allocation5 + $0x1d]]
    %v880 = vstv %s879
    %v881 = vmul.f32 %v111, %v880
    %v882 = vmul.f32 %v112, %v880
    %v883 = vmul.f32 %v113, %v880
    %v884 = vmul.f32 %v114, %v880
    %889 = vrot.lane.b32.xlu0 %v881, 126
    %v890 = vpop.permute.xlu0 %889
    %891 = vrot.lane.b32.xlu0 %v882, 126
    %v892 = vpop.permute.xlu0 %891
    %893 = vrot.lane.b32.xlu0 %v883, 126
    %v894 = vpop.permute.xlu0 %893
    %895 = vrot.lane.b32.xlu0 %v884, 126
    %v896 = vpop.permute.xlu0 %895
    %v901 = vadd.f32 %v875, %v890
    %v902 = vadd.f32 %v876, %v892
    %v903 = vadd.f32 %v877, %v894
    %v904 = vadd.f32 %v878, %v896
    %s905 = sld [smem:[#allocation5 + $0x1e]]
    %v906 = vstv %s905
    %v907 = vmul.f32 %v111, %v906
    %v908 = vmul.f32 %v112, %v906
    %v909 = vmul.f32 %v113, %v906
    %v910 = vmul.f32 %v114, %v906
    %v915 = vrot.slane %v907, 1
    %v916 = vrot.slane %v908, 1
    %v917 = vsel %vm193, %v915, %v916
    %v918 = vrot.slane %v909, 1
    %v919 = vrot.slane %v910, 1
    %v920 = vsel %vm193, %v918, %v919
    %v925 = vadd.f32 %v901, %v917
    %v926 = vadd.f32 %v902, %v916
    %v927 = vadd.f32 %v903, %v920
    %v928 = vadd.f32 %v904, %v919
    %s929 = sld [smem:[#allocation5 + $0x1f]]
    %v930 = vstv %s929
    %v931 = vmul.f32 %v111, %v930
    %v932 = vmul.f32 %v112, %v930
    %v933 = vmul.f32 %v113, %v930
    %v934 = vmul.f32 %v114, %v930
    %v939 = vrot.slane %v931, 1
    %v940 = vrot.slane %v932, 1
    %v941 = vsel %vm193, %v939, %v940
    %v942 = vrot.slane %v933, 1
    %v943 = vrot.slane %v934, 1
    %v944 = vsel %vm193, %v942, %v943
    %945 = vrot.lane.b32.xlu0 %v941, 127
    %v946 = vpop.permute.xlu0 %945
    %947 = vrot.lane.b32.xlu0 %v940, 127
    %v948 = vpop.permute.xlu0 %947
    %949 = vrot.lane.b32.xlu0 %v944, 127
    %v950 = vpop.permute.xlu0 %949
    %951 = vrot.lane.b32.xlu0 %v943, 127
    %v952 = vpop.permute.xlu0 %951
    %v957 = vadd.f32 %v925, %v946
    %v958 = vadd.f32 %v926, %v948
    %v959 = vadd.f32 %v927, %v950
    %v960 = vadd.f32 %v928, %v952
    %s961 = sld [smem:[#allocation5 + $0x20]]
    %v962 = vstv %s961
    %v963 = vmul.f32 %v111, %v962
    %v964 = vmul.f32 %v112, %v962
    %v965 = vmul.f32 %v113, %v962
    %v966 = vmul.f32 %v114, %v962
    %v971 = vrot.slane %v963, 1
    %v972 = vrot.slane %v964, 1
    %v973 = vsel %vm193, %v971, %v972
    %v974 = vrot.slane %v965, 1
    %v975 = vrot.slane %v966, 1
    %v976 = vsel %vm193, %v974, %v975
    %977 = vrot.lane.b32.xlu0 %v973, 126
    %v978 = vpop.permute.xlu0 %977
    %979 = vrot.lane.b32.xlu0 %v972, 126
    %v980 = vpop.permute.xlu0 %979
    %981 = vrot.lane.b32.xlu0 %v976, 126
    %v982 = vpop.permute.xlu0 %981
    %983 = vrot.lane.b32.xlu0 %v975, 126
    %v984 = vpop.permute.xlu0 %983
    %v989 = vadd.f32 %v957, %v978
    %v990 = vadd.f32 %v958, %v980
    %v991 = vadd.f32 %v959, %v982
    %v992 = vadd.f32 %v960, %v984
    %s993 = sld [smem:[#allocation5 + $0x21]]
    %v994 = vstv %s993
    %v995 = vmul.f32 %v111, %v994
    %v996 = vmul.f32 %v112, %v994
    %v997 = vmul.f32 %v113, %v994
    %v998 = vmul.f32 %v114, %v994
    %v1003 = vrot.slane %v995, 2
    %v1004 = vrot.slane %v996, 2
    %v1005 = vsel %vm282, %v1003, %v1004
    %v1006 = vrot.slane %v997, 2
    %v1007 = vrot.slane %v998, 2
    %v1008 = vsel %vm282, %v1006, %v1007
    %v1013 = vadd.f32 %v989, %v1005
    %v1014 = vadd.f32 %v990, %v1004
    %v1015 = vadd.f32 %v991, %v1008
    %v1016 = vadd.f32 %v992, %v1007
    %s1017 = sld [smem:[#allocation5 + $0x22]]
    %v1018 = vstv %s1017
    %v1019 = vmul.f32 %v111, %v1018
    %v1020 = vmul.f32 %v112, %v1018
    %v1021 = vmul.f32 %v113, %v1018
    %v1022 = vmul.f32 %v114, %v1018
    %v1027 = vrot.slane %v1019, 2
    %v1028 = vrot.slane %v1020, 2
    %v1029 = vsel %vm282, %v1027, %v1028
    %v1030 = vrot.slane %v1021, 2
    %v1031 = vrot.slane %v1022, 2
    %v1032 = vsel %vm282, %v1030, %v1031
    %1033 = vrot.lane.b32.xlu0 %v1029, 127
    %v1034 = vpop.permute.xlu0 %1033
    %1035 = vrot.lane.b32.xlu0 %v1028, 127
    %v1036 = vpop.permute.xlu0 %1035
    %1037 = vrot.lane.b32.xlu0 %v1032, 127
    %v1038 = vpop.permute.xlu0 %1037
    %1039 = vrot.lane.b32.xlu0 %v1031, 127
    %v1040 = vpop.permute.xlu0 %1039
    %v1045 = vadd.f32 %v1013, %v1034
    %v1046 = vadd.f32 %v1014, %v1036
    %v1047 = vadd.f32 %v1015, %v1038
    %v1048 = vadd.f32 %v1016, %v1040
    %s1049 = sld [smem:[#allocation5 + $0x23]]
    %v1050 = vstv %s1049
    %v1051 = vmul.f32 %v111, %v1050
    %v1052 = vmul.f32 %v112, %v1050
    %v1053 = vmul.f32 %v113, %v1050
    %v1054 = vmul.f32 %v114, %v1050
    %v1059 = vrot.slane %v1051, 2
    %v1060 = vrot.slane %v1052, 2
    %v1061 = vsel %vm282, %v1059, %v1060
    %v1062 = vrot.slane %v1053, 2
    %v1063 = vrot.slane %v1054, 2
    %v1064 = vsel %vm282, %v1062, %v1063
    %1065 = vrot.lane.b32.xlu0 %v1061, 126
    %v1066 = vpop.permute.xlu0 %1065
    %1067 = vrot.lane.b32.xlu0 %v1060, 126
    %v1068 = vpop.permute.xlu0 %1067
    %1069 = vrot.lane.b32.xlu0 %v1064, 126
    %v1070 = vpop.permute.xlu0 %1069
    %1071 = vrot.lane.b32.xlu0 %v1063, 126
    %v1072 = vpop.permute.xlu0 %1071
    %v1077 = vadd.f32 %v1045, %v1066
    %v1078 = vadd.f32 %v1046, %v1068
    %v1079 = vadd.f32 %v1047, %v1070
    %v1080 = vadd.f32 %v1048, %v1072
    %s1081 = sld [smem:[#allocation5 + $0x24]]
    %v1082 = vstv %s1081
    %v1083 = vmul.f32 %v116, %v1082
    %v1084 = vmul.f32 %v117, %v1082
    %v1085 = vmul.f32 %v118, %v1082
    %v1086 = vmul.f32 %v119, %v1082
    %s1087 = sld [smem:[#allocation5 + $0x25]]
    %v1088 = vstv %s1087
    %v1089 = vmul.f32 %v116, %v1088
    %v1090 = vmul.f32 %v117, %v1088
    %v1091 = vmul.f32 %v118, %v1088
    %v1092 = vmul.f32 %v119, %v1088
    %1097 = vrot.lane.b32.xlu0 %v1089, 127
    %v1098 = vpop.permute.xlu0 %1097
    %1099 = vrot.lane.b32.xlu0 %v1090, 127
    %v1100 = vpop.permute.xlu0 %1099
    %1101 = vrot.lane.b32.xlu0 %v1091, 127
    %v1102 = vpop.permute.xlu0 %1101
    %1103 = vrot.lane.b32.xlu0 %v1092, 127
    %v1104 = vpop.permute.xlu0 %1103
    %v1109 = vadd.f32 %v1083, %v1098
    %v1110 = vadd.f32 %v1084, %v1100
    %v1111 = vadd.f32 %v1085, %v1102
    %v1112 = vadd.f32 %v1086, %v1104
    %s1113 = sld [smem:[#allocation5 + $0x26]]
    %v1114 = vstv %s1113
    %v1115 = vmul.f32 %v116, %v1114
    %v1116 = vmul.f32 %v117, %v1114
    %v1117 = vmul.f32 %v118, %v1114
    %v1118 = vmul.f32 %v119, %v1114
    %1123 = vrot.lane.b32.xlu0 %v1115, 126
    %v1124 = vpop.permute.xlu0 %1123
    %1125 = vrot.lane.b32.xlu0 %v1116, 126
    %v1126 = vpop.permute.xlu0 %1125
    %1127 = vrot.lane.b32.xlu0 %v1117, 126
    %v1128 = vpop.permute.xlu0 %1127
    %1129 = vrot.lane.b32.xlu0 %v1118, 126
    %v1130 = vpop.permute.xlu0 %1129
    %v1135 = vadd.f32 %v1109, %v1124
    %v1136 = vadd.f32 %v1110, %v1126
    %v1137 = vadd.f32 %v1111, %v1128
    %v1138 = vadd.f32 %v1112, %v1130
    %s1139 = sld [smem:[#allocation5 + $0x27]]
    %v1140 = vstv %s1139
    %v1141 = vmul.f32 %v116, %v1140
    %v1142 = vmul.f32 %v117, %v1140
    %v1143 = vmul.f32 %v118, %v1140
    %v1144 = vmul.f32 %v119, %v1140
    %v1149 = vrot.slane %v1141, 1
    %v1150 = vrot.slane %v1142, 1
    %v1151 = vsel %vm193, %v1149, %v1150
    %v1152 = vrot.slane %v1143, 1
    %v1153 = vrot.slane %v1144, 1
    %v1154 = vsel %vm193, %v1152, %v1153
    %v1159 = vadd.f32 %v1135, %v1151
    %v1160 = vadd.f32 %v1136, %v1150
    %v1161 = vadd.f32 %v1137, %v1154
    %v1162 = vadd.f32 %v1138, %v1153
    %s1163 = sld [smem:[#allocation5 + $0x28]]
    %v1164 = vstv %s1163
    %v1165 = vmul.f32 %v116, %v1164
    %v1166 = vmul.f32 %v117, %v1164
    %v1167 = vmul.f32 %v118, %v1164
    %v1168 = vmul.f32 %v119, %v1164
    %v1173 = vrot.slane %v1165, 1
    %v1174 = vrot.slane %v1166, 1
    %v1175 = vsel %vm193, %v1173, %v1174
    %v1176 = vrot.slane %v1167, 1
    %v1177 = vrot.slane %v1168, 1
    %v1178 = vsel %vm193, %v1176, %v1177
    %1179 = vrot.lane.b32.xlu0 %v1175, 127
    %v1180 = vpop.permute.xlu0 %1179
    %1181 = vrot.lane.b32.xlu0 %v1174, 127
    %v1182 = vpop.permute.xlu0 %1181
    %1183 = vrot.lane.b32.xlu0 %v1178, 127
    %v1184 = vpop.permute.xlu0 %1183
    %1185 = vrot.lane.b32.xlu0 %v1177, 127
    %v1186 = vpop.permute.xlu0 %1185
    %v1191 = vadd.f32 %v1159, %v1180
    %v1192 = vadd.f32 %v1160, %v1182
    %v1193 = vadd.f32 %v1161, %v1184
    %v1194 = vadd.f32 %v1162, %v1186
    %s1195 = sld [smem:[#allocation5 + $0x29]]
    %v1196 = vstv %s1195
    %v1197 = vmul.f32 %v116, %v1196
    %v1198 = vmul.f32 %v117, %v1196
    %v1199 = vmul.f32 %v118, %v1196
    %v1200 = vmul.f32 %v119, %v1196
    %v1205 = vrot.slane %v1197, 1
    %v1206 = vrot.slane %v1198, 1
    %v1207 = vsel %vm193, %v1205, %v1206
    %v1208 = vrot.slane %v1199, 1
    %v1209 = vrot.slane %v1200, 1
    %v1210 = vsel %vm193, %v1208, %v1209
    %1211 = vrot.lane.b32.xlu0 %v1207, 126
    %v1212 = vpop.permute.xlu0 %1211
    %1213 = vrot.lane.b32.xlu0 %v1206, 126
    %v1214 = vpop.permute.xlu0 %1213
    %1215 = vrot.lane.b32.xlu0 %v1210, 126
    %v1216 = vpop.permute.xlu0 %1215
    %1217 = vrot.lane.b32.xlu0 %v1209, 126
    %v1218 = vpop.permute.xlu0 %1217
    %v1223 = vadd.f32 %v1191, %v1212
    %v1224 = vadd.f32 %v1192, %v1214
    %v1225 = vadd.f32 %v1193, %v1216
    %v1226 = vadd.f32 %v1194, %v1218
    %s1227 = sld [smem:[#allocation5 + $0x2a]]
    %v1228 = vstv %s1227
    %v1229 = vmul.f32 %v116, %v1228
    %v1230 = vmul.f32 %v117, %v1228
    %v1231 = vmul.f32 %v118, %v1228
    %v1232 = vmul.f32 %v119, %v1228
    %v1237 = vrot.slane %v1229, 2
    %v1238 = vrot.slane %v1230, 2
    %v1239 = vsel %vm282, %v1237, %v1238
    %v1240 = vrot.slane %v1231, 2
    %v1241 = vrot.slane %v1232, 2
    %v1242 = vsel %vm282, %v1240, %v1241
    %v1247 = vadd.f32 %v1223, %v1239
    %v1248 = vadd.f32 %v1224, %v1238
    %v1249 = vadd.f32 %v1225, %v1242
    %v1250 = vadd.f32 %v1226, %v1241
    %s1251 = sld [smem:[#allocation5 + $0x2b]]
    %v1252 = vstv %s1251
    %v1253 = vmul.f32 %v116, %v1252
    %v1254 = vmul.f32 %v117, %v1252
    %v1255 = vmul.f32 %v118, %v1252
    %v1256 = vmul.f32 %v119, %v1252
    %v1261 = vrot.slane %v1253, 2
    %v1262 = vrot.slane %v1254, 2
    %v1263 = vsel %vm282, %v1261, %v1262
    %v1264 = vrot.slane %v1255, 2
    %v1265 = vrot.slane %v1256, 2
    %v1266 = vsel %vm282, %v1264, %v1265
    %1267 = vrot.lane.b32.xlu0 %v1263, 127
    %v1268 = vpop.permute.xlu0 %1267
    %1269 = vrot.lane.b32.xlu0 %v1262, 127
    %v1270 = vpop.permute.xlu0 %1269
    %1271 = vrot.lane.b32.xlu0 %v1266, 127
    %v1272 = vpop.permute.xlu0 %1271
    %1273 = vrot.lane.b32.xlu0 %v1265, 127
    %v1274 = vpop.permute.xlu0 %1273
    %v1279 = vadd.f32 %v1247, %v1268
    %v1280 = vadd.f32 %v1248, %v1270
    %v1281 = vadd.f32 %v1249, %v1272
    %v1282 = vadd.f32 %v1250, %v1274
    %s1283 = sld [smem:[#allocation5 + $0x2c]]
    %v1284 = vstv %s1283
    %v1285 = vmul.f32 %v116, %v1284
    %v1286 = vmul.f32 %v117, %v1284
    %v1287 = vmul.f32 %v118, %v1284
    %v1288 = vmul.f32 %v119, %v1284
    %v1293 = vrot.slane %v1285, 2
    %v1294 = vrot.slane %v1286, 2
    %v1295 = vsel %vm282, %v1293, %v1294
    %v1296 = vrot.slane %v1287, 2
    %v1297 = vrot.slane %v1288, 2
    %v1298 = vsel %vm282, %v1296, %v1297
    %1299 = vrot.lane.b32.xlu0 %v1295, 126
    %v1300 = vpop.permute.xlu0 %1299
    %1301 = vrot.lane.b32.xlu0 %v1294, 126
    %v1302 = vpop.permute.xlu0 %1301
    %1303 = vrot.lane.b32.xlu0 %v1298, 126
    %v1304 = vpop.permute.xlu0 %1303
    %1305 = vrot.lane.b32.xlu0 %v1297, 126
    %v1306 = vpop.permute.xlu0 %1305
    %v1311 = vadd.f32 %v1279, %v1300
    %v1312 = vadd.f32 %v1280, %v1302
    %v1313 = vadd.f32 %v1281, %v1304
    %v1314 = vadd.f32 %v1282, %v1306
    %s1315 = sld [smem:[#allocation5 + $0x2d]]
    %v1316 = vstv %s1315
    %v1317 = vmul.f32 %v121, %v1316
    %v1318 = vmul.f32 %v122, %v1316
    %v1319 = vmul.f32 %v123, %v1316
    %v1320 = vmul.f32 %v124, %v1316
    %s1321 = sld [smem:[#allocation5 + $0x2e]]
    %v1322 = vstv %s1321
    %v1323 = vmul.f32 %v121, %v1322
    %v1324 = vmul.f32 %v122, %v1322
    %v1325 = vmul.f32 %v123, %v1322
    %v1326 = vmul.f32 %v124, %v1322
    %1331 = vrot.lane.b32.xlu0 %v1323, 127
    %v1332 = vpop.permute.xlu0 %1331
    %1333 = vrot.lane.b32.xlu0 %v1324, 127
    %v1334 = vpop.permute.xlu0 %1333
    %1335 = vrot.lane.b32.xlu0 %v1325, 127
    %v1336 = vpop.permute.xlu0 %1335
    %1337 = vrot.lane.b32.xlu0 %v1326, 127
    %v1338 = vpop.permute.xlu0 %1337
    %v1343 = vadd.f32 %v1317, %v1332
    %v1344 = vadd.f32 %v1318, %v1334
    %v1345 = vadd.f32 %v1319, %v1336
    %v1346 = vadd.f32 %v1320, %v1338
    %s1347 = sld [smem:[#allocation5 + $0x2f]]
    %v1348 = vstv %s1347
    %v1349 = vmul.f32 %v121, %v1348
    %v1350 = vmul.f32 %v122, %v1348
    %v1351 = vmul.f32 %v123, %v1348
    %v1352 = vmul.f32 %v124, %v1348
    %1357 = vrot.lane.b32.xlu0 %v1349, 126
    %v1358 = vpop.permute.xlu0 %1357
    %1359 = vrot.lane.b32.xlu0 %v1350, 126
    %v1360 = vpop.permute.xlu0 %1359
    %1361 = vrot.lane.b32.xlu0 %v1351, 126
    %v1362 = vpop.permute.xlu0 %1361
    %1363 = vrot.lane.b32.xlu0 %v1352, 126
    %v1364 = vpop.permute.xlu0 %1363
    %v1369 = vadd.f32 %v1343, %v1358
    %v1370 = vadd.f32 %v1344, %v1360
    %v1371 = vadd.f32 %v1345, %v1362
    %v1372 = vadd.f32 %v1346, %v1364
    %s1373 = sld [smem:[#allocation5 + $0x30]]
    %v1374 = vstv %s1373
    %v1375 = vmul.f32 %v121, %v1374
    %v1376 = vmul.f32 %v122, %v1374
    %v1377 = vmul.f32 %v123, %v1374
    %v1378 = vmul.f32 %v124, %v1374
    %v1383 = vrot.slane %v1375, 1
    %v1384 = vrot.slane %v1376, 1
    %v1385 = vsel %vm193, %v1383, %v1384
    %v1386 = vrot.slane %v1377, 1
    %v1387 = vrot.slane %v1378, 1
    %v1388 = vsel %vm193, %v1386, %v1387
    %v1393 = vadd.f32 %v1369, %v1385
    %v1394 = vadd.f32 %v1370, %v1384
    %v1395 = vadd.f32 %v1371, %v1388
    %v1396 = vadd.f32 %v1372, %v1387
    %s1397 = sld [smem:[#allocation5 + $0x31]]
    %v1398 = vstv %s1397
    %v1399 = vmul.f32 %v121, %v1398
    %v1400 = vmul.f32 %v122, %v1398
    %v1401 = vmul.f32 %v123, %v1398
    %v1402 = vmul.f32 %v124, %v1398
    %v1407 = vrot.slane %v1399, 1
    %v1408 = vrot.slane %v1400, 1
    %v1409 = vsel %vm193, %v1407, %v1408
    %v1410 = vrot.slane %v1401, 1
    %v1411 = vrot.slane %v1402, 1
    %v1412 = vsel %vm193, %v1410, %v1411
    %1413 = vrot.lane.b32.xlu0 %v1409, 127
    %v1414 = vpop.permute.xlu0 %1413
    %1415 = vrot.lane.b32.xlu0 %v1408, 127
    %v1416 = vpop.permute.xlu0 %1415
    %1417 = vrot.lane.b32.xlu0 %v1412, 127
    %v1418 = vpop.permute.xlu0 %1417
    %1419 = vrot.lane.b32.xlu0 %v1411, 127
    %v1420 = vpop.permute.xlu0 %1419
    %v1425 = vadd.f32 %v1393, %v1414
    %v1426 = vadd.f32 %v1394, %v1416
    %v1427 = vadd.f32 %v1395, %v1418
    %v1428 = vadd.f32 %v1396, %v1420
    %s1429 = sld [smem:[#allocation5 + $0x32]]
    %v1430 = vstv %s1429
    %v1431 = vmul.f32 %v121, %v1430
    %v1432 = vmul.f32 %v122, %v1430
    %v1433 = vmul.f32 %v123, %v1430
    %v1434 = vmul.f32 %v124, %v1430
    %v1439 = vrot.slane %v1431, 1
    %v1440 = vrot.slane %v1432, 1
    %v1441 = vsel %vm193, %v1439, %v1440
    %v1442 = vrot.slane %v1433, 1
    %v1443 = vrot.slane %v1434, 1
    %v1444 = vsel %vm193, %v1442, %v1443
    %1445 = vrot.lane.b32.xlu0 %v1441, 126
    %v1446 = vpop.permute.xlu0 %1445
    %1447 = vrot.lane.b32.xlu0 %v1440, 126
    %v1448 = vpop.permute.xlu0 %1447
    %1449 = vrot.lane.b32.xlu0 %v1444, 126
    %v1450 = vpop.permute.xlu0 %1449
    %1451 = vrot.lane.b32.xlu0 %v1443, 126
    %v1452 = vpop.permute.xlu0 %1451
    %v1457 = vadd.f32 %v1425, %v1446
    %v1458 = vadd.f32 %v1426, %v1448
    %v1459 = vadd.f32 %v1427, %v1450
    %v1460 = vadd.f32 %v1428, %v1452
    %s1461 = sld [smem:[#allocation5 + $0x33]]
    %v1462 = vstv %s1461
    %v1463 = vmul.f32 %v121, %v1462
    %v1464 = vmul.f32 %v122, %v1462
    %v1465 = vmul.f32 %v123, %v1462
    %v1466 = vmul.f32 %v124, %v1462
    %v1471 = vrot.slane %v1463, 2
    %v1472 = vrot.slane %v1464, 2
    %v1473 = vsel %vm282, %v1471, %v1472
    %v1474 = vrot.slane %v1465, 2
    %v1475 = vrot.slane %v1466, 2
    %v1476 = vsel %vm282, %v1474, %v1475
    %v1481 = vadd.f32 %v1457, %v1473
    %v1482 = vadd.f32 %v1458, %v1472
    %v1483 = vadd.f32 %v1459, %v1476
    %v1484 = vadd.f32 %v1460, %v1475
    %s1485 = sld [smem:[#allocation5 + $0x34]]
    %v1486 = vstv %s1485
    %v1487 = vmul.f32 %v121, %v1486
    %v1488 = vmul.f32 %v122, %v1486
    %v1489 = vmul.f32 %v123, %v1486
    %v1490 = vmul.f32 %v124, %v1486
    %v1495 = vrot.slane %v1487, 2
    %v1496 = vrot.slane %v1488, 2
    %v1497 = vsel %vm282, %v1495, %v1496
    %v1498 = vrot.slane %v1489, 2
    %v1499 = vrot.slane %v1490, 2
    %v1500 = vsel %vm282, %v1498, %v1499
    %1501 = vrot.lane.b32.xlu0 %v1497, 127
    %v1502 = vpop.permute.xlu0 %1501
    %1503 = vrot.lane.b32.xlu0 %v1496, 127
    %v1504 = vpop.permute.xlu0 %1503
    %1505 = vrot.lane.b32.xlu0 %v1500, 127
    %v1506 = vpop.permute.xlu0 %1505
    %1507 = vrot.lane.b32.xlu0 %v1499, 127
    %v1508 = vpop.permute.xlu0 %1507
    %v1513 = vadd.f32 %v1481, %v1502
    %v1514 = vadd.f32 %v1482, %v1504
    %v1515 = vadd.f32 %v1483, %v1506
    %v1516 = vadd.f32 %v1484, %v1508
    %s1517 = sld [smem:[#allocation5 + $0x35]]
    %v1518 = vstv %s1517
    %v1519 = vmul.f32 %v121, %v1518
    %v1520 = vmul.f32 %v122, %v1518
    %v1521 = vmul.f32 %v123, %v1518
    %v1522 = vmul.f32 %v124, %v1518
    %v1527 = vrot.slane %v1519, 2
    %v1528 = vrot.slane %v1520, 2
    %v1529 = vsel %vm282, %v1527, %v1528
    %v1530 = vrot.slane %v1521, 2
    %v1531 = vrot.slane %v1522, 2
    %v1532 = vsel %vm282, %v1530, %v1531
    %1533 = vrot.lane.b32.xlu0 %v1529, 126
    %v1534 = vpop.permute.xlu0 %1533
    %1535 = vrot.lane.b32.xlu0 %v1528, 126
    %v1536 = vpop.permute.xlu0 %1535
    %1537 = vrot.lane.b32.xlu0 %v1532, 126
    %v1538 = vpop.permute.xlu0 %1537
    %1539 = vrot.lane.b32.xlu0 %v1531, 126
    %v1540 = vpop.permute.xlu0 %1539
    %v1545 = vadd.f32 %v1513, %v1534
    %v1546 = vadd.f32 %v1514, %v1536
    %v1547 = vadd.f32 %v1515, %v1538
    %v1548 = vadd.f32 %v1516, %v1540
    %v1549 = vadd.f32 %v1077, %v1311
    %v1550 = vadd.f32 %v1078, %v1312
    %v1551 = vadd.f32 %v1079, %v1313
    %v1552 = vadd.f32 %v1080, %v1314
    %v1553 = vadd.f32 %v1549, %v1545
    %v1554 = vadd.f32 %v1550, %v1546
    %v1555 = vadd.f32 %v1551, %v1547
    %v1556 = vadd.f32 %v1552, %v1548
    %s1557 = sld [smem:[#allocation6 + $0x1]]
    %v1558 = vstv %s1557
    %v1559 = vadd.f32 %v1553, %v1558
    %v1560 = vadd.f32 %v1554, %v1558
    %v1561 = vadd.f32 %v1555, %v1558
    %v1562 = vadd.f32 %v1556, %v1558
    %v1563 = vmax.f32 %v1559, 0.0
    %v1564 = vmax.f32 %v1560, 0.0
    %v1565 = vmax.f32 %v1561, 0.0
    %v1566 = vmax.f32 %v1562, 0.0
    %s1567 = sld [smem:[#allocation5 + $0x36]]
    %v1568 = vstv %s1567
    %v1569 = vmul.f32 %v111, %v1568
    %v1570 = vmul.f32 %v112, %v1568
    %v1571 = vmul.f32 %v113, %v1568
    %v1572 = vmul.f32 %v114, %v1568
    %s1573 = sld [smem:[#allocation5 + $0x37]]
    %v1574 = vstv %s1573
    %v1575 = vmul.f32 %v111, %v1574
    %v1576 = vmul.f32 %v112, %v1574
    %v1577 = vmul.f32 %v113, %v1574
    %v1578 = vmul.f32 %v114, %v1574
    %1583 = vrot.lane.b32.xlu0 %v1575, 127
    %v1584 = vpop.permute.xlu0 %1583
    %1585 = vrot.lane.b32.xlu0 %v1576, 127
    %v1586 = vpop.permute.xlu0 %1585
    %1587 = vrot.lane.b32.xlu0 %v1577, 127
    %v1588 = vpop.permute.xlu0 %1587
    %1589 = vrot.lane.b32.xlu0 %v1578, 127
    %v1590 = vpop.permute.xlu0 %1589
    %v1595 = vadd.f32 %v1569, %v1584
    %v1596 = vadd.f32 %v1570, %v1586
    %v1597 = vadd.f32 %v1571, %v1588
    %v1598 = vadd.f32 %v1572, %v1590
    %s1599 = sld [smem:[#allocation5 + $0x38]]
    %v1600 = vstv %s1599
    %v1601 = vmul.f32 %v111, %v1600
    %v1602 = vmul.f32 %v112, %v1600
    %v1603 = vmul.f32 %v113, %v1600
    %v1604 = vmul.f32 %v114, %v1600
    %1609 = vrot.lane.b32.xlu0 %v1601, 126
    %v1610 = vpop.permute.xlu0 %1609
    %1611 = vrot.lane.b32.xlu0 %v1602, 126
    %v1612 = vpop.permute.xlu0 %1611
    %1613 = vrot.lane.b32.xlu0 %v1603, 126
    %v1614 = vpop.permute.xlu0 %1613
    %1615 = vrot.lane.b32.xlu0 %v1604, 126
    %v1616 = vpop.permute.xlu0 %1615
    %v1621 = vadd.f32 %v1595, %v1610
    %v1622 = vadd.f32 %v1596, %v1612
    %v1623 = vadd.f32 %v1597, %v1614
    %v1624 = vadd.f32 %v1598, %v1616
    %s1625 = sld [smem:[#allocation5 + $0x39]]
    %v1626 = vstv %s1625
    %v1627 = vmul.f32 %v111, %v1626
    %v1628 = vmul.f32 %v112, %v1626
    %v1629 = vmul.f32 %v113, %v1626
    %v1630 = vmul.f32 %v114, %v1626
    %v1635 = vrot.slane %v1627, 1
    %v1636 = vrot.slane %v1628, 1
    %v1637 = vsel %vm193, %v1635, %v1636
    %v1638 = vrot.slane %v1629, 1
    %v1639 = vrot.slane %v1630, 1
    %v1640 = vsel %vm193, %v1638, %v1639
    %v1645 = vadd.f32 %v1621, %v1637
    %v1646 = vadd.f32 %v1622, %v1636
    %v1647 = vadd.f32 %v1623, %v1640
    %v1648 = vadd.f32 %v1624, %v1639
    %s1649 = sld [smem:[#allocation5 + $0x3a]]
    %v1650 = vstv %s1649
    %v1651 = vmul.f32 %v111, %v1650
    %v1652 = vmul.f32 %v112, %v1650
    %v1653 = vmul.f32 %v113, %v1650
    %v1654 = vmul.f32 %v114, %v1650
    %v1659 = vrot.slane %v1651, 1
    %v1660 = vrot.slane %v1652, 1
    %v1661 = vsel %vm193, %v1659, %v1660
    %v1662 = vrot.slane %v1653, 1
    %v1663 = vrot.slane %v1654, 1
    %v1664 = vsel %vm193, %v1662, %v1663
    %1665 = vrot.lane.b32.xlu0 %v1661, 127
    %v1666 = vpop.permute.xlu0 %1665
    %1667 = vrot.lane.b32.xlu0 %v1660, 127
    %v1668 = vpop.permute.xlu0 %1667
    %1669 = vrot.lane.b32.xlu0 %v1664, 127
    %v1670 = vpop.permute.xlu0 %1669
    %1671 = vrot.lane.b32.xlu0 %v1663, 127
    %v1672 = vpop.permute.xlu0 %1671
    %v1677 = vadd.f32 %v1645, %v1666
    %v1678 = vadd.f32 %v1646, %v1668
    %v1679 = vadd.f32 %v1647, %v1670
    %v1680 = vadd.f32 %v1648, %v1672
    %s1681 = sld [smem:[#allocation5 + $0x3b]]
    %v1682 = vstv %s1681
    %v1683 = vmul.f32 %v111, %v1682
    %v1684 = vmul.f32 %v112, %v1682
    %v1685 = vmul.f32 %v113, %v1682
    %v1686 = vmul.f32 %v114, %v1682
    %v1691 = vrot.slane %v1683, 1
    %v1692 = vrot.slane %v1684, 1
    %v1693 = vsel %vm193, %v1691, %v1692
    %v1694 = vrot.slane %v1685, 1
    %v1695 = vrot.slane %v1686, 1
    %v1696 = vsel %vm193, %v1694, %v1695
    %1697 = vrot.lane.b32.xlu0 %v1693, 126
    %v1698 = vpop.permute.xlu0 %1697
    %1699 = vrot.lane.b32.xlu0 %v1692, 126
    %v1700 = vpop.permute.xlu0 %1699
    %1701 = vrot.lane.b32.xlu0 %v1696, 126
    %v1702 = vpop.permute.xlu0 %1701
    %1703 = vrot.lane.b32.xlu0 %v1695, 126
    %v1704 = vpop.permute.xlu0 %1703
    %v1709 = vadd.f32 %v1677, %v1698
    %v1710 = vadd.f32 %v1678, %v1700
    %v1711 = vadd.f32 %v1679, %v1702
    %v1712 = vadd.f32 %v1680, %v1704
    %s1713 = sld [smem:[#allocation5 + $0x3c]]
    %v1714 = vstv %s1713
    %v1715 = vmul.f32 %v111, %v1714
    %v1716 = vmul.f32 %v112, %v1714
    %v1717 = vmul.f32 %v113, %v1714
    %v1718 = vmul.f32 %v114, %v1714
    %v1723 = vrot.slane %v1715, 2
    %v1724 = vrot.slane %v1716, 2
    %v1725 = vsel %vm282, %v1723, %v1724
    %v1726 = vrot.slane %v1717, 2
    %v1727 = vrot.slane %v1718, 2
    %v1728 = vsel %vm282, %v1726, %v1727
    %v1733 = vadd.f32 %v1709, %v1725
    %v1734 = vadd.f32 %v1710, %v1724
    %v1735 = vadd.f32 %v1711, %v1728
    %v1736 = vadd.f32 %v1712, %v1727
    %s1737 = sld [smem:[#allocation5 + $0x3d]]
    %v1738 = vstv %s1737
    %v1739 = vmul.f32 %v111, %v1738
    %v1740 = vmul.f32 %v112, %v1738
    %v1741 = vmul.f32 %v113, %v1738
    %v1742 = vmul.f32 %v114, %v1738
    %v1747 = vrot.slane %v1739, 2
    %v1748 = vrot.slane %v1740, 2
    %v1749 = vsel %vm282, %v1747, %v1748
    %v1750 = vrot.slane %v1741, 2
    %v1751 = vrot.slane %v1742, 2
    %v1752 = vsel %vm282, %v1750, %v1751
    %1753 = vrot.lane.b32.xlu0 %v1749, 127
    %v1754 = vpop.permute.xlu0 %1753
    %1755 = vrot.lane.b32.xlu0 %v1748, 127
    %v1756 = vpop.permute.xlu0 %1755
    %1757 = vrot.lane.b32.xlu0 %v1752, 127
    %v1758 = vpop.permute.xlu0 %1757
    %1759 = vrot.lane.b32.xlu0 %v1751, 127
    %v1760 = vpop.permute.xlu0 %1759
    %v1765 = vadd.f32 %v1733, %v1754
    %v1766 = vadd.f32 %v1734, %v1756
    %v1767 = vadd.f32 %v1735, %v1758
    %v1768 = vadd.f32 %v1736, %v1760
    %s1769 = sld [smem:[#allocation5 + $0x3e]]
    %v1770 = vstv %s1769
    %v1771 = vmul.f32 %v111, %v1770
    %v1772 = vmul.f32 %v112, %v1770
    %v1773 = vmul.f32 %v113, %v1770
    %v1774 = vmul.f32 %v114, %v1770
    %v1779 = vrot.slane %v1771, 2
    %v1780 = vrot.slane %v1772, 2
    %v1781 = vsel %vm282, %v1779, %v1780
    %v1782 = vrot.slane %v1773, 2
    %v1783 = vrot.slane %v1774, 2
    %v1784 = vsel %vm282, %v1782, %v1783
    %1785 = vrot.lane.b32.xlu0 %v1781, 126
    %v1786 = vpop.permute.xlu0 %1785
    %1787 = vrot.lane.b32.xlu0 %v1780, 126
    %v1788 = vpop.permute.xlu0 %1787
    %1789 = vrot.lane.b32.xlu0 %v1784, 126
    %v1790 = vpop.permute.xlu0 %1789
    %1791 = vrot.lane.b32.xlu0 %v1783, 126
    %v1792 = vpop.permute.xlu0 %1791
    %v1797 = vadd.f32 %v1765, %v1786
    %v1798 = vadd.f32 %v1766, %v1788
    %v1799 = vadd.f32 %v1767, %v1790
    %v1800 = vadd.f32 %v1768, %v1792
    %s1801 = sld [smem:[#allocation5 + $0x3f]]
    %v1802 = vstv %s1801
    %v1803 = vmul.f32 %v116, %v1802
    %v1804 = vmul.f32 %v117, %v1802
    %v1805 = vmul.f32 %v118, %v1802
    %v1806 = vmul.f32 %v119, %v1802
    %s1807 = sld [smem:[#allocation5 + $0x40]]
    %v1808 = vstv %s1807
    %v1809 = vmul.f32 %v116, %v1808
    %v1810 = vmul.f32 %v117, %v1808
    %v1811 = vmul.f32 %v118, %v1808
    %v1812 = vmul.f32 %v119, %v1808
    %1817 = vrot.lane.b32.xlu0 %v1809, 127
    %v1818 = vpop.permute.xlu0 %1817
    %1819 = vrot.lane.b32.xlu0 %v1810, 127
    %v1820 = vpop.permute.xlu0 %1819
    %1821 = vrot.lane.b32.xlu0 %v1811, 127
    %v1822 = vpop.permute.xlu0 %1821
    %1823 = vrot.lane.b32.xlu0 %v1812, 127
    %v1824 = vpop.permute.xlu0 %1823
    %v1829 = vadd.f32 %v1803, %v1818
    %v1830 = vadd.f32 %v1804, %v1820
    %v1831 = vadd.f32 %v1805, %v1822
    %v1832 = vadd.f32 %v1806, %v1824
    %s1833 = sld [smem:[#allocation5 + $0x41]]
    %v1834 = vstv %s1833
    %v1835 = vmul.f32 %v116, %v1834
    %v1836 = vmul.f32 %v117, %v1834
    %v1837 = vmul.f32 %v118, %v1834
    %v1838 = vmul.f32 %v119, %v1834
    %1843 = vrot.lane.b32.xlu0 %v1835, 126
    %v1844 = vpop.permute.xlu0 %1843
    %1845 = vrot.lane.b32.xlu0 %v1836, 126
    %v1846 = vpop.permute.xlu0 %1845
    %1847 = vrot.lane.b32.xlu0 %v1837, 126
    %v1848 = vpop.permute.xlu0 %1847
    %1849 = vrot.lane.b32.xlu0 %v1838, 126
    %v1850 = vpop.permute.xlu0 %1849
    %v1855 = vadd.f32 %v1829, %v1844
    %v1856 = vadd.f32 %v1830, %v1846
    %v1857 = vadd.f32 %v1831, %v1848
    %v1858 = vadd.f32 %v1832, %v1850
    %s1859 = sld [smem:[#allocation5 + $0x42]]
    %v1860 = vstv %s1859
    %v1861 = vmul.f32 %v116, %v1860
    %v1862 = vmul.f32 %v117, %v1860
    %v1863 = vmul.f32 %v118, %v1860
    %v1864 = vmul.f32 %v119, %v1860
    %v1869 = vrot.slane %v1861, 1
    %v1870 = vrot.slane %v1862, 1
    %v1871 = vsel %vm193, %v1869, %v1870
    %v1872 = vrot.slane %v1863, 1
    %v1873 = vrot.slane %v1864, 1
    %v1874 = vsel %vm193, %v1872, %v1873
    %v1879 = vadd.f32 %v1855, %v1871
    %v1880 = vadd.f32 %v1856, %v1870
    %v1881 = vadd.f32 %v1857, %v1874
    %v1882 = vadd.f32 %v1858, %v1873
    %s1883 = sld [smem:[#allocation5 + $0x43]]
    %v1884 = vstv %s1883
    %v1885 = vmul.f32 %v116, %v1884
    %v1886 = vmul.f32 %v117, %v1884
    %v1887 = vmul.f32 %v118, %v1884
    %v1888 = vmul.f32 %v119, %v1884
    %v1893 = vrot.slane %v1885, 1
    %v1894 = vrot.slane %v1886, 1
    %v1895 = vsel %vm193, %v1893, %v1894
    %v1896 = vrot.slane %v1887, 1
    %v1897 = vrot.slane %v1888, 1
    %v1898 = vsel %vm193, %v1896, %v1897
    %1899 = vrot.lane.b32.xlu0 %v1895, 127
    %v1900 = vpop.permute.xlu0 %1899
    %1901 = vrot.lane.b32.xlu0 %v1894, 127
    %v1902 = vpop.permute.xlu0 %1901
    %1903 = vrot.lane.b32.xlu0 %v1898, 127
    %v1904 = vpop.permute.xlu0 %1903
    %1905 = vrot.lane.b32.xlu0 %v1897, 127
    %v1906 = vpop.permute.xlu0 %1905
    %v1911 = vadd.f32 %v1879, %v1900
    %v1912 = vadd.f32 %v1880, %v1902
    %v1913 = vadd.f32 %v1881, %v1904
    %v1914 = vadd.f32 %v1882, %v1906
    %s1915 = sld [smem:[#allocation5 + $0x44]]
    %v1916 = vstv %s1915
    %v1917 = vmul.f32 %v116, %v1916
    %v1918 = vmul.f32 %v117, %v1916
    %v1919 = vmul.f32 %v118, %v1916
    %v1920 = vmul.f32 %v119, %v1916
    %v1925 = vrot.slane %v1917, 1
    %v1926 = vrot.slane %v1918, 1
    %v1927 = vsel %vm193, %v1925, %v1926
    %v1928 = vrot.slane %v1919, 1
    %v1929 = vrot.slane %v1920, 1
    %v1930 = vsel %vm193, %v1928, %v1929
    %1931 = vrot.lane.b32.xlu0 %v1927, 126
    %v1932 = vpop.permute.xlu0 %1931
    %1933 = vrot.lane.b32.xlu0 %v1926, 126
    %v1934 = vpop.permute.xlu0 %1933
    %1935 = vrot.lane.b32.xlu0 %v1930, 126
    %v1936 = vpop.permute.xlu0 %1935
    %1937 = vrot.lane.b32.xlu0 %v1929, 126
    %v1938 = vpop.permute.xlu0 %1937
    %v1943 = vadd.f32 %v1911, %v1932
    %v1944 = vadd.f32 %v1912, %v1934
    %v1945 = vadd.f32 %v1913, %v1936
    %v1946 = vadd.f32 %v1914, %v1938
    %s1947 = sld [smem:[#allocation5 + $0x45]]
    %v1948 = vstv %s1947
    %v1949 = vmul.f32 %v116, %v1948
    %v1950 = vmul.f32 %v117, %v1948
    %v1951 = vmul.f32 %v118, %v1948
    %v1952 = vmul.f32 %v119, %v1948
    %v1957 = vrot.slane %v1949, 2
    %v1958 = vrot.slane %v1950, 2
    %v1959 = vsel %vm282, %v1957, %v1958
    %v1960 = vrot.slane %v1951, 2
    %v1961 = vrot.slane %v1952, 2
    %v1962 = vsel %vm282, %v1960, %v1961
    %v1967 = vadd.f32 %v1943, %v1959
    %v1968 = vadd.f32 %v1944, %v1958
    %v1969 = vadd.f32 %v1945, %v1962
    %v1970 = vadd.f32 %v1946, %v1961
    %s1971 = sld [smem:[#allocation5 + $0x46]]
    %v1972 = vstv %s1971
    %v1973 = vmul.f32 %v116, %v1972
    %v1974 = vmul.f32 %v117, %v1972
    %v1975 = vmul.f32 %v118, %v1972
    %v1976 = vmul.f32 %v119, %v1972
    %v1981 = vrot.slane %v1973, 2
    %v1982 = vrot.slane %v1974, 2
    %v1983 = vsel %vm282, %v1981, %v1982
    %v1984 = vrot.slane %v1975, 2
    %v1985 = vrot.slane %v1976, 2
    %v1986 = vsel %vm282, %v1984, %v1985
    %1987 = vrot.lane.b32.xlu0 %v1983, 127
    %v1988 = vpop.permute.xlu0 %1987
    %1989 = vrot.lane.b32.xlu0 %v1982, 127
    %v1990 = vpop.permute.xlu0 %1989
    %1991 = vrot.lane.b32.xlu0 %v1986, 127
    %v1992 = vpop.permute.xlu0 %1991
    %1993 = vrot.lane.b32.xlu0 %v1985, 127
    %v1994 = vpop.permute.xlu0 %1993
    %v1999 = vadd.f32 %v1967, %v1988
    %v2000 = vadd.f32 %v1968, %v1990
    %v2001 = vadd.f32 %v1969, %v1992
    %v2002 = vadd.f32 %v1970, %v1994
    %s2003 = sld [smem:[#allocation5 + $0x47]]
    %v2004 = vstv %s2003
    %v2005 = vmul.f32 %v116, %v2004
    %v2006 = vmul.f32 %v117, %v2004
    %v2007 = vmul.f32 %v118, %v2004
    %v2008 = vmul.f32 %v119, %v2004
    %v2013 = vrot.slane %v2005, 2
    %v2014 = vrot.slane %v2006, 2
    %v2015 = vsel %vm282, %v2013, %v2014
    %v2016 = vrot.slane %v2007, 2
    %v2017 = vrot.slane %v2008, 2
    %v2018 = vsel %vm282, %v2016, %v2017
    %2019 = vrot.lane.b32.xlu0 %v2015, 126
    %v2020 = vpop.permute.xlu0 %2019
    %2021 = vrot.lane.b32.xlu0 %v2014, 126
    %v2022 = vpop.permute.xlu0 %2021
    %2023 = vrot.lane.b32.xlu0 %v2018, 126
    %v2024 = vpop.permute.xlu0 %2023
    %2025 = vrot.lane.b32.xlu0 %v2017, 126
    %v2026 = vpop.permute.xlu0 %2025
    %v2031 = vadd.f32 %v1999, %v2020
    %v2032 = vadd.f32 %v2000, %v2022
    %v2033 = vadd.f32 %v2001, %v2024
    %v2034 = vadd.f32 %v2002, %v2026
    %s2035 = sld [smem:[#allocation5 + $0x48]]
    %v2036 = vstv %s2035
    %v2037 = vmul.f32 %v121, %v2036
    %v2038 = vmul.f32 %v122, %v2036
    %v2039 = vmul.f32 %v123, %v2036
    %v2040 = vmul.f32 %v124, %v2036
    %s2041 = sld [smem:[#allocation5 + $0x49]]
    %v2042 = vstv %s2041
    %v2043 = vmul.f32 %v121, %v2042
    %v2044 = vmul.f32 %v122, %v2042
    %v2045 = vmul.f32 %v123, %v2042
    %v2046 = vmul.f32 %v124, %v2042
    %2051 = vrot.lane.b32.xlu0 %v2043, 127
    %v2052 = vpop.permute.xlu0 %2051
    %2053 = vrot.lane.b32.xlu0 %v2044, 127
    %v2054 = vpop.permute.xlu0 %2053
    %2055 = vrot.lane.b32.xlu0 %v2045, 127
    %v2056 = vpop.permute.xlu0 %2055
    %2057 = vrot.lane.b32.xlu0 %v2046, 127
    %v2058 = vpop.permute.xlu0 %2057
    %v2063 = vadd.f32 %v2037, %v2052
    %v2064 = vadd.f32 %v2038, %v2054
    %v2065 = vadd.f32 %v2039, %v2056
    %v2066 = vadd.f32 %v2040, %v2058
    %s2067 = sld [smem:[#allocation5 + $0x4a]]
    %v2068 = vstv %s2067
    %v2069 = vmul.f32 %v121, %v2068
    %v2070 = vmul.f32 %v122, %v2068
    %v2071 = vmul.f32 %v123, %v2068
    %v2072 = vmul.f32 %v124, %v2068
    %2077 = vrot.lane.b32.xlu0 %v2069, 126
    %v2078 = vpop.permute.xlu0 %2077
    %2079 = vrot.lane.b32.xlu0 %v2070, 126
    %v2080 = vpop.permute.xlu0 %2079
    %2081 = vrot.lane.b32.xlu0 %v2071, 126
    %v2082 = vpop.permute.xlu0 %2081
    %2083 = vrot.lane.b32.xlu0 %v2072, 126
    %v2084 = vpop.permute.xlu0 %2083
    %v2089 = vadd.f32 %v2063, %v2078
    %v2090 = vadd.f32 %v2064, %v2080
    %v2091 = vadd.f32 %v2065, %v2082
    %v2092 = vadd.f32 %v2066, %v2084
    %s2093 = sld [smem:[#allocation5 + $0x4b]]
    %v2094 = vstv %s2093
    %v2095 = vmul.f32 %v121, %v2094
    %v2096 = vmul.f32 %v122, %v2094
    %v2097 = vmul.f32 %v123, %v2094
    %v2098 = vmul.f32 %v124, %v2094
    %v2103 = vrot.slane %v2095, 1
    %v2104 = vrot.slane %v2096, 1
    %v2105 = vsel %vm193, %v2103, %v2104
    %v2106 = vrot.slane %v2097, 1
    %v2107 = vrot.slane %v2098, 1
    %v2108 = vsel %vm193, %v2106, %v2107
    %v2113 = vadd.f32 %v2089, %v2105
    %v2114 = vadd.f32 %v2090, %v2104
    %v2115 = vadd.f32 %v2091, %v2108
    %v2116 = vadd.f32 %v2092, %v2107
    %s2117 = sld [smem:[#allocation5 + $0x4c]]
    %v2118 = vstv %s2117
    %v2119 = vmul.f32 %v121, %v2118
    %v2120 = vmul.f32 %v122, %v2118
    %v2121 = vmul.f32 %v123, %v2118
    %v2122 = vmul.f32 %v124, %v2118
    %v2127 = vrot.slane %v2119, 1
    %v2128 = vrot.slane %v2120, 1
    %v2129 = vsel %vm193, %v2127, %v2128
    %v2130 = vrot.slane %v2121, 1
    %v2131 = vrot.slane %v2122, 1
    %v2132 = vsel %vm193, %v2130, %v2131
    %2133 = vrot.lane.b32.xlu0 %v2129, 127
    %v2134 = vpop.permute.xlu0 %2133
    %2135 = vrot.lane.b32.xlu0 %v2128, 127
    %v2136 = vpop.permute.xlu0 %2135
    %2137 = vrot.lane.b32.xlu0 %v2132, 127
    %v2138 = vpop.permute.xlu0 %2137
    %2139 = vrot.lane.b32.xlu0 %v2131, 127
    %v2140 = vpop.permute.xlu0 %2139
    %v2145 = vadd.f32 %v2113, %v2134
    %v2146 = vadd.f32 %v2114, %v2136
    %v2147 = vadd.f32 %v2115, %v2138
    %v2148 = vadd.f32 %v2116, %v2140
    %s2149 = sld [smem:[#allocation5 + $0x4d]]
    %v2150 = vstv %s2149
    %v2151 = vmul.f32 %v121, %v2150
    %v2152 = vmul.f32 %v122, %v2150
    %v2153 = vmul.f32 %v123, %v2150
    %v2154 = vmul.f32 %v124, %v2150
    %v2159 = vrot.slane %v2151, 1
    %v2160 = vrot.slane %v2152, 1
    %v2161 = vsel %vm193, %v2159, %v2160
    %v2162 = vrot.slane %v2153, 1
    %v2163 = vrot.slane %v2154, 1
    %v2164 = vsel %vm193, %v2162, %v2163
    %2165 = vrot.lane.b32.xlu0 %v2161, 126
    %v2166 = vpop.permute.xlu0 %2165
    %2167 = vrot.lane.b32.xlu0 %v2160, 126
    %v2168 = vpop.permute.xlu0 %2167
    %2169 = vrot.lane.b32.xlu0 %v2164, 126
    %v2170 = vpop.permute.xlu0 %2169
    %2171 = vrot.lane.b32.xlu0 %v2163, 126
    %v2172 = vpop.permute.xlu0 %2171
    %v2177 = vadd.f32 %v2145, %v2166
    %v2178 = vadd.f32 %v2146, %v2168
    %v2179 = vadd.f32 %v2147, %v2170
    %v2180 = vadd.f32 %v2148, %v2172
    %s2181 = sld [smem:[#allocation5 + $0x4e]]
    %v2182 = vstv %s2181
    %v2183 = vmul.f32 %v121, %v2182
    %v2184 = vmul.f32 %v122, %v2182
    %v2185 = vmul.f32 %v123, %v2182
    %v2186 = vmul.f32 %v124, %v2182
    %v2191 = vrot.slane %v2183, 2
    %v2192 = vrot.slane %v2184, 2
    %v2193 = vsel %vm282, %v2191, %v2192
    %v2194 = vrot.slane %v2185, 2
    %v2195 = vrot.slane %v2186, 2
    %v2196 = vsel %vm282, %v2194, %v2195
    %v2201 = vadd.f32 %v2177, %v2193
    %v2202 = vadd.f32 %v2178, %v2192
    %v2203 = vadd.f32 %v2179, %v2196
    %v2204 = vadd.f32 %v2180, %v2195
    %s2205 = sld [smem:[#allocation5 + $0x4f]]
    %v2206 = vstv %s2205
    %v2207 = vmul.f32 %v121, %v2206
    %v2208 = vmul.f32 %v122, %v2206
    %v2209 = vmul.f32 %v123, %v2206
    %v2210 = vmul.f32 %v124, %v2206
    %v2215 = vrot.slane %v2207, 2
    %v2216 = vrot.slane %v2208, 2
    %v2217 = vsel %vm282, %v2215, %v2216
    %v2218 = vrot.slane %v2209, 2
    %v2219 = vrot.slane %v2210, 2
    %v2220 = vsel %vm282, %v2218, %v2219
    %2221 = vrot.lane.b32.xlu0 %v2217, 127
    %v2222 = vpop.permute.xlu0 %2221
    %2223 = vrot.lane.b32.xlu0 %v2216, 127
    %v2224 = vpop.permute.xlu0 %2223
    %2225 = vrot.lane.b32.xlu0 %v2220, 127
    %v2226 = vpop.permute.xlu0 %2225
    %2227 = vrot.lane.b32.xlu0 %v2219, 127
    %v2228 = vpop.permute.xlu0 %2227
    %v2233 = vadd.f32 %v2201, %v2222
    %v2234 = vadd.f32 %v2202, %v2224
    %v2235 = vadd.f32 %v2203, %v2226
    %v2236 = vadd.f32 %v2204, %v2228
    %s2237 = sld [smem:[#allocation5 + $0x50]]
    %v2238 = vstv %s2237
    %v2239 = vmul.f32 %v121, %v2238
    %v2240 = vmul.f32 %v122, %v2238
    %v2241 = vmul.f32 %v123, %v2238
    %v2242 = vmul.f32 %v124, %v2238
    %v2247 = vrot.slane %v2239, 2
    %v2248 = vrot.slane %v2240, 2
    %v2249 = vsel %vm282, %v2247, %v2248
    %v2250 = vrot.slane %v2241, 2
    %v2251 = vrot.slane %v2242, 2
    %v2252 = vsel %vm282, %v2250, %v2251
    %2253 = vrot.lane.b32.xlu0 %v2249, 126
    %v2254 = vpop.permute.xlu0 %2253
    %2255 = vrot.lane.b32.xlu0 %v2248, 126
    %v2256 = vpop.permute.xlu0 %2255
    %2257 = vrot.lane.b32.xlu0 %v2252, 126
    %v2258 = vpop.permute.xlu0 %2257
    %2259 = vrot.lane.b32.xlu0 %v2251, 126
    %v2260 = vpop.permute.xlu0 %2259
    %v2265 = vadd.f32 %v2233, %v2254
    %v2266 = vadd.f32 %v2234, %v2256
    %v2267 = vadd.f32 %v2235, %v2258
    %v2268 = vadd.f32 %v2236, %v2260
    %v2269 = vadd.f32 %v1797, %v2031
    %v2270 = vadd.f32 %v1798, %v2032
    %v2271 = vadd.f32 %v1799, %v2033
    %v2272 = vadd.f32 %v1800, %v2034
    %v2273 = vadd.f32 %v2269, %v2265
    %v2274 = vadd.f32 %v2270, %v2266
    %v2275 = vadd.f32 %v2271, %v2267
    %v2276 = vadd.f32 %v2272, %v2268
    %s2277 = sld [smem:[#allocation6 + $0x2]]
    %v2278 = vstv %s2277
    %v2279 = vadd.f32 %v2273, %v2278
    %v2280 = vadd.f32 %v2274, %v2278
    %v2281 = vadd.f32 %v2275, %v2278
    %v2282 = vadd.f32 %v2276, %v2278
    %v2283 = vmax.f32 %v2279, 0.0
    %v2284 = vmax.f32 %v2280, 0.0
    %v2285 = vmax.f32 %v2281, 0.0
    %v2286 = vmax.f32 %v2282, 0.0
    %s2287 = sld [smem:[#allocation8]]
    %v2288 = vstv %s2287
    %v2289 = vmul.f32 %v843, %v2288
    %v2290 = vmul.f32 %v844, %v2288
    %v2291 = vmul.f32 %v845, %v2288
    %v2292 = vmul.f32 %v846, %v2288
    %s2293 = sld [smem:[#allocation8 + $0x1]]
    %v2294 = vstv %s2293
    %v2295 = vmul.f32 %v843, %v2294
    %v2296 = vmul.f32 %v844, %v2294
    %v2297 = vmul.f32 %v845, %v2294
    %v2298 = vmul.f32 %v846, %v2294
    %2303 = vrot.lane.b32.xlu0 %v2295, 127
    %v2304 = vpop.permute.xlu0 %2303
    %2305 = vrot.lane.b32.xlu0 %v2296, 127
    %v2306 = vpop.permute.xlu0 %2305
    %2307 = vrot.lane.b32.xlu0 %v2297, 127
    %v2308 = vpop.permute.xlu0 %2307
    %2309 = vrot.lane.b32.xlu0 %v2298, 127
    %v2310 = vpop.permute.xlu0 %2309
    %v2315 = vadd.f32 %v2289, %v2304
    %v2316 = vadd.f32 %v2290, %v2306
    %v2317 = vadd.f32 %v2291, %v2308
    %v2318 = vadd.f32 %v2292, %v2310
    %s2319 = sld [smem:[#allocation8 + $0x2]]
    %v2320 = vstv %s2319
    %v2321 = vmul.f32 %v843, %v2320
    %v2322 = vmul.f32 %v844, %v2320
    %v2323 = vmul.f32 %v845, %v2320
    %v2324 = vmul.f32 %v846, %v2320
    %2329 = vrot.lane.b32.xlu0 %v2321, 126
    %v2330 = vpop.permute.xlu0 %2329
    %2331 = vrot.lane.b32.xlu0 %v2322, 126
    %v2332 = vpop.permute.xlu0 %2331
    %2333 = vrot.lane.b32.xlu0 %v2323, 126
    %v2334 = vpop.permute.xlu0 %2333
    %2335 = vrot.lane.b32.xlu0 %v2324, 126
    %v2336 = vpop.permute.xlu0 %2335
    %v2341 = vadd.f32 %v2315, %v2330
    %v2342 = vadd.f32 %v2316, %v2332
    %v2343 = vadd.f32 %v2317, %v2334
    %v2344 = vadd.f32 %v2318, %v2336
    %s2345 = sld [smem:[#allocation8 + $0x3]]
    %v2346 = vstv %s2345
    %v2347 = vmul.f32 %v843, %v2346
    %v2348 = vmul.f32 %v844, %v2346
    %v2349 = vmul.f32 %v845, %v2346
    %v2350 = vmul.f32 %v846, %v2346
    %v2355 = vrot.slane %v2347, 1
    %v2356 = vrot.slane %v2348, 1
    %v2357 = vsel %vm193, %v2355, %v2356
    %v2358 = vrot.slane %v2349, 1
    %v2359 = vrot.slane %v2350, 1
    %v2360 = vsel %vm193, %v2358, %v2359
    %v2365 = vadd.f32 %v2341, %v2357
    %v2366 = vadd.f32 %v2342, %v2356
    %v2367 = vadd.f32 %v2343, %v2360
    %v2368 = vadd.f32 %v2344, %v2359
    %s2369 = sld [smem:[#allocation8 + $0x4]]
    %v2370 = vstv %s2369
    %v2371 = vmul.f32 %v843, %v2370
    %v2372 = vmul.f32 %v844, %v2370
    %v2373 = vmul.f32 %v845, %v2370
    %v2374 = vmul.f32 %v846, %v2370
    %v2379 = vrot.slane %v2371, 1
    %v2380 = vrot.slane %v2372, 1
    %v2381 = vsel %vm193, %v2379, %v2380
    %v2382 = vrot.slane %v2373, 1
    %v2383 = vrot.slane %v2374, 1
    %v2384 = vsel %vm193, %v2382, %v2383
    %2385 = vrot.lane.b32.xlu0 %v2381, 127
    %v2386 = vpop.permute.xlu0 %2385
    %2387 = vrot.lane.b32.xlu0 %v2380, 127
    %v2388 = vpop.permute.xlu0 %2387
    %2389 = vrot.lane.b32.xlu0 %v2384, 127
    %v2390 = vpop.permute.xlu0 %2389
    %2391 = vrot.lane.b32.xlu0 %v2383, 127
    %v2392 = vpop.permute.xlu0 %2391
    %v2397 = vadd.f32 %v2365, %v2386
    %v2398 = vadd.f32 %v2366, %v2388
    %v2399 = vadd.f32 %v2367, %v2390
    %v2400 = vadd.f32 %v2368, %v2392
    %s2401 = sld [smem:[#allocation8 + $0x5]]
    %v2402 = vstv %s2401
    %v2403 = vmul.f32 %v843, %v2402
    %v2404 = vmul.f32 %v844, %v2402
    %v2405 = vmul.f32 %v845, %v2402
    %v2406 = vmul.f32 %v846, %v2402
    %v2411 = vrot.slane %v2403, 1
    %v2412 = vrot.slane %v2404, 1
    %v2413 = vsel %vm193, %v2411, %v2412
    %v2414 = vrot.slane %v2405, 1
    %v2415 = vrot.slane %v2406, 1
    %v2416 = vsel %vm193, %v2414, %v2415
    %2417 = vrot.lane.b32.xlu0 %v2413, 126
    %v2418 = vpop.permute.xlu0 %2417
    %2419 = vrot.lane.b32.xlu0 %v2412, 126
    %v2420 = vpop.permute.xlu0 %2419
    %2421 = vrot.lane.b32.xlu0 %v2416, 126
    %v2422 = vpop.permute.xlu0 %2421
    %2423 = vrot.lane.b32.xlu0 %v2415, 126
    %v2424 = vpop.permute.xlu0 %2423
    %v2429 = vadd.f32 %v2397, %v2418
    %v2430 = vadd.f32 %v2398, %v2420
    %v2431 = vadd.f32 %v2399, %v2422
    %v2432 = vadd.f32 %v2400, %v2424
    %s2433 = sld [smem:[#allocation8 + $0x6]]
    %v2434 = vstv %s2433
    %v2435 = vmul.f32 %v843, %v2434
    %v2436 = vmul.f32 %v844, %v2434
    %v2437 = vmul.f32 %v845, %v2434
    %v2438 = vmul.f32 %v846, %v2434
    %v2443 = vrot.slane %v2435, 2
    %v2444 = vrot.slane %v2436, 2
    %v2445 = vsel %vm282, %v2443, %v2444
    %v2446 = vrot.slane %v2437, 2
    %v2447 = vrot.slane %v2438, 2
    %v2448 = vsel %vm282, %v2446, %v2447
    %v2453 = vadd.f32 %v2429, %v2445
    %v2454 = vadd.f32 %v2430, %v2444
    %v2455 = vadd.f32 %v2431, %v2448
    %v2456 = vadd.f32 %v2432, %v2447
    %s2457 = sld [smem:[#allocation8 + $0x7]]
    %v2458 = vstv %s2457
    %v2459 = vmul.f32 %v843, %v2458
    %v2460 = vmul.f32 %v844, %v2458
    %v2461 = vmul.f32 %v845, %v2458
    %v2462 = vmul.f32 %v846, %v2458
    %v2467 = vrot.slane %v2459, 2
    %v2468 = vrot.slane %v2460, 2
    %v2469 = vsel %vm282, %v2467, %v2468
    %v2470 = vrot.slane %v2461, 2
    %v2471 = vrot.slane %v2462, 2
    %v2472 = vsel %vm282, %v2470, %v2471
    %2473 = vrot.lane.b32.xlu0 %v2469, 127
    %v2474 = vpop.permute.xlu0 %2473
    %2475 = vrot.lane.b32.xlu0 %v2468, 127
    %v2476 = vpop.permute.xlu0 %2475
    %2477 = vrot.lane.b32.xlu0 %v2472, 127
    %v2478 = vpop.permute.xlu0 %2477
    %2479 = vrot.lane.b32.xlu0 %v2471, 127
    %v2480 = vpop.permute.xlu0 %2479
    %v2485 = vadd.f32 %v2453, %v2474
    %v2486 = vadd.f32 %v2454, %v2476
    %v2487 = vadd.f32 %v2455, %v2478
    %v2488 = vadd.f32 %v2456, %v2480
    %s2489 = sld [smem:[#allocation8 + $0x8]]
    %v2490 = vstv %s2489
    %v2491 = vmul.f32 %v843, %v2490
    %v2492 = vmul.f32 %v844, %v2490
    %v2493 = vmul.f32 %v845, %v2490
    %v2494 = vmul.f32 %v846, %v2490
    %v2499 = vrot.slane %v2491, 2
    %v2500 = vrot.slane %v2492, 2
    %v2501 = vsel %vm282, %v2499, %v2500
    %v2502 = vrot.slane %v2493, 2
    %v2503 = vrot.slane %v2494, 2
    %v2504 = vsel %vm282, %v2502, %v2503
    %2505 = vrot.lane.b32.xlu0 %v2501, 126
    %v2506 = vpop.permute.xlu0 %2505
    %2507 = vrot.lane.b32.xlu0 %v2500, 126
    %v2508 = vpop.permute.xlu0 %2507
    %2509 = vrot.lane.b32.xlu0 %v2504, 126
    %v2510 = vpop.permute.xlu0 %2509
    %2511 = vrot.lane.b32.xlu0 %v2503, 126
    %v2512 = vpop.permute.xlu0 %2511
    %v2517 = vadd.f32 %v2485, %v2506
    %v2518 = vadd.f32 %v2486, %v2508
    %v2519 = vadd.f32 %v2487, %v2510
    %v2520 = vadd.f32 %v2488, %v2512
    %s2521 = sld [smem:[#allocation8 + $0x9]]
    %v2522 = vstv %s2521
    %v2523 = vmul.f32 %v1563, %v2522
    %v2524 = vmul.f32 %v1564, %v2522
    %v2525 = vmul.f32 %v1565, %v2522
    %v2526 = vmul.f32 %v1566, %v2522
    %s2527 = sld [smem:[#allocation8 + $0xa]]
    %v2528 = vstv %s2527
    %v2529 = vmul.f32 %v1563, %v2528
    %v2530 = vmul.f32 %v1564, %v2528
    %v2531 = vmul.f32 %v1565, %v2528
    %v2532 = vmul.f32 %v1566, %v2528
    %2537 = vrot.lane.b32.xlu0 %v2529, 127
    %v2538 = vpop.permute.xlu0 %2537
    %2539 = vrot.lane.b32.xlu0 %v2530, 127
    %v2540 = vpop.permute.xlu0 %2539
    %2541 = vrot.lane.b32.xlu0 %v2531, 127
    %v2542 = vpop.permute.xlu0 %2541
    %2543 = vrot.lane.b32.xlu0 %v2532, 127
    %v2544 = vpop.permute.xlu0 %2543
    %v2549 = vadd.f32 %v2523, %v2538
    %v2550 = vadd.f32 %v2524, %v2540
    %v2551 = vadd.f32 %v2525, %v2542
    %v2552 = vadd.f32 %v2526, %v2544
    %s2553 = sld [smem:[#allocation8 + $0xb]]
    %v2554 = vstv %s2553
    %v2555 = vmul.f32 %v1563, %v2554
    %v2556 = vmul.f32 %v1564, %v2554
    %v2557 = vmul.f32 %v1565, %v2554
    %v2558 = vmul.f32 %v1566, %v2554
    %2563 = vrot.lane.b32.xlu0 %v2555, 126
    %v2564 = vpop.permute.xlu0 %2563
    %2565 = vrot.lane.b32.xlu0 %v2556, 126
    %v2566 = vpop.permute.xlu0 %2565
    %2567 = vrot.lane.b32.xlu0 %v2557, 126
    %v2568 = vpop.permute.xlu0 %2567
    %2569 = vrot.lane.b32.xlu0 %v2558, 126
    %v2570 = vpop.permute.xlu0 %2569
    %v2575 = vadd.f32 %v2549, %v2564
    %v2576 = vadd.f32 %v2550, %v2566
    %v2577 = vadd.f32 %v2551, %v2568
    %v2578 = vadd.f32 %v2552, %v2570
    %s2579 = sld [smem:[#allocation8 + $0xc]]
    %v2580 = vstv %s2579
    %v2581 = vmul.f32 %v1563, %v2580
    %v2582 = vmul.f32 %v1564, %v2580
    %v2583 = vmul.f32 %v1565, %v2580
    %v2584 = vmul.f32 %v1566, %v2580
    %v2589 = vrot.slane %v2581, 1
    %v2590 = vrot.slane %v2582, 1
    %v2591 = vsel %vm193, %v2589, %v2590
    %v2592 = vrot.slane %v2583, 1
    %v2593 = vrot.slane %v2584, 1
    %v2594 = vsel %vm193, %v2592, %v2593
    %v2599 = vadd.f32 %v2575, %v2591
    %v2600 = vadd.f32 %v2576, %v2590
    %v2601 = vadd.f32 %v2577, %v2594
    %v2602 = vadd.f32 %v2578, %v2593
    %s2603 = sld [smem:[#allocation8 + $0xd]]
    %v2604 = vstv %s2603
    %v2605 = vmul.f32 %v1563, %v2604
    %v2606 = vmul.f32 %v1564, %v2604
    %v2607 = vmul.f32 %v1565, %v2604
    %v2608 = vmul.f32 %v1566, %v2604
    %v2613 = vrot.slane %v2605, 1
    %v2614 = vrot.slane %v2606, 1
    %v2615 = vsel %vm193, %v2613, %v2614
    %v2616 = vrot.slane %v2607, 1
    %v2617 = vrot.slane %v2608, 1
    %v2618 = vsel %vm193, %v2616, %v2617
    %2619 = vrot.lane.b32.xlu0 %v2615, 127
    %v2620 = vpop.permute.xlu0 %2619
    %2621 = vrot.lane.b32.xlu0 %v2614, 127
    %v2622 = vpop.permute.xlu0 %2621
    %2623 = vrot.lane.b32.xlu0 %v2618, 127
    %v2624 = vpop.permute.xlu0 %2623
    %2625 = vrot.lane.b32.xlu0 %v2617, 127
    %v2626 = vpop.permute.xlu0 %2625
    %v2631 = vadd.f32 %v2599, %v2620
    %v2632 = vadd.f32 %v2600, %v2622
    %v2633 = vadd.f32 %v2601, %v2624
    %v2634 = vadd.f32 %v2602, %v2626
    %s2635 = sld [smem:[#allocation8 + $0xe]]
    %v2636 = vstv %s2635
    %v2637 = vmul.f32 %v1563, %v2636
    %v2638 = vmul.f32 %v1564, %v2636
    %v2639 = vmul.f32 %v1565, %v2636
    %v2640 = vmul.f32 %v1566, %v2636
    %v2645 = vrot.slane %v2637, 1
    %v2646 = vrot.slane %v2638, 1
    %v2647 = vsel %vm193, %v2645, %v2646
    %v2648 = vrot.slane %v2639, 1
    %v2649 = vrot.slane %v2640, 1
    %v2650 = vsel %vm193, %v2648, %v2649
    %2651 = vrot.lane.b32.xlu0 %v2647, 126
    %v2652 = vpop.permute.xlu0 %2651
    %2653 = vrot.lane.b32.xlu0 %v2646, 126
    %v2654 = vpop.permute.xlu0 %2653
    %2655 = vrot.lane.b32.xlu0 %v2650, 126
    %v2656 = vpop.permute.xlu0 %2655
    %2657 = vrot.lane.b32.xlu0 %v2649, 126
    %v2658 = vpop.permute.xlu0 %2657
    %v2663 = vadd.f32 %v2631, %v2652
    %v2664 = vadd.f32 %v2632, %v2654
    %v2665 = vadd.f32 %v2633, %v2656
    %v2666 = vadd.f32 %v2634, %v2658
    %s2667 = sld [smem:[#allocation8 + $0xf]]
    %v2668 = vstv %s2667
    %v2669 = vmul.f32 %v1563, %v2668
    %v2670 = vmul.f32 %v1564, %v2668
    %v2671 = vmul.f32 %v1565, %v2668
    %v2672 = vmul.f32 %v1566, %v2668
    %v2677 = vrot.slane %v2669, 2
    %v2678 = vrot.slane %v2670, 2
    %v2679 = vsel %vm282, %v2677, %v2678
    %v2680 = vrot.slane %v2671, 2
    %v2681 = vrot.slane %v2672, 2
    %v2682 = vsel %vm282, %v2680, %v2681
    %v2687 = vadd.f32 %v2663, %v2679
    %v2688 = vadd.f32 %v2664, %v2678
    %v2689 = vadd.f32 %v2665, %v2682
    %v2690 = vadd.f32 %v2666, %v2681
    %s2691 = sld [smem:[#allocation8 + $0x10]]
    %v2692 = vstv %s2691
    %v2693 = vmul.f32 %v1563, %v2692
    %v2694 = vmul.f32 %v1564, %v2692
    %v2695 = vmul.f32 %v1565, %v2692
    %v2696 = vmul.f32 %v1566, %v2692
    %v2701 = vrot.slane %v2693, 2
    %v2702 = vrot.slane %v2694, 2
    %v2703 = vsel %vm282, %v2701, %v2702
    %v2704 = vrot.slane %v2695, 2
    %v2705 = vrot.slane %v2696, 2
    %v2706 = vsel %vm282, %v2704, %v2705
    %2707 = vrot.lane.b32.xlu0 %v2703, 127
    %v2708 = vpop.permute.xlu0 %2707
    %2709 = vrot.lane.b32.xlu0 %v2702, 127
    %v2710 = vpop.permute.xlu0 %2709
    %2711 = vrot.lane.b32.xlu0 %v2706, 127
    %v2712 = vpop.permute.xlu0 %2711
    %2713 = vrot.lane.b32.xlu0 %v2705, 127
    %v2714 = vpop.permute.xlu0 %2713
    %v2719 = vadd.f32 %v2687, %v2708
    %v2720 = vadd.f32 %v2688, %v2710
    %v2721 = vadd.f32 %v2689, %v2712
    %v2722 = vadd.f32 %v2690, %v2714
    %s2723 = sld [smem:[#allocation8 + $0x11]]
    %v2724 = vstv %s2723
    %v2725 = vmul.f32 %v1563, %v2724
    %v2726 = vmul.f32 %v1564, %v2724
    %v2727 = vmul.f32 %v1565, %v2724
    %v2728 = vmul.f32 %v1566, %v2724
    %v2733 = vrot.slane %v2725, 2
    %v2734 = vrot.slane %v2726, 2
    %v2735 = vsel %vm282, %v2733, %v2734
    %v2736 = vrot.slane %v2727, 2
    %v2737 = vrot.slane %v2728, 2
    %v2738 = vsel %vm282, %v2736, %v2737
    %2739 = vrot.lane.b32.xlu0 %v2735, 126
    %v2740 = vpop.permute.xlu0 %2739
    %2741 = vrot.lane.b32.xlu0 %v2734, 126
    %v2742 = vpop.permute.xlu0 %2741
    %2743 = vrot.lane.b32.xlu0 %v2738, 126
    %v2744 = vpop.permute.xlu0 %2743
    %2745 = vrot.lane.b32.xlu0 %v2737, 126
    %v2746 = vpop.permute.xlu0 %2745
    %v2751 = vadd.f32 %v2719, %v2740
    %v2752 = vadd.f32 %v2720, %v2742
    %v2753 = vadd.f32 %v2721, %v2744
    %v2754 = vadd.f32 %v2722, %v2746
    %s2755 = sld [smem:[#allocation8 + $0x12]]
    %v2756 = vstv %s2755
    %v2757 = vmul.f32 %v2283, %v2756
    %v2758 = vmul.f32 %v2284, %v2756
    %v2759 = vmul.f32 %v2285, %v2756
    %v2760 = vmul.f32 %v2286, %v2756
    %s2761 = sld [smem:[#allocation8 + $0x13]]
    %v2762 = vstv %s2761
    %v2763 = vmul.f32 %v2283, %v2762
    %v2764 = vmul.f32 %v2284, %v2762
    %v2765 = vmul.f32 %v2285, %v2762
    %v2766 = vmul.f32 %v2286, %v2762
    %2771 = vrot.lane.b32.xlu0 %v2763, 127
    %v2772 = vpop.permute.xlu0 %2771
    %2773 = vrot.lane.b32.xlu0 %v2764, 127
    %v2774 = vpop.permute.xlu0 %2773
    %2775 = vrot.lane.b32.xlu0 %v2765, 127
    %v2776 = vpop.permute.xlu0 %2775
    %2777 = vrot.lane.b32.xlu0 %v2766, 127
    %v2778 = vpop.permute.xlu0 %2777
    %v2783 = vadd.f32 %v2757, %v2772
    %v2784 = vadd.f32 %v2758, %v2774
    %v2785 = vadd.f32 %v2759, %v2776
    %v2786 = vadd.f32 %v2760, %v2778
    %s2787 = sld [smem:[#allocation8 + $0x14]]
    %v2788 = vstv %s2787
    %v2789 = vmul.f32 %v2283, %v2788
    %v2790 = vmul.f32 %v2284, %v2788
    %v2791 = vmul.f32 %v2285, %v2788
    %v2792 = vmul.f32 %v2286, %v2788
    %2797 = vrot.lane.b32.xlu0 %v2789, 126
    %v2798 = vpop.permute.xlu0 %2797
    %2799 = vrot.lane.b32.xlu0 %v2790, 126
    %v2800 = vpop.permute.xlu0 %2799
    %2801 = vrot.lane.b32.xlu0 %v2791, 126
    %v2802 = vpop.permute.xlu0 %2801
    %2803 = vrot.lane.b32.xlu0 %v2792, 126
    %v2804 = vpop.permute.xlu0 %2803
    %v2809 = vadd.f32 %v2783, %v2798
    %v2810 = vadd.f32 %v2784, %v2800
    %v2811 = vadd.f32 %v2785, %v2802
    %v2812 = vadd.f32 %v2786, %v2804
    %s2813 = sld [smem:[#allocation8 + $0x15]]
    %v2814 = vstv %s2813
    %v2815 = vmul.f32 %v2283, %v2814
    %v2816 = vmul.f32 %v2284, %v2814
    %v2817 = vmul.f32 %v2285, %v2814
    %v2818 = vmul.f32 %v2286, %v2814
    %v2823 = vrot.slane %v2815, 1
    %v2824 = vrot.slane %v2816, 1
    %v2825 = vsel %vm193, %v2823, %v2824
    %v2826 = vrot.slane %v2817, 1
    %v2827 = vrot.slane %v2818, 1
    %v2828 = vsel %vm193, %v2826, %v2827
    %v2833 = vadd.f32 %v2809, %v2825
    %v2834 = vadd.f32 %v2810, %v2824
    %v2835 = vadd.f32 %v2811, %v2828
    %v2836 = vadd.f32 %v2812, %v2827
    %s2837 = sld [smem:[#allocation8 + $0x16]]
    %v2838 = vstv %s2837
    %v2839 = vmul.f32 %v2283, %v2838
    %v2840 = vmul.f32 %v2284, %v2838
    %v2841 = vmul.f32 %v2285, %v2838
    %v2842 = vmul.f32 %v2286, %v2838
    %v2847 = vrot.slane %v2839, 1
    %v2848 = vrot.slane %v2840, 1
    %v2849 = vsel %vm193, %v2847, %v2848
    %v2850 = vrot.slane %v2841, 1
    %v2851 = vrot.slane %v2842, 1
    %v2852 = vsel %vm193, %v2850, %v2851
    %2853 = vrot.lane.b32.xlu0 %v2849, 127
    %v2854 = vpop.permute.xlu0 %2853
    %2855 = vrot.lane.b32.xlu0 %v2848, 127
    %v2856 = vpop.permute.xlu0 %2855
    %2857 = vrot.lane.b32.xlu0 %v2852, 127
    %v2858 = vpop.permute.xlu0 %2857
    %2859 = vrot.lane.b32.xlu0 %v2851, 127
    %v2860 = vpop.permute.xlu0 %2859
    %v2865 = vadd.f32 %v2833, %v2854
    %v2866 = vadd.f32 %v2834, %v2856
    %v2867 = vadd.f32 %v2835, %v2858
    %v2868 = vadd.f32 %v2836, %v2860
    %s2869 = sld [smem:[#allocation8 + $0x17]]
    %v2870 = vstv %s2869
    %v2871 = vmul.f32 %v2283, %v2870
    %v2872 = vmul.f32 %v2284, %v2870
    %v2873 = vmul.f32 %v2285, %v2870
    %v2874 = vmul.f32 %v2286, %v2870
    %v2879 = vrot.slane %v2871, 1
    %v2880 = vrot.slane %v2872, 1
    %v2881 = vsel %vm193, %v2879, %v2880
    %v2882 = vrot.slane %v2873, 1
    %v2883 = vrot.slane %v2874, 1
    %v2884 = vsel %vm193, %v2882, %v2883
    %2885 = vrot.lane.b32.xlu0 %v2881, 126
    %v2886 = vpop.permute.xlu0 %2885
    %2887 = vrot.lane.b32.xlu0 %v2880, 126
    %v2888 = vpop.permute.xlu0 %2887
    %2889 = vrot.lane.b32.xlu0 %v2884, 126
    %v2890 = vpop.permute.xlu0 %2889
    %2891 = vrot.lane.b32.xlu0 %v2883, 126
    %v2892 = vpop.permute.xlu0 %2891
    %v2897 = vadd.f32 %v2865, %v2886
    %v2898 = vadd.f32 %v2866, %v2888
    %v2899 = vadd.f32 %v2867, %v2890
    %v2900 = vadd.f32 %v2868, %v2892
    %s2901 = sld [smem:[#allocation8 + $0x18]]
    %v2902 = vstv %s2901
    %v2903 = vmul.f32 %v2283, %v2902
    %v2904 = vmul.f32 %v2284, %v2902
    %v2905 = vmul.f32 %v2285, %v2902
    %v2906 = vmul.f32 %v2286, %v2902
    %v2911 = vrot.slane %v2903, 2
    %v2912 = vrot.slane %v2904, 2
    %v2913 = vsel %vm282, %v2911, %v2912
    %v2914 = vrot.slane %v2905, 2
    %v2915 = vrot.slane %v2906, 2
    %v2916 = vsel %vm282, %v2914, %v2915
    %v2921 = vadd.f32 %v2897, %v2913
    %v2922 = vadd.f32 %v2898, %v2912
    %v2923 = vadd.f32 %v2899, %v2916
    %v2924 = vadd.f32 %v2900, %v2915
    %s2925 = sld [smem:[#allocation8 + $0x19]]
    %v2926 = vstv %s2925
    %v2927 = vmul.f32 %v2283, %v2926
    %v2928 = vmul.f32 %v2284, %v2926
    %v2929 = vmul.f32 %v2285, %v2926
    %v2930 = vmul.f32 %v2286, %v2926
    %v2935 = vrot.slane %v2927, 2
    %v2936 = vrot.slane %v2928, 2
    %v2937 = vsel %vm282, %v2935, %v2936
    %v2938 = vrot.slane %v2929, 2
    %v2939 = vrot.slane %v2930, 2
    %v2940 = vsel %vm282, %v2938, %v2939
    %2941 = vrot.lane.b32.xlu0 %v2937, 127
    %v2942 = vpop.permute.xlu0 %2941
    %2943 = vrot.lane.b32.xlu0 %v2936, 127
    %v2944 = vpop.permute.xlu0 %2943
    %2945 = vrot.lane.b32.xlu0 %v2940, 127
    %v2946 = vpop.permute.xlu0 %2945
    %2947 = vrot.lane.b32.xlu0 %v2939, 127
    %v2948 = vpop.permute.xlu0 %2947
    %v2953 = vadd.f32 %v2921, %v2942
    %v2954 = vadd.f32 %v2922, %v2944
    %v2955 = vadd.f32 %v2923, %v2946
    %v2956 = vadd.f32 %v2924, %v2948
    %s2957 = sld [smem:[#allocation8 + $0x1a]]
    %v2958 = vstv %s2957
    %v2959 = vmul.f32 %v2283, %v2958
    %v2960 = vmul.f32 %v2284, %v2958
    %v2961 = vmul.f32 %v2285, %v2958
    %v2962 = vmul.f32 %v2286, %v2958
    %v2967 = vrot.slane %v2959, 2
    %v2968 = vrot.slane %v2960, 2
    %v2969 = vsel %vm282, %v2967, %v2968
    %v2970 = vrot.slane %v2961, 2
    %v2971 = vrot.slane %v2962, 2
    %v2972 = vsel %vm282, %v2970, %v2971
    %2973 = vrot.lane.b32.xlu0 %v2969, 126
    %v2974 = vpop.permute.xlu0 %2973
    %2975 = vrot.lane.b32.xlu0 %v2968, 126
    %v2976 = vpop.permute.xlu0 %2975
    %2977 = vrot.lane.b32.xlu0 %v2972, 126
    %v2978 = vpop.permute.xlu0 %2977
    %2979 = vrot.lane.b32.xlu0 %v2971, 126
    %v2980 = vpop.permute.xlu0 %2979
    %v2985 = vadd.f32 %v2953, %v2974
    %v2986 = vadd.f32 %v2954, %v2976
    %v2987 = vadd.f32 %v2955, %v2978
    %v2988 = vadd.f32 %v2956, %v2980
    %v2989 = vadd.f32 %v2517, %v2751
    %v2990 = vadd.f32 %v2518, %v2752
    %v2991 = vadd.f32 %v2519, %v2753
    %v2992 = vadd.f32 %v2520, %v2754
    %v2993 = vadd.f32 %v2989, %v2985
    %v2994 = vadd.f32 %v2990, %v2986
    %v2995 = vadd.f32 %v2991, %v2987
    %v2996 = vadd.f32 %v2992, %v2988
    %s2997 = sld [smem:[#allocation9]]
    %v2998 = vstv %s2997
    %v2999 = vadd.f32 %v2993, %v2998
    %v3000 = vadd.f32 %v2994, %v2998
    %v3001 = vadd.f32 %v2995, %v2998
    %v3002 = vadd.f32 %v2996, %v2998
    %v3003 = vmax.f32 %v2999, 0.0
    %v3004 = vmax.f32 %v3000, 0.0
    %v3005 = vmax.f32 %v3001, 0.0
    %v3006 = vmax.f32 %v3002, 0.0
    %s3007 = sld [smem:[#allocation8 + $0x1b]]
    %v3008 = vstv %s3007
    %v3009 = vmul.f32 %v843, %v3008
    %v3010 = vmul.f32 %v844, %v3008
    %v3011 = vmul.f32 %v845, %v3008
    %v3012 = vmul.f32 %v846, %v3008
    %s3013 = sld [smem:[#allocation8 + $0x1c]]
    %v3014 = vstv %s3013
    %v3015 = vmul.f32 %v843, %v3014
    %v3016 = vmul.f32 %v844, %v3014
    %v3017 = vmul.f32 %v845, %v3014
    %v3018 = vmul.f32 %v846, %v3014
    %3023 = vrot.lane.b32.xlu0 %v3015, 127
    %v3024 = vpop.permute.xlu0 %3023
    %3025 = vrot.lane.b32.xlu0 %v3016, 127
    %v3026 = vpop.permute.xlu0 %3025
    %3027 = vrot.lane.b32.xlu0 %v3017, 127
    %v3028 = vpop.permute.xlu0 %3027
    %3029 = vrot.lane.b32.xlu0 %v3018, 127
    %v3030 = vpop.permute.xlu0 %3029
    %v3035 = vadd.f32 %v3009, %v3024
    %v3036 = vadd.f32 %v3010, %v3026
    %v3037 = vadd.f32 %v3011, %v3028
    %v3038 = vadd.f32 %v3012, %v3030
    %s3039 = sld [smem:[#allocation8 + $0x1d]]
    %v3040 = vstv %s3039
    %v3041 = vmul.f32 %v843, %v3040
    %v3042 = vmul.f32 %v844, %v3040
    %v3043 = vmul.f32 %v845, %v3040
    %v3044 = vmul.f32 %v846, %v3040
    %3049 = vrot.lane.b32.xlu0 %v3041, 126
    %v3050 = vpop.permute.xlu0 %3049
    %3051 = vrot.lane.b32.xlu0 %v3042, 126
    %v3052 = vpop.permute.xlu0 %3051
    %3053 = vrot.lane.b32.xlu0 %v3043, 126
    %v3054 = vpop.permute.xlu0 %3053
    %3055 = vrot.lane.b32.xlu0 %v3044, 126
    %v3056 = vpop.permute.xlu0 %3055
    %v3061 = vadd.f32 %v3035, %v3050
    %v3062 = vadd.f32 %v3036, %v3052
    %v3063 = vadd.f32 %v3037, %v3054
    %v3064 = vadd.f32 %v3038, %v3056
    %s3065 = sld [smem:[#allocation8 + $0x1e]]
    %v3066 = vstv %s3065
    %v3067 = vmul.f32 %v843, %v3066
    %v3068 = vmul.f32 %v844, %v3066
    %v3069 = vmul.f32 %v845, %v3066
    %v3070 = vmul.f32 %v846, %v3066
    %v3075 = vrot.slane %v3067, 1
    %v3076 = vrot.slane %v3068, 1
    %v3077 = vsel %vm193, %v3075, %v3076
    %v3078 = vrot.slane %v3069, 1
    %v3079 = vrot.slane %v3070, 1
    %v3080 = vsel %vm193, %v3078, %v3079
    %v3085 = vadd.f32 %v3061, %v3077
    %v3086 = vadd.f32 %v3062, %v3076
    %v3087 = vadd.f32 %v3063, %v3080
    %v3088 = vadd.f32 %v3064, %v3079
    %s3089 = sld [smem:[#allocation8 + $0x1f]]
    %v3090 = vstv %s3089
    %v3091 = vmul.f32 %v843, %v3090
    %v3092 = vmul.f32 %v844, %v3090
    %v3093 = vmul.f32 %v845, %v3090
    %v3094 = vmul.f32 %v846, %v3090
    %v3099 = vrot.slane %v3091, 1
    %v3100 = vrot.slane %v3092, 1
    %v3101 = vsel %vm193, %v3099, %v3100
    %v3102 = vrot.slane %v3093, 1
    %v3103 = vrot.slane %v3094, 1
    %v3104 = vsel %vm193, %v3102, %v3103
    %3105 = vrot.lane.b32.xlu0 %v3101, 127
    %v3106 = vpop.permute.xlu0 %3105
    %3107 = vrot.lane.b32.xlu0 %v3100, 127
    %v3108 = vpop.permute.xlu0 %3107
    %3109 = vrot.lane.b32.xlu0 %v3104, 127
    %v3110 = vpop.permute.xlu0 %3109
    %3111 = vrot.lane.b32.xlu0 %v3103, 127
    %v3112 = vpop.permute.xlu0 %3111
    %v3117 = vadd.f32 %v3085, %v3106
    %v3118 = vadd.f32 %v3086, %v3108
    %v3119 = vadd.f32 %v3087, %v3110
    %v3120 = vadd.f32 %v3088, %v3112
    %s3121 = sld [smem:[#allocation8 + $0x20]]
    %v3122 = vstv %s3121
    %v3123 = vmul.f32 %v843, %v3122
    %v3124 = vmul.f32 %v844, %v3122
    %v3125 = vmul.f32 %v845, %v3122
    %v3126 = vmul.f32 %v846, %v3122
    %v3131 = vrot.slane %v3123, 1
    %v3132 = vrot.slane %v3124, 1
    %v3133 = vsel %vm193, %v3131, %v3132
    %v3134 = vrot.slane %v3125, 1
    %v3135 = vrot.slane %v3126, 1
    %v3136 = vsel %vm193, %v3134, %v3135
    %3137 = vrot.lane.b32.xlu0 %v3133, 126
    %v3138 = vpop.permute.xlu0 %3137
    %3139 = vrot.lane.b32.xlu0 %v3132, 126
    %v3140 = vpop.permute.xlu0 %3139
    %3141 = vrot.lane.b32.xlu0 %v3136, 126
    %v3142 = vpop.permute.xlu0 %3141
    %3143 = vrot.lane.b32.xlu0 %v3135, 126
    %v3144 = vpop.permute.xlu0 %3143
    %v3149 = vadd.f32 %v3117, %v3138
    %v3150 = vadd.f32 %v3118, %v3140
    %v3151 = vadd.f32 %v3119, %v3142
    %v3152 = vadd.f32 %v3120, %v3144
    %s3153 = sld [smem:[#allocation8 + $0x21]]
    %v3154 = vstv %s3153
    %v3155 = vmul.f32 %v843, %v3154
    %v3156 = vmul.f32 %v844, %v3154
    %v3157 = vmul.f32 %v845, %v3154
    %v3158 = vmul.f32 %v846, %v3154
    %v3163 = vrot.slane %v3155, 2
    %v3164 = vrot.slane %v3156, 2
    %v3165 = vsel %vm282, %v3163, %v3164
    %v3166 = vrot.slane %v3157, 2
    %v3167 = vrot.slane %v3158, 2
    %v3168 = vsel %vm282, %v3166, %v3167
    %v3173 = vadd.f32 %v3149, %v3165
    %v3174 = vadd.f32 %v3150, %v3164
    %v3175 = vadd.f32 %v3151, %v3168
    %v3176 = vadd.f32 %v3152, %v3167
    %s3177 = sld [smem:[#allocation8 + $0x22]]
    %v3178 = vstv %s3177
    %v3179 = vmul.f32 %v843, %v3178
    %v3180 = vmul.f32 %v844, %v3178
    %v3181 = vmul.f32 %v845, %v3178
    %v3182 = vmul.f32 %v846, %v3178
    %v3187 = vrot.slane %v3179, 2
    %v3188 = vrot.slane %v3180, 2
    %v3189 = vsel %vm282, %v3187, %v3188
    %v3190 = vrot.slane %v3181, 2
    %v3191 = vrot.slane %v3182, 2
    %v3192 = vsel %vm282, %v3190, %v3191
    %3193 = vrot.lane.b32.xlu0 %v3189, 127
    %v3194 = vpop.permute.xlu0 %3193
    %3195 = vrot.lane.b32.xlu0 %v3188, 127
    %v3196 = vpop.permute.xlu0 %3195
    %3197 = vrot.lane.b32.xlu0 %v3192, 127
    %v3198 = vpop.permute.xlu0 %3197
    %3199 = vrot.lane.b32.xlu0 %v3191, 127
    %v3200 = vpop.permute.xlu0 %3199
    %v3205 = vadd.f32 %v3173, %v3194
    %v3206 = vadd.f32 %v3174, %v3196
    %v3207 = vadd.f32 %v3175, %v3198
    %v3208 = vadd.f32 %v3176, %v3200
    %s3209 = sld [smem:[#allocation8 + $0x23]]
    %v3210 = vstv %s3209
    %v3211 = vmul.f32 %v843, %v3210
    %v3212 = vmul.f32 %v844, %v3210
    %v3213 = vmul.f32 %v845, %v3210
    %v3214 = vmul.f32 %v846, %v3210
    %v3219 = vrot.slane %v3211, 2
    %v3220 = vrot.slane %v3212, 2
    %v3221 = vsel %vm282, %v3219, %v3220
    %v3222 = vrot.slane %v3213, 2
    %v3223 = vrot.slane %v3214, 2
    %v3224 = vsel %vm282, %v3222, %v3223
    %3225 = vrot.lane.b32.xlu0 %v3221, 126
    %v3226 = vpop.permute.xlu0 %3225
    %3227 = vrot.lane.b32.xlu0 %v3220, 126
    %v3228 = vpop.permute.xlu0 %3227
    %3229 = vrot.lane.b32.xlu0 %v3224, 126
    %v3230 = vpop.permute.xlu0 %3229
    %3231 = vrot.lane.b32.xlu0 %v3223, 126
    %v3232 = vpop.permute.xlu0 %3231
    %v3237 = vadd.f32 %v3205, %v3226
    %v3238 = vadd.f32 %v3206, %v3228
    %v3239 = vadd.f32 %v3207, %v3230
    %v3240 = vadd.f32 %v3208, %v3232
    %s3241 = sld [smem:[#allocation8 + $0x24]]
    %v3242 = vstv %s3241
    %v3243 = vmul.f32 %v1563, %v3242
    %v3244 = vmul.f32 %v1564, %v3242
    %v3245 = vmul.f32 %v1565, %v3242
    %v3246 = vmul.f32 %v1566, %v3242
    %s3247 = sld [smem:[#allocation8 + $0x25]]
    %v3248 = vstv %s3247
    %v3249 = vmul.f32 %v1563, %v3248
    %v3250 = vmul.f32 %v1564, %v3248
    %v3251 = vmul.f32 %v1565, %v3248
    %v3252 = vmul.f32 %v1566, %v3248
    %3257 = vrot.lane.b32.xlu0 %v3249, 127
    %v3258 = vpop.permute.xlu0 %3257
    %3259 = vrot.lane.b32.xlu0 %v3250, 127
    %v3260 = vpop.permute.xlu0 %3259
    %3261 = vrot.lane.b32.xlu0 %v3251, 127
    %v3262 = vpop.permute.xlu0 %3261
    %3263 = vrot.lane.b32.xlu0 %v3252, 127
    %v3264 = vpop.permute.xlu0 %3263
    %v3269 = vadd.f32 %v3243, %v3258
    %v3270 = vadd.f32 %v3244, %v3260
    %v3271 = vadd.f32 %v3245, %v3262
    %v3272 = vadd.f32 %v3246, %v3264
    %s3273 = sld [smem:[#allocation8 + $0x26]]
    %v3274 = vstv %s3273
    %v3275 = vmul.f32 %v1563, %v3274
    %v3276 = vmul.f32 %v1564, %v3274
    %v3277 = vmul.f32 %v1565, %v3274
    %v3278 = vmul.f32 %v1566, %v3274
    %3283 = vrot.lane.b32.xlu0 %v3275, 126
    %v3284 = vpop.permute.xlu0 %3283
    %3285 = vrot.lane.b32.xlu0 %v3276, 126
    %v3286 = vpop.permute.xlu0 %3285
    %3287 = vrot.lane.b32.xlu0 %v3277, 126
    %v3288 = vpop.permute.xlu0 %3287
    %3289 = vrot.lane.b32.xlu0 %v3278, 126
    %v3290 = vpop.permute.xlu0 %3289
    %v3295 = vadd.f32 %v3269, %v3284
    %v3296 = vadd.f32 %v3270, %v3286
    %v3297 = vadd.f32 %v3271, %v3288
    %v3298 = vadd.f32 %v3272, %v3290
    %s3299 = sld [smem:[#allocation8 + $0x27]]
    %v3300 = vstv %s3299
    %v3301 = vmul.f32 %v1563, %v3300
    %v3302 = vmul.f32 %v1564, %v3300
    %v3303 = vmul.f32 %v1565, %v3300
    %v3304 = vmul.f32 %v1566, %v3300
    %v3309 = vrot.slane %v3301, 1
    %v3310 = vrot.slane %v3302, 1
    %v3311 = vsel %vm193, %v3309, %v3310
    %v3312 = vrot.slane %v3303, 1
    %v3313 = vrot.slane %v3304, 1
    %v3314 = vsel %vm193, %v3312, %v3313
    %v3319 = vadd.f32 %v3295, %v3311
    %v3320 = vadd.f32 %v3296, %v3310
    %v3321 = vadd.f32 %v3297, %v3314
    %v3322 = vadd.f32 %v3298, %v3313
    %s3323 = sld [smem:[#allocation8 + $0x28]]
    %v3324 = vstv %s3323
    %v3325 = vmul.f32 %v1563, %v3324
    %v3326 = vmul.f32 %v1564, %v3324
    %v3327 = vmul.f32 %v1565, %v3324
    %v3328 = vmul.f32 %v1566, %v3324
    %v3333 = vrot.slane %v3325, 1
    %v3334 = vrot.slane %v3326, 1
    %v3335 = vsel %vm193, %v3333, %v3334
    %v3336 = vrot.slane %v3327, 1
    %v3337 = vrot.slane %v3328, 1
    %v3338 = vsel %vm193, %v3336, %v3337
    %3339 = vrot.lane.b32.xlu0 %v3335, 127
    %v3340 = vpop.permute.xlu0 %3339
    %3341 = vrot.lane.b32.xlu0 %v3334, 127
    %v3342 = vpop.permute.xlu0 %3341
    %3343 = vrot.lane.b32.xlu0 %v3338, 127
    %v3344 = vpop.permute.xlu0 %3343
    %3345 = vrot.lane.b32.xlu0 %v3337, 127
    %v3346 = vpop.permute.xlu0 %3345
    %v3351 = vadd.f32 %v3319, %v3340
    %v3352 = vadd.f32 %v3320, %v3342
    %v3353 = vadd.f32 %v3321, %v3344
    %v3354 = vadd.f32 %v3322, %v3346
    %s3355 = sld [smem:[#allocation8 + $0x29]]
    %v3356 = vstv %s3355
    %v3357 = vmul.f32 %v1563, %v3356
    %v3358 = vmul.f32 %v1564, %v3356
    %v3359 = vmul.f32 %v1565, %v3356
    %v3360 = vmul.f32 %v1566, %v3356
    %v3365 = vrot.slane %v3357, 1
    %v3366 = vrot.slane %v3358, 1
    %v3367 = vsel %vm193, %v3365, %v3366
    %v3368 = vrot.slane %v3359, 1
    %v3369 = vrot.slane %v3360, 1
    %v3370 = vsel %vm193, %v3368, %v3369
    %3371 = vrot.lane.b32.xlu0 %v3367, 126
    %v3372 = vpop.permute.xlu0 %3371
    %3373 = vrot.lane.b32.xlu0 %v3366, 126
    %v3374 = vpop.permute.xlu0 %3373
    %3375 = vrot.lane.b32.xlu0 %v3370, 126
    %v3376 = vpop.permute.xlu0 %3375
    %3377 = vrot.lane.b32.xlu0 %v3369, 126
    %v3378 = vpop.permute.xlu0 %3377
    %v3383 = vadd.f32 %v3351, %v3372
    %v3384 = vadd.f32 %v3352, %v3374
    %v3385 = vadd.f32 %v3353, %v3376
    %v3386 = vadd.f32 %v3354, %v3378
    %s3387 = sld [smem:[#allocation8 + $0x2a]]
    %v3388 = vstv %s3387
    %v3389 = vmul.f32 %v1563, %v3388
    %v3390 = vmul.f32 %v1564, %v3388
    %v3391 = vmul.f32 %v1565, %v3388
    %v3392 = vmul.f32 %v1566, %v3388
    %v3397 = vrot.slane %v3389, 2
    %v3398 = vrot.slane %v3390, 2
    %v3399 = vsel %vm282, %v3397, %v3398
    %v3400 = vrot.slane %v3391, 2
    %v3401 = vrot.slane %v3392, 2
    %v3402 = vsel %vm282, %v3400, %v3401
    %v3407 = vadd.f32 %v3383, %v3399
    %v3408 = vadd.f32 %v3384, %v3398
    %v3409 = vadd.f32 %v3385, %v3402
    %v3410 = vadd.f32 %v3386, %v3401
    %s3411 = sld [smem:[#allocation8 + $0x2b]]
    %v3412 = vstv %s3411
    %v3413 = vmul.f32 %v1563, %v3412
    %v3414 = vmul.f32 %v1564, %v3412
    %v3415 = vmul.f32 %v1565, %v3412
    %v3416 = vmul.f32 %v1566, %v3412
    %v3421 = vrot.slane %v3413, 2
    %v3422 = vrot.slane %v3414, 2
    %v3423 = vsel %vm282, %v3421, %v3422
    %v3424 = vrot.slane %v3415, 2
    %v3425 = vrot.slane %v3416, 2
    %v3426 = vsel %vm282, %v3424, %v3425
    %3427 = vrot.lane.b32.xlu0 %v3423, 127
    %v3428 = vpop.permute.xlu0 %3427
    %3429 = vrot.lane.b32.xlu0 %v3422, 127
    %v3430 = vpop.permute.xlu0 %3429
    %3431 = vrot.lane.b32.xlu0 %v3426, 127
    %v3432 = vpop.permute.xlu0 %3431
    %3433 = vrot.lane.b32.xlu0 %v3425, 127
    %v3434 = vpop.permute.xlu0 %3433
    %v3439 = vadd.f32 %v3407, %v3428
    %v3440 = vadd.f32 %v3408, %v3430
    %v3441 = vadd.f32 %v3409, %v3432
    %v3442 = vadd.f32 %v3410, %v3434
    %s3443 = sld [smem:[#allocation8 + $0x2c]]
    %v3444 = vstv %s3443
    %v3445 = vmul.f32 %v1563, %v3444
    %v3446 = vmul.f32 %v1564, %v3444
    %v3447 = vmul.f32 %v1565, %v3444
    %v3448 = vmul.f32 %v1566, %v3444
    %v3453 = vrot.slane %v3445, 2
    %v3454 = vrot.slane %v3446, 2
    %v3455 = vsel %vm282, %v3453, %v3454
    %v3456 = vrot.slane %v3447, 2
    %v3457 = vrot.slane %v3448, 2
    %v3458 = vsel %vm282, %v3456, %v3457
    %3459 = vrot.lane.b32.xlu0 %v3455, 126
    %v3460 = vpop.permute.xlu0 %3459
    %3461 = vrot.lane.b32.xlu0 %v3454, 126
    %v3462 = vpop.permute.xlu0 %3461
    %3463 = vrot.lane.b32.xlu0 %v3458, 126
    %v3464 = vpop.permute.xlu0 %3463
    %3465 = vrot.lane.b32.xlu0 %v3457, 126
    %v3466 = vpop.permute.xlu0 %3465
    %v3471 = vadd.f32 %v3439, %v3460
    %v3472 = vadd.f32 %v3440, %v3462
    %v3473 = vadd.f32 %v3441, %v3464
    %v3474 = vadd.f32 %v3442, %v3466
    %s3475 = sld [smem:[#allocation8 + $0x2d]]
    %v3476 = vstv %s3475
    %v3477 = vmul.f32 %v2283, %v3476
    %v3478 = vmul.f32 %v2284, %v3476
    %v3479 = vmul.f32 %v2285, %v3476
    %v3480 = vmul.f32 %v2286, %v3476
    %s3481 = sld [smem:[#allocation8 + $0x2e]]
    %v3482 = vstv %s3481
    %v3483 = vmul.f32 %v2283, %v3482
    %v3484 = vmul.f32 %v2284, %v3482
    %v3485 = vmul.f32 %v2285, %v3482
    %v3486 = vmul.f32 %v2286, %v3482
    %3491 = vrot.lane.b32.xlu0 %v3483, 127
    %v3492 = vpop.permute.xlu0 %3491
    %3493 = vrot.lane.b32.xlu0 %v3484, 127
    %v3494 = vpop.permute.xlu0 %3493
    %3495 = vrot.lane.b32.xlu0 %v3485, 127
    %v3496 = vpop.permute.xlu0 %3495
    %3497 = vrot.lane.b32.xlu0 %v3486, 127
    %v3498 = vpop.permute.xlu0 %3497
    %v3503 = vadd.f32 %v3477, %v3492
    %v3504 = vadd.f32 %v3478, %v3494
    %v3505 = vadd.f32 %v3479, %v3496
    %v3506 = vadd.f32 %v3480, %v3498
    %s3507 = sld [smem:[#allocation8 + $0x2f]]
    %v3508 = vstv %s3507
    %v3509 = vmul.f32 %v2283, %v3508
    %v3510 = vmul.f32 %v2284, %v3508
    %v3511 = vmul.f32 %v2285, %v3508
    %v3512 = vmul.f32 %v2286, %v3508
    %3517 = vrot.lane.b32.xlu0 %v3509, 126
    %v3518 = vpop.permute.xlu0 %3517
    %3519 = vrot.lane.b32.xlu0 %v3510, 126
    %v3520 = vpop.permute.xlu0 %3519
    %3521 = vrot.lane.b32.xlu0 %v3511, 126
    %v3522 = vpop.permute.xlu0 %3521
    %3523 = vrot.lane.b32.xlu0 %v3512, 126
    %v3524 = vpop.permute.xlu0 %3523
    %v3529 = vadd.f32 %v3503, %v3518
    %v3530 = vadd.f32 %v3504, %v3520
    %v3531 = vadd.f32 %v3505, %v3522
    %v3532 = vadd.f32 %v3506, %v3524
    %s3533 = sld [smem:[#allocation8 + $0x30]]
    %v3534 = vstv %s3533
    %v3535 = vmul.f32 %v2283, %v3534
    %v3536 = vmul.f32 %v2284, %v3534
    %v3537 = vmul.f32 %v2285, %v3534
    %v3538 = vmul.f32 %v2286, %v3534
    %v3543 = vrot.slane %v3535, 1
    %v3544 = vrot.slane %v3536, 1
    %v3545 = vsel %vm193, %v3543, %v3544
    %v3546 = vrot.slane %v3537, 1
    %v3547 = vrot.slane %v3538, 1
    %v3548 = vsel %vm193, %v3546, %v3547
    %v3553 = vadd.f32 %v3529, %v3545
    %v3554 = vadd.f32 %v3530, %v3544
    %v3555 = vadd.f32 %v3531, %v3548
    %v3556 = vadd.f32 %v3532, %v3547
    %s3557 = sld [smem:[#allocation8 + $0x31]]
    %v3558 = vstv %s3557
    %v3559 = vmul.f32 %v2283, %v3558
    %v3560 = vmul.f32 %v2284, %v3558
    %v3561 = vmul.f32 %v2285, %v3558
    %v3562 = vmul.f32 %v2286, %v3558
    %v3567 = vrot.slane %v3559, 1
    %v3568 = vrot.slane %v3560, 1
    %v3569 = vsel %vm193, %v3567, %v3568
    %v3570 = vrot.slane %v3561, 1
    %v3571 = vrot.slane %v3562, 1
    %v3572 = vsel %vm193, %v3570, %v3571
    %3573 = vrot.lane.b32.xlu0 %v3569, 127
    %v3574 = vpop.permute.xlu0 %3573
    %3575 = vrot.lane.b32.xlu0 %v3568, 127
    %v3576 = vpop.permute.xlu0 %3575
    %3577 = vrot.lane.b32.xlu0 %v3572, 127
    %v3578 = vpop.permute.xlu0 %3577
    %3579 = vrot.lane.b32.xlu0 %v3571, 127
    %v3580 = vpop.permute.xlu0 %3579
    %v3585 = vadd.f32 %v3553, %v3574
    %v3586 = vadd.f32 %v3554, %v3576
    %v3587 = vadd.f32 %v3555, %v3578
    %v3588 = vadd.f32 %v3556, %v3580
    %s3589 = sld [smem:[#allocation8 + $0x32]]
    %v3590 = vstv %s3589
    %v3591 = vmul.f32 %v2283, %v3590
    %v3592 = vmul.f32 %v2284, %v3590
    %v3593 = vmul.f32 %v2285, %v3590
    %v3594 = vmul.f32 %v2286, %v3590
    %v3599 = vrot.slane %v3591, 1
    %v3600 = vrot.slane %v3592, 1
    %v3601 = vsel %vm193, %v3599, %v3600
    %v3602 = vrot.slane %v3593, 1
    %v3603 = vrot.slane %v3594, 1
    %v3604 = vsel %vm193, %v3602, %v3603
    %3605 = vrot.lane.b32.xlu0 %v3601, 126
    %v3606 = vpop.permute.xlu0 %3605
    %3607 = vrot.lane.b32.xlu0 %v3600, 126
    %v3608 = vpop.permute.xlu0 %3607
    %3609 = vrot.lane.b32.xlu0 %v3604, 126
    %v3610 = vpop.permute.xlu0 %3609
    %3611 = vrot.lane.b32.xlu0 %v3603, 126
    %v3612 = vpop.permute.xlu0 %3611
    %v3617 = vadd.f32 %v3585, %v3606
    %v3618 = vadd.f32 %v3586, %v3608
    %v3619 = vadd.f32 %v3587, %v3610
    %v3620 = vadd.f32 %v3588, %v3612
    %s3621 = sld [smem:[#allocation8 + $0x33]]
    %v3622 = vstv %s3621
    %v3623 = vmul.f32 %v2283, %v3622
    %v3624 = vmul.f32 %v2284, %v3622
    %v3625 = vmul.f32 %v2285, %v3622
    %v3626 = vmul.f32 %v2286, %v3622
    %v3631 = vrot.slane %v3623, 2
    %v3632 = vrot.slane %v3624, 2
    %v3633 = vsel %vm282, %v3631, %v3632
    %v3634 = vrot.slane %v3625, 2
    %v3635 = vrot.slane %v3626, 2
    %v3636 = vsel %vm282, %v3634, %v3635
    %v3641 = vadd.f32 %v3617, %v3633
    %v3642 = vadd.f32 %v3618, %v3632
    %v3643 = vadd.f32 %v3619, %v3636
    %v3644 = vadd.f32 %v3620, %v3635
    %s3645 = sld [smem:[#allocation8 + $0x34]]
    %v3646 = vstv %s3645
    %v3647 = vmul.f32 %v2283, %v3646
    %v3648 = vmul.f32 %v2284, %v3646
    %v3649 = vmul.f32 %v2285, %v3646
    %v3650 = vmul.f32 %v2286, %v3646
    %v3655 = vrot.slane %v3647, 2
    %v3656 = vrot.slane %v3648, 2
    %v3657 = vsel %vm282, %v3655, %v3656
    %v3658 = vrot.slane %v3649, 2
    %v3659 = vrot.slane %v3650, 2
    %v3660 = vsel %vm282, %v3658, %v3659
    %3661 = vrot.lane.b32.xlu0 %v3657, 127
    %v3662 = vpop.permute.xlu0 %3661
    %3663 = vrot.lane.b32.xlu0 %v3656, 127
    %v3664 = vpop.permute.xlu0 %3663
    %3665 = vrot.lane.b32.xlu0 %v3660, 127
    %v3666 = vpop.permute.xlu0 %3665
    %3667 = vrot.lane.b32.xlu0 %v3659, 127
    %v3668 = vpop.permute.xlu0 %3667
    %v3673 = vadd.f32 %v3641, %v3662
    %v3674 = vadd.f32 %v3642, %v3664
    %v3675 = vadd.f32 %v3643, %v3666
    %v3676 = vadd.f32 %v3644, %v3668
    %s3677 = sld [smem:[#allocation8 + $0x35]]
    %v3678 = vstv %s3677
    %v3679 = vmul.f32 %v2283, %v3678
    %v3680 = vmul.f32 %v2284, %v3678
    %v3681 = vmul.f32 %v2285, %v3678
    %v3682 = vmul.f32 %v2286, %v3678
    %v3687 = vrot.slane %v3679, 2
    %v3688 = vrot.slane %v3680, 2
    %v3689 = vsel %vm282, %v3687, %v3688
    %v3690 = vrot.slane %v3681, 2
    %v3691 = vrot.slane %v3682, 2
    %v3692 = vsel %vm282, %v3690, %v3691
    %3693 = vrot.lane.b32.xlu0 %v3689, 126
    %v3694 = vpop.permute.xlu0 %3693
    %3695 = vrot.lane.b32.xlu0 %v3688, 126
    %v3696 = vpop.permute.xlu0 %3695
    %3697 = vrot.lane.b32.xlu0 %v3692, 126
    %v3698 = vpop.permute.xlu0 %3697
    %3699 = vrot.lane.b32.xlu0 %v3691, 126
    %v3700 = vpop.permute.xlu0 %3699
    %v3705 = vadd.f32 %v3673, %v3694
    %v3706 = vadd.f32 %v3674, %v3696
    %v3707 = vadd.f32 %v3675, %v3698
    %v3708 = vadd.f32 %v3676, %v3700
    %v3709 = vadd.f32 %v3237, %v3471
    %v3710 = vadd.f32 %v3238, %v3472
    %v3711 = vadd.f32 %v3239, %v3473
    %v3712 = vadd.f32 %v3240, %v3474
    %v3713 = vadd.f32 %v3709, %v3705
    %v3714 = vadd.f32 %v3710, %v3706
    %v3715 = vadd.f32 %v3711, %v3707
    %v3716 = vadd.f32 %v3712, %v3708
    %s3717 = sld [smem:[#allocation9 + $0x1]]
    %v3718 = vstv %s3717
    %v3719 = vadd.f32 %v3713, %v3718
    %v3720 = vadd.f32 %v3714, %v3718
    %v3721 = vadd.f32 %v3715, %v3718
    %v3722 = vadd.f32 %v3716, %v3718
    %v3723 = vmax.f32 %v3719, 0.0
    %v3724 = vmax.f32 %v3720, 0.0
    %v3725 = vmax.f32 %v3721, 0.0
    %v3726 = vmax.f32 %v3722, 0.0
    %s3727 = sld [smem:[#allocation8 + $0x36]]
    %v3728 = vstv %s3727
    %v3729 = vmul.f32 %v843, %v3728
    %v3730 = vmul.f32 %v844, %v3728
    %v3731 = vmul.f32 %v845, %v3728
    %v3732 = vmul.f32 %v846, %v3728
    %s3733 = sld [smem:[#allocation8 + $0x37]]
    %v3734 = vstv %s3733
    %v3735 = vmul.f32 %v843, %v3734
    %v3736 = vmul.f32 %v844, %v3734
    %v3737 = vmul.f32 %v845, %v3734
    %v3738 = vmul.f32 %v846, %v3734
    %3743 = vrot.lane.b32.xlu0 %v3735, 127
    %v3744 = vpop.permute.xlu0 %3743
    %3745 = vrot.lane.b32.xlu0 %v3736, 127
    %v3746 = vpop.permute.xlu0 %3745
    %3747 = vrot.lane.b32.xlu0 %v3737, 127
    %v3748 = vpop.permute.xlu0 %3747
    %3749 = vrot.lane.b32.xlu0 %v3738, 127
    %v3750 = vpop.permute.xlu0 %3749
    %v3755 = vadd.f32 %v3729, %v3744
    %v3756 = vadd.f32 %v3730, %v3746
    %v3757 = vadd.f32 %v3731, %v3748
    %v3758 = vadd.f32 %v3732, %v3750
    %s3759 = sld [smem:[#allocation8 + $0x38]]
    %v3760 = vstv %s3759
    %v3761 = vmul.f32 %v843, %v3760
    %v3762 = vmul.f32 %v844, %v3760
    %v3763 = vmul.f32 %v845, %v3760
    %v3764 = vmul.f32 %v846, %v3760
    %3769 = vrot.lane.b32.xlu0 %v3761, 126
    %v3770 = vpop.permute.xlu0 %3769
    %3771 = vrot.lane.b32.xlu0 %v3762, 126
    %v3772 = vpop.permute.xlu0 %3771
    %3773 = vrot.lane.b32.xlu0 %v3763, 126
    %v3774 = vpop.permute.xlu0 %3773
    %3775 = vrot.lane.b32.xlu0 %v3764, 126
    %v3776 = vpop.permute.xlu0 %3775
    %v3781 = vadd.f32 %v3755, %v3770
    %v3782 = vadd.f32 %v3756, %v3772
    %v3783 = vadd.f32 %v3757, %v3774
    %v3784 = vadd.f32 %v3758, %v3776
    %s3785 = sld [smem:[#allocation8 + $0x39]]
    %v3786 = vstv %s3785
    %v3787 = vmul.f32 %v843, %v3786
    %v3788 = vmul.f32 %v844, %v3786
    %v3789 = vmul.f32 %v845, %v3786
    %v3790 = vmul.f32 %v846, %v3786
    %v3795 = vrot.slane %v3787, 1
    %v3796 = vrot.slane %v3788, 1
    %v3797 = vsel %vm193, %v3795, %v3796
    %v3798 = vrot.slane %v3789, 1
    %v3799 = vrot.slane %v3790, 1
    %v3800 = vsel %vm193, %v3798, %v3799
    %v3805 = vadd.f32 %v3781, %v3797
    %v3806 = vadd.f32 %v3782, %v3796
    %v3807 = vadd.f32 %v3783, %v3800
    %v3808 = vadd.f32 %v3784, %v3799
    %s3809 = sld [smem:[#allocation8 + $0x3a]]
    %v3810 = vstv %s3809
    %v3811 = vmul.f32 %v843, %v3810
    %v3812 = vmul.f32 %v844, %v3810
    %v3813 = vmul.f32 %v845, %v3810
    %v3814 = vmul.f32 %v846, %v3810
    %v3819 = vrot.slane %v3811, 1
    %v3820 = vrot.slane %v3812, 1
    %v3821 = vsel %vm193, %v3819, %v3820
    %v3822 = vrot.slane %v3813, 1
    %v3823 = vrot.slane %v3814, 1
    %v3824 = vsel %vm193, %v3822, %v3823
    %3825 = vrot.lane.b32.xlu0 %v3821, 127
    %v3826 = vpop.permute.xlu0 %3825
    %3827 = vrot.lane.b32.xlu0 %v3820, 127
    %v3828 = vpop.permute.xlu0 %3827
    %3829 = vrot.lane.b32.xlu0 %v3824, 127
    %v3830 = vpop.permute.xlu0 %3829
    %3831 = vrot.lane.b32.xlu0 %v3823, 127
    %v3832 = vpop.permute.xlu0 %3831
    %v3837 = vadd.f32 %v3805, %v3826
    %v3838 = vadd.f32 %v3806, %v3828
    %v3839 = vadd.f32 %v3807, %v3830
    %v3840 = vadd.f32 %v3808, %v3832
    %s3841 = sld [smem:[#allocation8 + $0x3b]]
    %v3842 = vstv %s3841
    %v3843 = vmul.f32 %v843, %v3842
    %v3844 = vmul.f32 %v844, %v3842
    %v3845 = vmul.f32 %v845, %v3842
    %v3846 = vmul.f32 %v846, %v3842
    %v3851 = vrot.slane %v3843, 1
    %v3852 = vrot.slane %v3844, 1
    %v3853 = vsel %vm193, %v3851, %v3852
    %v3854 = vrot.slane %v3845, 1
    %v3855 = vrot.slane %v3846, 1
    %v3856 = vsel %vm193, %v3854, %v3855
    %3857 = vrot.lane.b32.xlu0 %v3853, 126
    %v3858 = vpop.permute.xlu0 %3857
    %3859 = vrot.lane.b32.xlu0 %v3852, 126
    %v3860 = vpop.permute.xlu0 %3859
    %3861 = vrot.lane.b32.xlu0 %v3856, 126
    %v3862 = vpop.permute.xlu0 %3861
    %3863 = vrot.lane.b32.xlu0 %v3855, 126
    %v3864 = vpop.permute.xlu0 %3863
    %v3869 = vadd.f32 %v3837, %v3858
    %v3870 = vadd.f32 %v3838, %v3860
    %v3871 = vadd.f32 %v3839, %v3862
    %v3872 = vadd.f32 %v3840, %v3864
    %s3873 = sld [smem:[#allocation8 + $0x3c]]
    %v3874 = vstv %s3873
    %v3875 = vmul.f32 %v843, %v3874
    %v3876 = vmul.f32 %v844, %v3874
    %v3877 = vmul.f32 %v845, %v3874
    %v3878 = vmul.f32 %v846, %v3874
    %v3883 = vrot.slane %v3875, 2
    %v3884 = vrot.slane %v3876, 2
    %v3885 = vsel %vm282, %v3883, %v3884
    %v3886 = vrot.slane %v3877, 2
    %v3887 = vrot.slane %v3878, 2
    %v3888 = vsel %vm282, %v3886, %v3887
    %v3893 = vadd.f32 %v3869, %v3885
    %v3894 = vadd.f32 %v3870, %v3884
    %v3895 = vadd.f32 %v3871, %v3888
    %v3896 = vadd.f32 %v3872, %v3887
    %s3897 = sld [smem:[#allocation8 + $0x3d]]
    %v3898 = vstv %s3897
    %v3899 = vmul.f32 %v843, %v3898
    %v3900 = vmul.f32 %v844, %v3898
    %v3901 = vmul.f32 %v845, %v3898
    %v3902 = vmul.f32 %v846, %v3898
    %v3907 = vrot.slane %v3899, 2
    %v3908 = vrot.slane %v3900, 2
    %v3909 = vsel %vm282, %v3907, %v3908
    %v3910 = vrot.slane %v3901, 2
    %v3911 = vrot.slane %v3902, 2
    %v3912 = vsel %vm282, %v3910, %v3911
    %3913 = vrot.lane.b32.xlu0 %v3909, 127
    %v3914 = vpop.permute.xlu0 %3913
    %3915 = vrot.lane.b32.xlu0 %v3908, 127
    %v3916 = vpop.permute.xlu0 %3915
    %3917 = vrot.lane.b32.xlu0 %v3912, 127
    %v3918 = vpop.permute.xlu0 %3917
    %3919 = vrot.lane.b32.xlu0 %v3911, 127
    %v3920 = vpop.permute.xlu0 %3919
    %v3925 = vadd.f32 %v3893, %v3914
    %v3926 = vadd.f32 %v3894, %v3916
    %v3927 = vadd.f32 %v3895, %v3918
    %v3928 = vadd.f32 %v3896, %v3920
    %s3929 = sld [smem:[#allocation8 + $0x3e]]
    %v3930 = vstv %s3929
    %v3931 = vmul.f32 %v843, %v3930
    %v3932 = vmul.f32 %v844, %v3930
    %v3933 = vmul.f32 %v845, %v3930
    %v3934 = vmul.f32 %v846, %v3930
    %v3939 = vrot.slane %v3931, 2
    %v3940 = vrot.slane %v3932, 2
    %v3941 = vsel %vm282, %v3939, %v3940
    %v3942 = vrot.slane %v3933, 2
    %v3943 = vrot.slane %v3934, 2
    %v3944 = vsel %vm282, %v3942, %v3943
    %3945 = vrot.lane.b32.xlu0 %v3941, 126
    %v3946 = vpop.permute.xlu0 %3945
    %3947 = vrot.lane.b32.xlu0 %v3940, 126
    %v3948 = vpop.permute.xlu0 %3947
    %3949 = vrot.lane.b32.xlu0 %v3944, 126
    %v3950 = vpop.permute.xlu0 %3949
    %3951 = vrot.lane.b32.xlu0 %v3943, 126
    %v3952 = vpop.permute.xlu0 %3951
    %v3957 = vadd.f32 %v3925, %v3946
    %v3958 = vadd.f32 %v3926, %v3948
    %v3959 = vadd.f32 %v3927, %v3950
    %v3960 = vadd.f32 %v3928, %v3952
    %s3961 = sld [smem:[#allocation8 + $0x3f]]
    %v3962 = vstv %s3961
    %v3963 = vmul.f32 %v1563, %v3962
    %v3964 = vmul.f32 %v1564, %v3962
    %v3965 = vmul.f32 %v1565, %v3962
    %v3966 = vmul.f32 %v1566, %v3962
    %s3967 = sld [smem:[#allocation8 + $0x40]]
    %v3968 = vstv %s3967
    %v3969 = vmul.f32 %v1563, %v3968
    %v3970 = vmul.f32 %v1564, %v3968
    %v3971 = vmul.f32 %v1565, %v3968
    %v3972 = vmul.f32 %v1566, %v3968
    %3977 = vrot.lane.b32.xlu0 %v3969, 127
    %v3978 = vpop.permute.xlu0 %3977
    %3979 = vrot.lane.b32.xlu0 %v3970, 127
    %v3980 = vpop.permute.xlu0 %3979
    %3981 = vrot.lane.b32.xlu0 %v3971, 127
    %v3982 = vpop.permute.xlu0 %3981
    %3983 = vrot.lane.b32.xlu0 %v3972, 127
    %v3984 = vpop.permute.xlu0 %3983
    %v3989 = vadd.f32 %v3963, %v3978
    %v3990 = vadd.f32 %v3964, %v3980
    %v3991 = vadd.f32 %v3965, %v3982
    %v3992 = vadd.f32 %v3966, %v3984
    %s3993 = sld [smem:[#allocation8 + $0x41]]
    %v3994 = vstv %s3993
    %v3995 = vmul.f32 %v1563, %v3994
    %v3996 = vmul.f32 %v1564, %v3994
    %v3997 = vmul.f32 %v1565, %v3994
    %v3998 = vmul.f32 %v1566, %v3994
    %4003 = vrot.lane.b32.xlu0 %v3995, 126
    %v4004 = vpop.permute.xlu0 %4003
    %4005 = vrot.lane.b32.xlu0 %v3996, 126
    %v4006 = vpop.permute.xlu0 %4005
    %4007 = vrot.lane.b32.xlu0 %v3997, 126
    %v4008 = vpop.permute.xlu0 %4007
    %4009 = vrot.lane.b32.xlu0 %v3998, 126
    %v4010 = vpop.permute.xlu0 %4009
    %v4015 = vadd.f32 %v3989, %v4004
    %v4016 = vadd.f32 %v3990, %v4006
    %v4017 = vadd.f32 %v3991, %v4008
    %v4018 = vadd.f32 %v3992, %v4010
    %s4019 = sld [smem:[#allocation8 + $0x42]]
    %v4020 = vstv %s4019
    %v4021 = vmul.f32 %v1563, %v4020
    %v4022 = vmul.f32 %v1564, %v4020
    %v4023 = vmul.f32 %v1565, %v4020
    %v4024 = vmul.f32 %v1566, %v4020
    %v4029 = vrot.slane %v4021, 1
    %v4030 = vrot.slane %v4022, 1
    %v4031 = vsel %vm193, %v4029, %v4030
    %v4032 = vrot.slane %v4023, 1
    %v4033 = vrot.slane %v4024, 1
    %v4034 = vsel %vm193, %v4032, %v4033
    %v4039 = vadd.f32 %v4015, %v4031
    %v4040 = vadd.f32 %v4016, %v4030
    %v4041 = vadd.f32 %v4017, %v4034
    %v4042 = vadd.f32 %v4018, %v4033
    %s4043 = sld [smem:[#allocation8 + $0x43]]
    %v4044 = vstv %s4043
    %v4045 = vmul.f32 %v1563, %v4044
    %v4046 = vmul.f32 %v1564, %v4044
    %v4047 = vmul.f32 %v1565, %v4044
    %v4048 = vmul.f32 %v1566, %v4044
    %v4053 = vrot.slane %v4045, 1
    %v4054 = vrot.slane %v4046, 1
    %v4055 = vsel %vm193, %v4053, %v4054
    %v4056 = vrot.slane %v4047, 1
    %v4057 = vrot.slane %v4048, 1
    %v4058 = vsel %vm193, %v4056, %v4057
    %4059 = vrot.lane.b32.xlu0 %v4055, 127
    %v4060 = vpop.permute.xlu0 %4059
    %4061 = vrot.lane.b32.xlu0 %v4054, 127
    %v4062 = vpop.permute.xlu0 %4061
    %4063 = vrot.lane.b32.xlu0 %v4058, 127
    %v4064 = vpop.permute.xlu0 %4063
    %4065 = vrot.lane.b32.xlu0 %v4057, 127
    %v4066 = vpop.permute.xlu0 %4065
    %v4071 = vadd.f32 %v4039, %v4060
    %v4072 = vadd.f32 %v4040, %v4062
    %v4073 = vadd.f32 %v4041, %v4064
    %v4074 = vadd.f32 %v4042, %v4066
    %s4075 = sld [smem:[#allocation8 + $0x44]]
    %v4076 = vstv %s4075
    %v4077 = vmul.f32 %v1563, %v4076
    %v4078 = vmul.f32 %v1564, %v4076
    %v4079 = vmul.f32 %v1565, %v4076
    %v4080 = vmul.f32 %v1566, %v4076
    %v4085 = vrot.slane %v4077, 1
    %v4086 = vrot.slane %v4078, 1
    %v4087 = vsel %vm193, %v4085, %v4086
    %v4088 = vrot.slane %v4079, 1
    %v4089 = vrot.slane %v4080, 1
    %v4090 = vsel %vm193, %v4088, %v4089
    %4091 = vrot.lane.b32.xlu0 %v4087, 126
    %v4092 = vpop.permute.xlu0 %4091
    %4093 = vrot.lane.b32.xlu0 %v4086, 126
    %v4094 = vpop.permute.xlu0 %4093
    %4095 = vrot.lane.b32.xlu0 %v4090, 126
    %v4096 = vpop.permute.xlu0 %4095
    %4097 = vrot.lane.b32.xlu0 %v4089, 126
    %v4098 = vpop.permute.xlu0 %4097
    %v4103 = vadd.f32 %v4071, %v4092
    %v4104 = vadd.f32 %v4072, %v4094
    %v4105 = vadd.f32 %v4073, %v4096
    %v4106 = vadd.f32 %v4074, %v4098
    %s4107 = sld [smem:[#allocation8 + $0x45]]
    %v4108 = vstv %s4107
    %v4109 = vmul.f32 %v1563, %v4108
    %v4110 = vmul.f32 %v1564, %v4108
    %v4111 = vmul.f32 %v1565, %v4108
    %v4112 = vmul.f32 %v1566, %v4108
    %v4117 = vrot.slane %v4109, 2
    %v4118 = vrot.slane %v4110, 2
    %v4119 = vsel %vm282, %v4117, %v4118
    %v4120 = vrot.slane %v4111, 2
    %v4121 = vrot.slane %v4112, 2
    %v4122 = vsel %vm282, %v4120, %v4121
    %v4127 = vadd.f32 %v4103, %v4119
    %v4128 = vadd.f32 %v4104, %v4118
    %v4129 = vadd.f32 %v4105, %v4122
    %v4130 = vadd.f32 %v4106, %v4121
    %s4131 = sld [smem:[#allocation8 + $0x46]]
    %v4132 = vstv %s4131
    %v4133 = vmul.f32 %v1563, %v4132
    %v4134 = vmul.f32 %v1564, %v4132
    %v4135 = vmul.f32 %v1565, %v4132
    %v4136 = vmul.f32 %v1566, %v4132
    %v4141 = vrot.slane %v4133, 2
    %v4142 = vrot.slane %v4134, 2
    %v4143 = vsel %vm282, %v4141, %v4142
    %v4144 = vrot.slane %v4135, 2
    %v4145 = vrot.slane %v4136, 2
    %v4146 = vsel %vm282, %v4144, %v4145
    %4147 = vrot.lane.b32.xlu0 %v4143, 127
    %v4148 = vpop.permute.xlu0 %4147
    %4149 = vrot.lane.b32.xlu0 %v4142, 127
    %v4150 = vpop.permute.xlu0 %4149
    %4151 = vrot.lane.b32.xlu0 %v4146, 127
    %v4152 = vpop.permute.xlu0 %4151
    %4153 = vrot.lane.b32.xlu0 %v4145, 127
    %v4154 = vpop.permute.xlu0 %4153
    %v4159 = vadd.f32 %v4127, %v4148
    %v4160 = vadd.f32 %v4128, %v4150
    %v4161 = vadd.f32 %v4129, %v4152
    %v4162 = vadd.f32 %v4130, %v4154
    %s4163 = sld [smem:[#allocation8 + $0x47]]
    %v4164 = vstv %s4163
    %v4165 = vmul.f32 %v1563, %v4164
    %v4166 = vmul.f32 %v1564, %v4164
    %v4167 = vmul.f32 %v1565, %v4164
    %v4168 = vmul.f32 %v1566, %v4164
    %v4173 = vrot.slane %v4165, 2
    %v4174 = vrot.slane %v4166, 2
    %v4175 = vsel %vm282, %v4173, %v4174
    %v4176 = vrot.slane %v4167, 2
    %v4177 = vrot.slane %v4168, 2
    %v4178 = vsel %vm282, %v4176, %v4177
    %4179 = vrot.lane.b32.xlu0 %v4175, 126
    %v4180 = vpop.permute.xlu0 %4179
    %4181 = vrot.lane.b32.xlu0 %v4174, 126
    %v4182 = vpop.permute.xlu0 %4181
    %4183 = vrot.lane.b32.xlu0 %v4178, 126
    %v4184 = vpop.permute.xlu0 %4183
    %4185 = vrot.lane.b32.xlu0 %v4177, 126
    %v4186 = vpop.permute.xlu0 %4185
    %v4191 = vadd.f32 %v4159, %v4180
    %v4192 = vadd.f32 %v4160, %v4182
    %v4193 = vadd.f32 %v4161, %v4184
    %v4194 = vadd.f32 %v4162, %v4186
    %s4195 = sld [smem:[#allocation8 + $0x48]]
    %v4196 = vstv %s4195
    %v4197 = vmul.f32 %v2283, %v4196
    %v4198 = vmul.f32 %v2284, %v4196
    %v4199 = vmul.f32 %v2285, %v4196
    %v4200 = vmul.f32 %v2286, %v4196
    %s4201 = sld [smem:[#allocation8 + $0x49]]
    %v4202 = vstv %s4201
    %v4203 = vmul.f32 %v2283, %v4202
    %v4204 = vmul.f32 %v2284, %v4202
    %v4205 = vmul.f32 %v2285, %v4202
    %v4206 = vmul.f32 %v2286, %v4202
    %4211 = vrot.lane.b32.xlu0 %v4203, 127
    %v4212 = vpop.permute.xlu0 %4211
    %4213 = vrot.lane.b32.xlu0 %v4204, 127
    %v4214 = vpop.permute.xlu0 %4213
    %4215 = vrot.lane.b32.xlu0 %v4205, 127
    %v4216 = vpop.permute.xlu0 %4215
    %4217 = vrot.lane.b32.xlu0 %v4206, 127
    %v4218 = vpop.permute.xlu0 %4217
    %v4223 = vadd.f32 %v4197, %v4212
    %v4224 = vadd.f32 %v4198, %v4214
    %v4225 = vadd.f32 %v4199, %v4216
    %v4226 = vadd.f32 %v4200, %v4218
    %s4227 = sld [smem:[#allocation8 + $0x4a]]
    %v4228 = vstv %s4227
    %v4229 = vmul.f32 %v2283, %v4228
    %v4230 = vmul.f32 %v2284, %v4228
    %v4231 = vmul.f32 %v2285, %v4228
    %v4232 = vmul.f32 %v2286, %v4228
    %4237 = vrot.lane.b32.xlu0 %v4229, 126
    %v4238 = vpop.permute.xlu0 %4237
    %4239 = vrot.lane.b32.xlu0 %v4230, 126
    %v4240 = vpop.permute.xlu0 %4239
    %4241 = vrot.lane.b32.xlu0 %v4231, 126
    %v4242 = vpop.permute.xlu0 %4241
    %4243 = vrot.lane.b32.xlu0 %v4232, 126
    %v4244 = vpop.permute.xlu0 %4243
    %v4249 = vadd.f32 %v4223, %v4238
    %v4250 = vadd.f32 %v4224, %v4240
    %v4251 = vadd.f32 %v4225, %v4242
    %v4252 = vadd.f32 %v4226, %v4244
    %s4253 = sld [smem:[#allocation8 + $0x4b]]
    %v4254 = vstv %s4253
    %v4255 = vmul.f32 %v2283, %v4254
    %v4256 = vmul.f32 %v2284, %v4254
    %v4257 = vmul.f32 %v2285, %v4254
    %v4258 = vmul.f32 %v2286, %v4254
    %v4263 = vrot.slane %v4255, 1
    %v4264 = vrot.slane %v4256, 1
    %v4265 = vsel %vm193, %v4263, %v4264
    %v4266 = vrot.slane %v4257, 1
    %v4267 = vrot.slane %v4258, 1
    %v4268 = vsel %vm193, %v4266, %v4267
    %v4273 = vadd.f32 %v4249, %v4265
    %v4274 = vadd.f32 %v4250, %v4264
    %v4275 = vadd.f32 %v4251, %v4268
    %v4276 = vadd.f32 %v4252, %v4267
    %s4277 = sld [smem:[#allocation8 + $0x4c]]
    %v4278 = vstv %s4277
    %v4279 = vmul.f32 %v2283, %v4278
    %v4280 = vmul.f32 %v2284, %v4278
    %v4281 = vmul.f32 %v2285, %v4278
    %v4282 = vmul.f32 %v2286, %v4278
    %v4287 = vrot.slane %v4279, 1
    %v4288 = vrot.slane %v4280, 1
    %v4289 = vsel %vm193, %v4287, %v4288
    %v4290 = vrot.slane %v4281, 1
    %v4291 = vrot.slane %v4282, 1
    %v4292 = vsel %vm193, %v4290, %v4291
    %4293 = vrot.lane.b32.xlu0 %v4289, 127
    %v4294 = vpop.permute.xlu0 %4293
    %4295 = vrot.lane.b32.xlu0 %v4288, 127
    %v4296 = vpop.permute.xlu0 %4295
    %4297 = vrot.lane.b32.xlu0 %v4292, 127
    %v4298 = vpop.permute.xlu0 %4297
    %4299 = vrot.lane.b32.xlu0 %v4291, 127
    %v4300 = vpop.permute.xlu0 %4299
    %v4305 = vadd.f32 %v4273, %v4294
    %v4306 = vadd.f32 %v4274, %v4296
    %v4307 = vadd.f32 %v4275, %v4298
    %v4308 = vadd.f32 %v4276, %v4300
    %s4309 = sld [smem:[#allocation8 + $0x4d]]
    %v4310 = vstv %s4309
    %v4311 = vmul.f32 %v2283, %v4310
    %v4312 = vmul.f32 %v2284, %v4310
    %v4313 = vmul.f32 %v2285, %v4310
    %v4314 = vmul.f32 %v2286, %v4310
    %v4319 = vrot.slane %v4311, 1
    %v4320 = vrot.slane %v4312, 1
    %v4321 = vsel %vm193, %v4319, %v4320
    %v4322 = vrot.slane %v4313, 1
    %v4323 = vrot.slane %v4314, 1
    %v4324 = vsel %vm193, %v4322, %v4323
    %4325 = vrot.lane.b32.xlu0 %v4321, 126
    %v4326 = vpop.permute.xlu0 %4325
    %4327 = vrot.lane.b32.xlu0 %v4320, 126
    %v4328 = vpop.permute.xlu0 %4327
    %4329 = vrot.lane.b32.xlu0 %v4324, 126
    %v4330 = vpop.permute.xlu0 %4329
    %4331 = vrot.lane.b32.xlu0 %v4323, 126
    %v4332 = vpop.permute.xlu0 %4331
    %v4337 = vadd.f32 %v4305, %v4326
    %v4338 = vadd.f32 %v4306, %v4328
    %v4339 = vadd.f32 %v4307, %v4330
    %v4340 = vadd.f32 %v4308, %v4332
    %s4341 = sld [smem:[#allocation8 + $0x4e]]
    %v4342 = vstv %s4341
    %v4343 = vmul.f32 %v2283, %v4342
    %v4344 = vmul.f32 %v2284, %v4342
    %v4345 = vmul.f32 %v2285, %v4342
    %v4346 = vmul.f32 %v2286, %v4342
    %v4351 = vrot.slane %v4343, 2
    %v4352 = vrot.slane %v4344, 2
    %v4353 = vsel %vm282, %v4351, %v4352
    %v4354 = vrot.slane %v4345, 2
    %v4355 = vrot.slane %v4346, 2
    %v4356 = vsel %vm282, %v4354, %v4355
    %v4361 = vadd.f32 %v4337, %v4353
    %v4362 = vadd.f32 %v4338, %v4352
    %v4363 = vadd.f32 %v4339, %v4356
    %v4364 = vadd.f32 %v4340, %v4355
    %s4365 = sld [smem:[#allocation8 + $0x4f]]
    %v4366 = vstv %s4365
    %v4367 = vmul.f32 %v2283, %v4366
    %v4368 = vmul.f32 %v2284, %v4366
    %v4369 = vmul.f32 %v2285, %v4366
    %v4370 = vmul.f32 %v2286, %v4366
    %v4375 = vrot.slane %v4367, 2
    %v4376 = vrot.slane %v4368, 2
    %v4377 = vsel %vm282, %v4375, %v4376
    %v4378 = vrot.slane %v4369, 2
    %v4379 = vrot.slane %v4370, 2
    %v4380 = vsel %vm282, %v4378, %v4379
    %4381 = vrot.lane.b32.xlu0 %v4377, 127
    %v4382 = vpop.permute.xlu0 %4381
    %4383 = vrot.lane.b32.xlu0 %v4376, 127
    %v4384 = vpop.permute.xlu0 %4383
    %4385 = vrot.lane.b32.xlu0 %v4380, 127
    %v4386 = vpop.permute.xlu0 %4385
    %4387 = vrot.lane.b32.xlu0 %v4379, 127
    %v4388 = vpop.permute.xlu0 %4387
    %v4393 = vadd.f32 %v4361, %v4382
    %v4394 = vadd.f32 %v4362, %v4384
    %v4395 = vadd.f32 %v4363, %v4386
    %v4396 = vadd.f32 %v4364, %v4388
    %s4397 = sld [smem:[#allocation8 + $0x50]]
    %v4398 = vstv %s4397
    %v4399 = vmul.f32 %v2283, %v4398
    %v4400 = vmul.f32 %v2284, %v4398
    %v4401 = vmul.f32 %v2285, %v4398
    %v4402 = vmul.f32 %v2286, %v4398
    %v4407 = vrot.slane %v4399, 2
    %v4408 = vrot.slane %v4400, 2
    %v4409 = vsel %vm282, %v4407, %v4408
    %v4410 = vrot.slane %v4401, 2
    %v4411 = vrot.slane %v4402, 2
    %v4412 = vsel %vm282, %v4410, %v4411
    %4413 = vrot.lane.b32.xlu0 %v4409, 126
    %v4414 = vpop.permute.xlu0 %4413
    %4415 = vrot.lane.b32.xlu0 %v4408, 126
    %v4416 = vpop.permute.xlu0 %4415
    %4417 = vrot.lane.b32.xlu0 %v4412, 126
    %v4418 = vpop.permute.xlu0 %4417
    %4419 = vrot.lane.b32.xlu0 %v4411, 126
    %v4420 = vpop.permute.xlu0 %4419
    %v4425 = vadd.f32 %v4393, %v4414
    %v4426 = vadd.f32 %v4394, %v4416
    %v4427 = vadd.f32 %v4395, %v4418
    %v4428 = vadd.f32 %v4396, %v4420
    %v4429 = vadd.f32 %v3957, %v4191
    %v4430 = vadd.f32 %v3958, %v4192
    %v4431 = vadd.f32 %v3959, %v4193
    %v4432 = vadd.f32 %v3960, %v4194
    %v4433 = vadd.f32 %v4429, %v4425
    %v4434 = vadd.f32 %v4430, %v4426
    %v4435 = vadd.f32 %v4431, %v4427
    %v4436 = vadd.f32 %v4432, %v4428
    %s4437 = sld [smem:[#allocation9 + $0x2]]
    %v4438 = vstv %s4437
    %v4439 = vadd.f32 %v4433, %v4438
    %v4440 = vadd.f32 %v4434, %v4438
    %v4441 = vadd.f32 %v4435, %v4438
    %v4442 = vadd.f32 %v4436, %v4438
    %v4443 = vmax.f32 %v4439, 0.0
    %v4444 = vmax.f32 %v4440, 0.0
    %v4445 = vmax.f32 %v4441, 0.0
    %v4446 = vmax.f32 %v4442, 0.0
    %vm4447 = vcmask 97280
    %v4448 = vsel %vm4447, %v3003, 0.0
    %vm4449 = vcmask 93184
    %v4450 = vsel %vm4449, %v3004, 0.0
    %v4451 = vadd.f32 %v4448, %v4450
    %v4452 = vsel %vm4447, %v3005, 0.0
    %v4453 = vadd.f32 %v4451, %v4452
    %v4454 = vsel %vm4449, %v3006, 0.0
    %v4455 = vadd.f32 %v4453, %v4454
    %4456 = vadd.xlane.f32.xlu0 %v4455
    %v4457 = vpop.xlane.xlu0 %4456
    %v4458 = vrot.slane %v4457, 4
    %v4459 = vadd.f32 %v4457, %v4458
    %v4460 = vrot.slane %v4459, 2
    %v4461 = vadd.f32 %v4459, %v4460
    %v4462 = vrot.slane %v4461, 1
    %v4463 = vadd.f32 %v4461, %v4462
    %s4464 = vtos %v4463
    %v4465 = vmul.f32 %v3003, %v3003
    %v4466 = vmul.f32 %v3004, %v3004
    %v4467 = vmul.f32 %v3005, %v3005
    %v4468 = vmul.f32 %v3006, %v3006
    %v4469 = vsel %vm4447, %v4465, 0.0
    %v4470 = vsel %vm4449, %v4466, 0.0
    %v4471 = vadd.f32 %v4469, %v4470
    %v4472 = vsel %vm4447, %v4467, 0.0
    %v4473 = vadd.f32 %v4471, %v4472
    %v4474 = vsel %vm4449, %v4468, 0.0
    %v4475 = vadd.f32 %v4473, %v4474
    %4476 = vadd.xlane.f32.xlu0 %v4475
    %v4477 = vpop.xlane.xlu0 %4476
    %v4478 = vrot.slane %v4477, 4
    %v4479 = vadd.f32 %v4477, %v4478
    %v4480 = vrot.slane %v4479, 2
    %v4481 = vadd.f32 %v4479, %v4480
    %v4482 = vrot.slane %v4481, 1
    %v4483 = vadd.f32 %v4481, %v4482
    %s4484 = vtos %v4483
    %s4485 = smul.f32 %s4464, 0.0034722222
    %s4486 = smul.f32 %s4484, 0.0034722222
    %s4487 = smul.f32 %s4485, %s4485
    %s4488 = ssub.f32 %s4486, %s4487
    %s4489 = sld [smem:[#allocation11]]
    %s4490 = sadd.f32 %s4488, 1e-05
    %v4491 = vstv %s4490
    %v4492 = vrsqrt.pop %v4491
    %s4493 = vtos %v4492
    %s4494 = smul.f32 %s4489, %s4493
    %s4495 = sld [smem:[#allocation12]]
    %s4496 = smul.f32 %s4485, %s4494
    %s4497 = ssub.f32 %s4495, %s4496
    %v4498 = vstv %s4494
    %v4499 = vmul.f32 %v3003, %v4498
    %v4500 = vmul.f32 %v3004, %v4498
    %v4501 = vmul.f32 %v3005, %v4498
    %v4502 = vmul.f32 %v3006, %v4498
    %v4503 = vstv %s4497
    %v4504 = vadd.f32 %v4499, %v4503
    %v4505 = vadd.f32 %v4500, %v4503
    %v4506 = vadd.f32 %v4501, %v4503
    %v4507 = vadd.f32 %v4502, %v4503
    %4508 = vst.msk [vmem:[%s7] sm:$0xff] %vm4447, %v4504
    %4509 = vst.msk [vmem:[%s7 + $0x8] sm:$0xf] %vm4449, %v4505
    %4510 = vst.msk [vmem:[%s7 + $0x30] sm:$0xff] %vm4447, %v4506
    %4511 = vst.msk [vmem:[%s7 + $0x38] sm:$0xf] %vm4449, %v4507
    %v4512 = vsel %vm4447, %v3723, 0.0
    %v4513 = vsel %vm4449, %v3724, 0.0
    %v4514 = vadd.f32 %v4512, %v4513
    %v4515 = vsel %vm4447, %v3725, 0.0
    %v4516 = vadd.f32 %v4514, %v4515
    %v4517 = vsel %vm4449, %v3726, 0.0
    %v4518 = vadd.f32 %v4516, %v4517
    %4519 = vadd.xlane.f32.xlu0 %v4518
    %v4520 = vpop.xlane.xlu0 %4519
    %v4521 = vrot.slane %v4520, 4
    %v4522 = vadd.f32 %v4520, %v4521
    %v4523 = vrot.slane %v4522, 2
    %v4524 = vadd.f32 %v4522, %v4523
    %v4525 = vrot.slane %v4524, 1
    %v4526 = vadd.f32 %v4524, %v4525
    %s4527 = vtos %v4526
    %v4528 = vmul.f32 %v3723, %v3723
    %v4529 = vmul.f32 %v3724, %v3724
    %v4530 = vmul.f32 %v3725, %v3725
    %v4531 = vmul.f32 %v3726, %v3726
    %v4532 = vsel %vm4447, %v4528, 0.0
    %v4533 = vsel %vm4449, %v4529, 0.0
    %v4534 = vadd.f32 %v4532, %v4533
    %v4535 = vsel %vm4447, %v4530, 0.0
    %v4536 = vadd.f32 %v4534, %v4535
    %v4537 = vsel %vm4449, %v4531, 0.0
    %v4538 = vadd.f32 %v4536, %v4537
    %4539 = vadd.xlane.f32.xlu0 %v4538
    %v4540 = vpop.xlane.xlu0 %4539
    %v4541 = vrot.slane %v4540, 4
    %v4542 = vadd.f32 %v4540, %v4541
    %v4543 = vrot.slane %v4542, 2
    %v4544 = vadd.f32 %v4542, %v4543
    %v4545 = vrot.slane %v4544, 1
    %v4546 = vadd.f32 %v4544, %v4545
    %s4547 = vtos %v4546
    %s4548 = smul.f32 %s4527, 0.0034722222
    %s4549 = smul.f32 %s4547, 0.0034722222
    %s4550 = smul.f32 %s4548, %s4548
    %s4551 = ssub.f32 %s4549, %s4550
    %s4552 = sld [smem:[#allocation11 + $0x1]]
    %s4553 = sadd.f32 %s4551, 1e-05
    %v4554 = vstv %s4553
    %v4555 = vrsqrt.pop %v4554
    %s4556 = vtos %v4555
    %s4557 = smul.f32 %s4552, %s4556
    %s4558 = sld [smem:[#allocation12 + $0x1]]
    %s4559 = smul.f32 %s4548, %s4557
    %s4560 = ssub.f32 %s4558, %s4559
    %v4561 = vstv %s4557
    %v4562 = vmul.f32 %v3723, %v4561
    %v4563 = vmul.f32 %v3724, %v4561
    %v4564 = vmul.f32 %v3725, %v4561
    %v4565 = vmul.f32 %v3726, %v4561
    %v4566 = vstv %s4560
    %v4567 = vadd.f32 %v4562, %v4566
    %v4568 = vadd.f32 %v4563, %v4566
    %v4569 = vadd.f32 %v4564, %v4566
    %v4570 = vadd.f32 %v4565, %v4566
    %s4571 = scalar_lea.vmem %s7, 16
    %4572 = vst.msk [vmem:[%s4571] sm:$0xff] %vm4447, %v4567
    %4573 = vst.msk [vmem:[%s4571 + $0x8] sm:$0xf] %vm4449, %v4568
    %4574 = vst.msk [vmem:[%s4571 + $0x30] sm:$0xff] %vm4447, %v4569
    %4575 = vst.msk [vmem:[%s4571 + $0x38] sm:$0xf] %vm4449, %v4570
    %v4576 = vsel %vm4447, %v4443, 0.0
    %v4577 = vsel %vm4449, %v4444, 0.0
    %v4578 = vadd.f32 %v4576, %v4577
    %v4579 = vsel %vm4447, %v4445, 0.0
    %v4580 = vadd.f32 %v4578, %v4579
    %v4581 = vsel %vm4449, %v4446, 0.0
    %v4582 = vadd.f32 %v4580, %v4581
    %4583 = vadd.xlane.f32.xlu0 %v4582
    %v4584 = vpop.xlane.xlu0 %4583
    %v4585 = vrot.slane %v4584, 4
    %v4586 = vadd.f32 %v4584, %v4585
    %v4587 = vrot.slane %v4586, 2
    %v4588 = vadd.f32 %v4586, %v4587
    %v4589 = vrot.slane %v4588, 1
    %v4590 = vadd.f32 %v4588, %v4589
    %s4591 = vtos %v4590
    %v4592 = vmul.f32 %v4443, %v4443
    %v4593 = vmul.f32 %v4444, %v4444
    %v4594 = vmul.f32 %v4445, %v4445
    %v4595 = vmul.f32 %v4446, %v4446
    %v4596 = vsel %vm4447, %v4592, 0.0
    %v4597 = vsel %vm4449, %v4593, 0.0
    %v4598 = vadd.f32 %v4596, %v4597
    %v4599 = vsel %vm4447, %v4594, 0.0
    %v4600 = vadd.f32 %v4598, %v4599
    %v4601 = vsel %vm4449, %v4595, 0.0
    %v4602 = vadd.f32 %v4600, %v4601
    %4603 = vadd.xlane.f32.xlu0 %v4602
    %v4604 = vpop.xlane.xlu0 %4603
    %v4605 = vrot.slane %v4604, 4
    %v4606 = vadd.f32 %v4604, %v4605
    %v4607 = vrot.slane %v4606, 2
    %v4608 = vadd.f32 %v4606, %v4607
    %v4609 = vrot.slane %v4608, 1
    %v4610 = vadd.f32 %v4608, %v4609
    %s4611 = vtos %v4610
    %s4612 = smul.f32 %s4591, 0.0034722222
    %s4613 = smul.f32 %s4611, 0.0034722222
    %s4614 = smul.f32 %s4612, %s4612
    %s4615 = ssub.f32 %s4613, %s4614
    %s4616 = sld [smem:[#allocation11 + $0x2]]
    %s4617 = sadd.f32 %s4615, 1e-05
    %v4618 = vstv %s4617
    %v4619 = vrsqrt.pop %v4618
    %s4620 = vtos %v4619
    %s4621 = smul.f32 %s4616, %s4620
    %s4622 = sld [smem:[#allocation12 + $0x2]]
    %s4623 = smul.f32 %s4612, %s4621
    %s4624 = ssub.f32 %s4622, %s4623
    %v4625 = vstv %s4621
    %v4626 = vmul.f32 %v4443, %v4625
    %v4627 = vmul.f32 %v4444, %v4625
    %v4628 = vmul.f32 %v4445, %v4625
    %v4629 = vmul.f32 %v4446, %v4625
    %v4630 = vstv %s4624
    %v4631 = vadd.f32 %v4626, %v4630
    %v4632 = vadd.f32 %v4627, %v4630
    %v4633 = vadd.f32 %v4628, %v4630
    %v4634 = vadd.f32 %v4629, %v4630
    %s4635 = scalar_lea.vmem %s7, 32
    %4636 = vst.msk [vmem:[%s4635] sm:$0xff] %vm4447, %v4631
    %4637 = vst.msk [vmem:[%s4635 + $0x8] sm:$0xf] %vm4449, %v4632
    %4638 = vst.msk [vmem:[%s4635 + $0x30] sm:$0xff] %vm4447, %v4633
    %4639 = vst.msk [vmem:[%s4635 + $0x38] sm:$0xf] %vm4449, %v4634
    // Predicated region
    $region58: #{model_forward.1} parent=1 // pred_check
      _
    $region59: #{model_forward.1} parent=1 // pred_check_branch
      %4641 = sbr.rel (0) target = $region61
    $region60: #{model_forward.1} parent=1 // pred_region
      _
    $region61: #{model_forward.1} parent=1 // pred_fallthru
      _
    // Predicated region
    $region62: #{model_forward.1} parent=1 // pred_check
      _
    $region63: #{model_forward.1} parent=1 // pred_check_branch
      %4643 = sbr.rel (0) target = $region65
    $region64: #{model_forward.1} parent=1 // pred_region
      _
    $region65: #{model_forward.1} parent=1 // pred_fallthru
      _
    %4644 = vsyncpa [#allocation3], 1
    %4645 = vsyncpa [#allocation4], 1
    %4646 = vsyncpa [#allocation7], 1
    %4647 = vsyncpa [#allocation10], 1
    %4648 = vsyncpa [#allocation13], 1

</llo_original>
